<compile_context>
chip_gen: v6e
topology: v6e:2x2x1
jax: 0.10.0
libtpu: 0.0.40
codegen_flags: <defaults>
</compile_context>

<pallas_src>
import math
import numpy as np
import jax
import jax.numpy as jnp
from jax import lax
from jax.experimental import pallas as pl
from jax.experimental.pallas import tpu as pltpu

# ---- small model config (consistent with ModelArgs semantics) ----
B, S = 2, 8
DIM = 64
N_HEADS = 4
HEAD_DIM = DIM // N_HEADS          # 16
HALF_HD = HEAD_DIM // 2            # 8
MULTIPLE_OF = 32
NORM_EPS = 1e-5
ROWS = B * S                       # 16


def _ffn_hidden(dim, multiple_of):
    hidden = 4 * dim
    hidden = int(2 * hidden / 3)
    return multiple_of * ((hidden + multiple_of - 1) // multiple_of)


FFN_HIDDEN = _ffn_hidden(DIM, MULTIPLE_OF)   # 192


def _rmsnorm(x, w, eps):
    var = jnp.mean(x * x, axis=-1, keepdims=True)
    return x * lax.rsqrt(var + eps) * w       # rsqrt -> EUP


# ------------------------- fused Pallas kernel -------------------------

def transformer_block_kernel(x_ref, wna_ref, wnf_ref, wqkv_ref, wo_ref,
                             w13_ref, w2_ref, cos_ref, sin_ref, bias_ref,
                             o_ref):
    """out = ffn_block(attn_block(x)); all rows (B*S) processed in one step."""
    x = x_ref[...]                                   # (R, D), R = B*S

    # ---------- attention: pre-norm -> fused QKV -> RoPE -> SDPA -> Wo -> +x
    xn = _rmsnorm(x, wna_ref[...], NORM_EPS)
    qkv = jnp.dot(xn, wqkv_ref[...], preferred_element_type=jnp.float32)   # (R, 3D)
    q = qkv[:, :DIM]                                 # already pre-scaled by 1/sqrt(hd)
    k = qkv[:, DIM:2 * DIM]
    v = qkv[:, 2 * DIM:]

    # wq/wk columns were pre-permuted to [evens-of-all-heads | odds-of-all-heads],
    # so RoPE is a full-width split-half rotation.  Scores are unchanged because
    # q and k live in the same permuted basis; v / wo are untouched.
    cos = cos_ref[...]                               # (R, D/2), per-head tiled
    sin = sin_ref[...]
    hd2 = DIM // 2
    qe, qo = q[:, :hd2], q[:, hd2:]
    ke, ko = k[:, :hd2], k[:, hd2:]
    q_re = qe * cos - qo * sin
    q_ro = qo * cos + qe * sin
    k_re = ke * cos - ko * sin
    k_ro = ko * cos + ke * sin

    def heads(t):                                    # (R, H*HALF_HD) -> (H, R, HALF_HD)
        return jnp.transpose(t.reshape(ROWS, N_HEADS, HALF_HD), (1, 0, 2))

    # head-batched contraction over (even, odd) halves; leading batch dim ->
    # plain batched dot_general, no materialized transpose of K.  The
    # 1/sqrt(head_dim) scale is already folded into wq (trace time).
    scores = (jnp.einsum('hif,hjf->hij', heads(q_re), heads(k_re),
                         preferred_element_type=jnp.float32)
              + jnp.einsum('hif,hjf->hij', heads(q_ro), heads(k_ro),
                           preferred_element_type=jnp.float32))
    scores = scores + bias_ref[...]                  # block-diag causal bias (0 / -1e30)

    m = jnp.max(scores, axis=-1, keepdims=True)
    p = jnp.exp(scores - m)
    denom = jnp.sum(p, axis=-1, keepdims=True)
    p = p * pl.reciprocal(denom, approx=True)        # EUP reciprocal

    v_h = jnp.transpose(v.reshape(ROWS, N_HEADS, HEAD_DIM), (1, 0, 2))     # (H, R, hd)
    attn = jnp.einsum('hij,hjd->hid', p, v_h, preferred_element_type=jnp.float32)
    attn = jnp.transpose(attn, (1, 0, 2)).reshape(ROWS, DIM)

    h = x + jnp.dot(attn, wo_ref[...], preferred_element_type=jnp.float32)

    # ---------- FFN: pre-norm -> fused W1|W3 -> SwiGLU -> W2 -> +h
    hn = _rmsnorm(h, wnf_ref[...], NORM_EPS)
    ag = jnp.dot(hn, w13_ref[...], preferred_element_type=jnp.float32)     # (R, 2*FFN)
    a = ag[:, :FFN_HIDDEN]
    g = ag[:, FFN_HIDDEN:]
    act = a * jax.nn.sigmoid(a) * g                  # silu(a) * g
    o_ref[...] = h + jnp.dot(act, w2_ref[...], preferred_element_type=jnp.float32)


# ------------------------- wrapper -------------------------

def transformer_block_pallas(x, params, cos, sin):
    B_, S_, D_ = x.shape
    rows = B_ * S_
    x2d = x.reshape(rows, D_)

    # global column permutation: interleaved (even,odd) pairs per head ->
    # [evens of all heads (head-major) | odds of all heads]
    idx = np.arange(D_).reshape(N_HEADS, HEAD_DIM)
    perm = np.concatenate([idx[:, 0::2].reshape(-1), idx[:, 1::2].reshape(-1)])
    scale = 1.0 / math.sqrt(HEAD_DIM)
    wq_p = params["wq"][:, perm] * scale          # fold attention scale into Wq
    wk_p = params["wk"][:, perm]
    wqkv = jnp.concatenate([wq_p, wk_p, params["wv"]], axis=1)       # (D, 3D)
    w13 = jnp.concatenate([params["w1"], params["w3"]], axis=1)      # (D, 2*FFN)

    wn_a = params["attn_norm"].reshape(1, D_)
    wn_f = params["ffn_norm"].reshape(1, D_)

    # cos/sin tiled per head (column c -> freq c % HALF_HD) and per batch row
    cos_t = jnp.tile(jnp.tile(cos, (1, N_HEADS)), (B_, 1))           # (rows, D/2)
    sin_t = jnp.tile(jnp.tile(sin, (1, N_HEADS)), (B_, 1))

    # static block-diagonal causal additive bias over flattened (b, s) rows
    r = np.arange(rows)
    same_batch = (r[:, None] // S_) == (r[None, :] // S_)
    causal = r[:, None] >= r[None, :]
    bias = jnp.asarray(np.where(same_batch & causal, 0.0, -1e30), jnp.float32)

    def fullspec(shape):
        zeros = (0,) * len(shape)
        return pl.BlockSpec(shape, lambda i, z=zeros: z)

    out2d = pl.pallas_call(
        transformer_block_kernel,
        out_shape=jax.ShapeDtypeStruct((rows, D_), x.dtype),
        grid=(1,),
        in_specs=[
            fullspec((rows, D_)),                 # x
            fullspec((1, D_)),                    # attn norm weight
            fullspec((1, D_)),                    # ffn norm weight
            fullspec((D_, 3 * D_)),               # wq|wk|wv (wq pre-scaled/permuted)
            fullspec((D_, D_)),                   # wo
            fullspec((D_, 2 * FFN_HIDDEN)),       # w1|w3
            fullspec((FFN_HIDDEN, D_)),           # w2
            fullspec((rows, D_ // 2)),            # cos
            fullspec((rows, D_ // 2)),            # sin
            fullspec((rows, rows)),               # additive mask bias
        ],
        out_specs=fullspec((rows, D_)),
        compiler_params=pltpu.CompilerParams(
            dimension_semantics=("arbitrary",)),
    )(x2d, wn_a, wn_f, wqkv, params["wo"], w13, params["w2"], cos_t, sin_t, bias)

    return out2d.reshape(B_, S_, D_)


# ------------------------- pure-JAX reference (torch semantics) -------------------------

def transformer_block_ref(x, params, cos, sin):
    def rmsnorm(v, w):
        return v * lax.rsqrt(jnp.mean(v * v, -1, keepdims=True) + NORM_EPS) * w

    B_, S_, D_ = x.shape
    xn = rmsnorm(x, params["attn_norm"])
    q = (xn @ params["wq"]).reshape(B_, S_, N_HEADS, HEAD_DIM)
    k = (xn @ params["wk"]).reshape(B_, S_, N_HEADS, HEAD_DIM)
    v = (xn @ params["wv"]).reshape(B_, S_, N_HEADS, HEAD_DIM)

    def rope(t):  # interleaved pairs, exactly torch.view_as_complex semantics
        tr = t.reshape(B_, S_, N_HEADS, HEAD_DIM // 2, 2)
        te, to = tr[..., 0], tr[..., 1]
        c = cos[None, :, None, :]
        s = sin[None, :, None, :]
        return jnp.stack([te * c - to * s, te * s + to * c], axis=-1).reshape(
            B_, S_, N_HEADS, HEAD_DIM)

    qr, kr = rope(q), rope(k)
    scores = jnp.einsum('bqhd,bkhd->bhqk', qr, kr) / math.sqrt(HEAD_DIM)
    causal = np.tril(np.ones((S_, S_), dtype=bool))
    scores = jnp.where(causal[None, None], scores, -jnp.inf)
    p = jax.nn.softmax(scores, axis=-1)
    attn = jnp.einsum('bhqk,bkhd->bqhd', p, v).reshape(B_, S_, N_HEADS * HEAD_DIM)
    h = x + attn @ params["wo"]

    hn = rmsnorm(h, params["ffn_norm"])
    a = hn @ params["w1"]
    g = hn @ params["w3"]
    return h + (a * jax.nn.sigmoid(a) * g) @ params["w2"]


# ------------------------- main -------------------------

if __name__ == "__main__":
    key = jax.random.PRNGKey(0)
    keys = jax.random.split(key, 10)

    def init(k, shape, fan_in):   # kaiming-uniform-style bound (a=sqrt(5)) -> 1/sqrt(fan_in)
        bound = 1.0 / math.sqrt(fan_in)
        return jax.random.uniform(k, shape, jnp.float32, -bound, bound)

    params = {
        "wq": init(keys[0], (DIM, N_HEADS * HEAD_DIM), DIM),
        "wk": init(keys[1], (DIM, N_HEADS * HEAD_DIM), DIM),
        "wv": init(keys[2], (DIM, N_HEADS * HEAD_DIM), DIM),
        "wo": init(keys[3], (N_HEADS * HEAD_DIM, DIM), N_HEADS * HEAD_DIM),
        "w1": init(keys[4], (DIM, FFN_HIDDEN), DIM),
        "w3": init(keys[5], (DIM, FFN_HIDDEN), DIM),
        "w2": init(keys[6], (FFN_HIDDEN, DIM), FFN_HIDDEN),
        "attn_norm": jnp.ones((DIM,), jnp.float32),
        "ffn_norm": jnp.ones((DIM,), jnp.float32),
    }

    x = jax.random.normal(keys[7], (B, S, DIM), jnp.float32)

    # freqs_cis (llama precompute) expressed as cos/sin, shape (S, HEAD_DIM//2)
    inv_freq = 1.0 / (10000.0 ** (np.arange(0, HEAD_DIM, 2, dtype=np.float64) / HEAD_DIM))
    angles = np.arange(S, dtype=np.float64)[:, None] * inv_freq[None, :]
    cos = jnp.asarray(np.cos(angles), jnp.float32)
    sin = jnp.asarray(np.sin(angles), jnp.float32)

    out = transformer_block_pallas(x, params, cos, sin)
    out = jax.block_until_ready(out)

    ref = transformer_block_ref(x, params, cos, sin)
    np.testing.assert_allclose(np.asarray(out), np.asarray(ref), rtol=2e-3, atol=2e-3)

    print("KERNEL_OK")
</pallas_src>

<mosaic_0001>
module attributes {stable_mosaic.version = 11 : i64} {
  func.func @transformer_block_kernel(%arg0: i32, %arg1: memref<16x64xf32, #tpu.memory_space<vmem>>, %arg2: memref<1x64xf32, #tpu.memory_space<vmem>>, %arg3: memref<1x64xf32, #tpu.memory_space<vmem>>, %arg4: memref<64x192xf32, #tpu.memory_space<vmem>>, %arg5: memref<64x64xf32, #tpu.memory_space<vmem>>, %arg6: memref<64x384xf32, #tpu.memory_space<vmem>>, %arg7: memref<192x64xf32, #tpu.memory_space<vmem>>, %arg8: memref<16x32xf32, #tpu.memory_space<vmem>>, %arg9: memref<16x32xf32, #tpu.memory_space<vmem>>, %arg10: memref<16x16xf32, #tpu.memory_space<vmem>>, %arg11: memref<16x64xf32, #tpu.memory_space<vmem>>) attributes {dimension_semantics = [#tpu.dimension_semantics<arbitrary>], iteration_bounds = array<i64: 1>, scalar_prefetch = 0 : i64, scratch_operands = 0 : i64, tpu.core_type = #tpu.core_type<tc>, window_params = [{pipeline_mode = #tpu.pipeline_mode<synchronous>, transform_indices = @transform_0, window_bounds = array<i64: 16, 64>}, {pipeline_mode = #tpu.pipeline_mode<synchronous>, transform_indices = @transform_1, window_bounds = array<i64: 1, 64>}, {pipeline_mode = #tpu.pipeline_mode<synchronous>, transform_indices = @transform_2, window_bounds = array<i64: 1, 64>}, {pipeline_mode = #tpu.pipeline_mode<synchronous>, transform_indices = @transform_3, window_bounds = array<i64: 64, 192>}, {pipeline_mode = #tpu.pipeline_mode<synchronous>, transform_indices = @transform_4, window_bounds = array<i64: 64, 64>}, {pipeline_mode = #tpu.pipeline_mode<synchronous>, transform_indices = @transform_5, window_bounds = array<i64: 64, 384>}, {pipeline_mode = #tpu.pipeline_mode<synchronous>, transform_indices = @transform_6, window_bounds = array<i64: 192, 64>}, {pipeline_mode = #tpu.pipeline_mode<synchronous>, transform_indices = @transform_7, window_bounds = array<i64: 16, 32>}, {pipeline_mode = #tpu.pipeline_mode<synchronous>, transform_indices = @transform_8, window_bounds = array<i64: 16, 32>}, {pipeline_mode = #tpu.pipeline_mode<synchronous>, transform_indices = @transform_9, window_bounds = array<i64: 16, 16>}, {pipeline_mode = #tpu.pipeline_mode<synchronous>, transform_indices = @transform_10, window_bounds = array<i64: 16, 64>}]} {
    %c0 = arith.constant 0 : index
    %c0_0 = arith.constant 0 : index
    %0 = vector.load %arg1[%c0, %c0_0] : memref<16x64xf32, #tpu.memory_space<vmem>>, vector<16x64xf32>
    %c0_1 = arith.constant 0 : index
    %c0_2 = arith.constant 0 : index
    %1 = vector.load %arg2[%c0_1, %c0_2] : memref<1x64xf32, #tpu.memory_space<vmem>>, vector<1x64xf32>
    %2 = arith.mulf %0, %0 : vector<16x64xf32>
    %cst = arith.constant dense<0.000000e+00> : vector<16xf32>
    %3 = vector.multi_reduction <add>, %2, %cst [1] : vector<16x64xf32> to vector<16xf32>
    %4 = vector.shape_cast %3 : vector<16xf32> to vector<16x1xf32>
    %cst_3 = arith.constant 6.400000e+01 : f32
    %5 = vector.broadcast %cst_3 : f32 to vector<16x1xf32>
    %6 = arith.divf %4, %5 : vector<16x1xf32>
    %cst_4 = arith.constant 9.99999974E-6 : f32
    %7 = vector.broadcast %cst_4 : f32 to vector<16x1xf32>
    %8 = arith.addf %6, %7 : vector<16x1xf32>
    %9 = math.rsqrt %8 : vector<16x1xf32>
    %10 = vector.broadcast %9 : vector<16x1xf32> to vector<16x64xf32>
    %11 = arith.mulf %0, %10 : vector<16x64xf32>
    %12 = vector.broadcast %1 : vector<1x64xf32> to vector<16x64xf32>
    %13 = arith.mulf %11, %12 : vector<16x64xf32>
    %c0_5 = arith.constant 0 : index
    %c0_6 = arith.constant 0 : index
    %14 = vector.load %arg4[%c0_5, %c0_6] : memref<64x192xf32, #tpu.memory_space<vmem>>, vector<64x192xf32>
    %cst_7 = arith.constant dense<0.000000e+00> : vector<16x192xf32>
    %15 = tpu.matmul %13, %14, %cst_7 {dimension_numbers = #tpu.dot_dimension_numbers<[1], [0], [0], [1], [0, 0, 1, 1], [], []>} : vector<16x64xf32>, vector<64x192xf32>, vector<16x192xf32> -> vector<16x192xf32>
    %16 = vector.extract_strided_slice %15 {offsets = [0, 0], sizes = [16, 64], strides = [1, 1]} : vector<16x192xf32> to vector<16x64xf32>
    %17 = vector.extract_strided_slice %15 {offsets = [0, 64], sizes = [16, 64], strides = [1, 1]} : vector<16x192xf32> to vector<16x64xf32>
    %18 = vector.extract_strided_slice %15 {offsets = [0, 128], sizes = [16, 64], strides = [1, 1]} : vector<16x192xf32> to vector<16x64xf32>
    %c0_8 = arith.constant 0 : index
    %c0_9 = arith.constant 0 : index
    %19 = vector.load %arg8[%c0_8, %c0_9] : memref<16x32xf32, #tpu.memory_space<vmem>>, vector<16x32xf32>
    %c0_10 = arith.constant 0 : index
    %c0_11 = arith.constant 0 : index
    %20 = vector.load %arg9[%c0_10, %c0_11] : memref<16x32xf32, #tpu.memory_space<vmem>>, vector<16x32xf32>
    %21 = vector.extract_strided_slice %16 {offsets = [0, 0], sizes = [16, 32], strides = [1, 1]} : vector<16x64xf32> to vector<16x32xf32>
    %22 = vector.extract_strided_slice %16 {offsets = [0, 32], sizes = [16, 32], strides = [1, 1]} : vector<16x64xf32> to vector<16x32xf32>
    %23 = vector.extract_strided_slice %17 {offsets = [0, 0], sizes = [16, 32], strides = [1, 1]} : vector<16x64xf32> to vector<16x32xf32>
    %24 = vector.extract_strided_slice %17 {offsets = [0, 32], sizes = [16, 32], strides = [1, 1]} : vector<16x64xf32> to vector<16x32xf32>
    %25 = arith.mulf %21, %19 : vector<16x32xf32>
    %26 = arith.mulf %22, %20 : vector<16x32xf32>
    %27 = arith.subf %25, %26 : vector<16x32xf32>
    %28 = arith.mulf %22, %19 : vector<16x32xf32>
    %29 = arith.mulf %21, %20 : vector<16x32xf32>
    %30 = arith.addf %28, %29 : vector<16x32xf32>
    %31 = arith.mulf %23, %19 : vector<16x32xf32>
    %32 = arith.mulf %24, %20 : vector<16x32xf32>
    %33 = arith.subf %31, %32 : vector<16x32xf32>
    %34 = arith.mulf %24, %19 : vector<16x32xf32>
    %35 = arith.mulf %23, %20 : vector<16x32xf32>
    %36 = arith.addf %34, %35 : vector<16x32xf32>
    %37 = vector.shape_cast %27 : vector<16x32xf32> to vector<16x4x8xf32>
    %38 = tpu.transpose %37, [1, 0, 2] : vector<16x4x8xf32> -> vector<4x16x8xf32>
    %39 = vector.shape_cast %33 : vector<16x32xf32> to vector<16x4x8xf32>
    %40 = tpu.transpose %39, [1, 0, 2] : vector<16x4x8xf32> -> vector<4x16x8xf32>
    "tpu.trace_start"() <{level = 10 : i32, message = "hif,hjf->hij"}> : () -> ()
    %cst_12 = arith.constant dense<0.000000e+00> : vector<4x16x16xf32>
    %41 = tpu.matmul %38, %40, %cst_12 {dimension_numbers = #tpu.dot_dimension_numbers<[2], [2], [1], [1], [0, 0, 0, 1, 1, 1], [0], [0]>} : vector<4x16x8xf32>, vector<4x16x8xf32>, vector<4x16x16xf32> -> vector<4x16x16xf32>
    "tpu.trace_stop"() : () -> ()
    %42 = vector.shape_cast %30 : vector<16x32xf32> to vector<16x4x8xf32>
    %43 = tpu.transpose %42, [1, 0, 2] : vector<16x4x8xf32> -> vector<4x16x8xf32>
    %44 = vector.shape_cast %36 : vector<16x32xf32> to vector<16x4x8xf32>
    %45 = tpu.transpose %44, [1, 0, 2] : vector<16x4x8xf32> -> vector<4x16x8xf32>
    "tpu.trace_start"() <{level = 10 : i32, message = "hif,hjf->hij"}> : () -> ()
    %cst_13 = arith.constant dense<0.000000e+00> : vector<4x16x16xf32>
    %46 = tpu.matmul %43, %45, %cst_13 {dimension_numbers = #tpu.dot_dimension_numbers<[2], [2], [1], [1], [0, 0, 0, 1, 1, 1], [0], [0]>} : vector<4x16x8xf32>, vector<4x16x8xf32>, vector<4x16x16xf32> -> vector<4x16x16xf32>
    "tpu.trace_stop"() : () -> ()
    %47 = arith.addf %41, %46 : vector<4x16x16xf32>
    %c0_14 = arith.constant 0 : index
    %c0_15 = arith.constant 0 : index
    %48 = vector.load %arg10[%c0_14, %c0_15] : memref<16x16xf32, #tpu.memory_space<vmem>>, vector<16x16xf32>
    %49 = vector.shape_cast %48 : vector<16x16xf32> to vector<1x16x16xf32>
    %50 = vector.broadcast %49 : vector<1x16x16xf32> to vector<4x16x16xf32>
    %51 = arith.addf %47, %50 : vector<4x16x16xf32>
    %cst_16 = arith.constant dense<0xFF800000> : vector<4x16xf32>
    %52 = vector.multi_reduction <maximumf>, %51, %cst_16 [2] : vector<4x16x16xf32> to vector<4x16xf32>
    %53 = vector.shape_cast %52 : vector<4x16xf32> to vector<4x16x1xf32>
    %54 = vector.broadcast %53 : vector<4x16x1xf32> to vector<4x16x16xf32>
    %55 = arith.subf %51, %54 : vector<4x16x16xf32>
    %56 = math.exp %55 : vector<4x16x16xf32>
    %cst_17 = arith.constant dense<0.000000e+00> : vector<4x16xf32>
    %57 = vector.multi_reduction <add>, %56, %cst_17 [2] : vector<4x16x16xf32> to vector<4x16xf32>
    %58 = vector.shape_cast %57 : vector<4x16xf32> to vector<4x16x1xf32>
    %59 = tpu.reciprocal %58 {approx = true} : vector<4x16x1xf32> -> vector<4x16x1xf32>
    %60 = vector.broadcast %59 : vector<4x16x1xf32> to vector<4x16x16xf32>
    %61 = arith.mulf %56, %60 : vector<4x16x16xf32>
    %62 = vector.shape_cast %18 : vector<16x64xf32> to vector<16x4x16xf32>
    %63 = tpu.transpose %62, [1, 0, 2] : vector<16x4x16xf32> -> vector<4x16x16xf32>
    "tpu.trace_start"() <{level = 10 : i32, message = "hij,hjd->hid"}> : () -> ()
    %cst_18 = arith.constant dense<0.000000e+00> : vector<4x16x16xf32>
    %64 = tpu.matmul %61, %63, %cst_18 {dimension_numbers = #tpu.dot_dimension_numbers<[2], [1], [1], [2], [0, 0, 0, 1, 1, 2], [0], [0]>} : vector<4x16x16xf32>, vector<4x16x16xf32>, vector<4x16x16xf32> -> vector<4x16x16xf32>
    "tpu.trace_stop"() : () -> ()
    %65 = tpu.transpose %64, [1, 0, 2] : vector<4x16x16xf32> -> vector<16x4x16xf32>
    %66 = vector.shape_cast %65 : vector<16x4x16xf32> to vector<16x64xf32>
    %c0_19 = arith.constant 0 : index
    %c0_20 = arith.constant 0 : index
    %67 = vector.load %arg5[%c0_19, %c0_20] : memref<64x64xf32, #tpu.memory_space<vmem>>, vector<64x64xf32>
    %cst_21 = arith.constant dense<0.000000e+00> : vector<16x64xf32>
    %68 = tpu.matmul %66, %67, %cst_21 {dimension_numbers = #tpu.dot_dimension_numbers<[1], [0], [0], [1], [0, 0, 1, 1], [], []>} : vector<16x64xf32>, vector<64x64xf32>, vector<16x64xf32> -> vector<16x64xf32>
    %69 = arith.addf %0, %68 : vector<16x64xf32>
    %c0_22 = arith.constant 0 : index
    %c0_23 = arith.constant 0 : index
    %70 = vector.load %arg3[%c0_22, %c0_23] : memref<1x64xf32, #tpu.memory_space<vmem>>, vector<1x64xf32>
    %71 = arith.mulf %69, %69 : vector<16x64xf32>
    %cst_24 = arith.constant dense<0.000000e+00> : vector<16xf32>
    %72 = vector.multi_reduction <add>, %71, %cst_24 [1] : vector<16x64xf32> to vector<16xf32>
    %73 = vector.shape_cast %72 : vector<16xf32> to vector<16x1xf32>
    %cst_25 = arith.constant 6.400000e+01 : f32
    %74 = vector.broadcast %cst_25 : f32 to vector<16x1xf32>
    %75 = arith.divf %73, %74 : vector<16x1xf32>
    %cst_26 = arith.constant 9.99999974E-6 : f32
    %76 = vector.broadcast %cst_26 : f32 to vector<16x1xf32>
    %77 = arith.addf %75, %76 : vector<16x1xf32>
    %78 = math.rsqrt %77 : vector<16x1xf32>
    %79 = vector.broadcast %78 : vector<16x1xf32> to vector<16x64xf32>
    %80 = arith.mulf %69, %79 : vector<16x64xf32>
    %81 = vector.broadcast %70 : vector<1x64xf32> to vector<16x64xf32>
    %82 = arith.mulf %80, %81 : vector<16x64xf32>
    %c0_27 = arith.constant 0 : index
    %c0_28 = arith.constant 0 : index
    %83 = vector.load %arg6[%c0_27, %c0_28] : memref<64x384xf32, #tpu.memory_space<vmem>>, vector<64x384xf32>
    %cst_29 = arith.constant dense<0.000000e+00> : vector<16x384xf32>
    %84 = tpu.matmul %82, %83, %cst_29 {dimension_numbers = #tpu.dot_dimension_numbers<[1], [0], [0], [1], [0, 0, 1, 1], [], []>} : vector<16x64xf32>, vector<64x384xf32>, vector<16x384xf32> -> vector<16x384xf32>
    %85 = vector.extract_strided_slice %84 {offsets = [0, 0], sizes = [16, 192], strides = [1, 1]} : vector<16x384xf32> to vector<16x192xf32>
    %86 = vector.extract_strided_slice %84 {offsets = [0, 192], sizes = [16, 192], strides = [1, 1]} : vector<16x384xf32> to vector<16x192xf32>
    %87 = arith.negf %85 : vector<16x192xf32>
    %88 = math.exp %87 : vector<16x192xf32>
    %cst_30 = arith.constant 1.000000e+00 : f32
    %89 = vector.broadcast %cst_30 : f32 to vector<16x192xf32>
    %90 = arith.addf %89, %88 : vector<16x192xf32>
    %91 = arith.divf %89, %90 : vector<16x192xf32>
    %92 = arith.mulf %85, %91 : vector<16x192xf32>
    %93 = arith.mulf %92, %86 : vector<16x192xf32>
    %c0_31 = arith.constant 0 : index
    %c0_32 = arith.constant 0 : index
    %94 = vector.load %arg7[%c0_31, %c0_32] : memref<192x64xf32, #tpu.memory_space<vmem>>, vector<192x64xf32>
    %cst_33 = arith.constant dense<0.000000e+00> : vector<16x64xf32>
    %95 = tpu.matmul %93, %94, %cst_33 {dimension_numbers = #tpu.dot_dimension_numbers<[1], [0], [0], [1], [0, 0, 1, 1], [], []>} : vector<16x192xf32>, vector<192x64xf32>, vector<16x64xf32> -> vector<16x64xf32>
    %96 = arith.addf %69, %95 : vector<16x64xf32>
    %c0_34 = arith.constant 0 : index
    %c0_35 = arith.constant 0 : index
    %97 = vector.load %arg11[%c0_34, %c0_35] : memref<16x64xf32, #tpu.memory_space<vmem>>, vector<16x64xf32>
    tpu.vector_store %arg11[%c0_34, %c0_35], %96 {strides = array<i32>} : memref<16x64xf32, #tpu.memory_space<vmem>>, vector<16x64xf32>,
    return
  }
  func.func @transform_0(%arg0: i32) -> (i32, i32) {
    %c0_i32 = arith.constant 0 : i32
    %c0_i32_0 = arith.constant 0 : i32
    %c0_i32_1 = arith.constant 0 : i32
    return %c0_i32, %c0_i32_0 : i32, i32
  }
  func.func @transform_1(%arg0: i32) -> (i32, i32) {
    %c0_i32 = arith.constant 0 : i32
    %c0_i32_0 = arith.constant 0 : i32
    %c0_i32_1 = arith.constant 0 : i32
    return %c0_i32, %c0_i32_0 : i32, i32
  }
  func.func @transform_2(%arg0: i32) -> (i32, i32) {
    %c0_i32 = arith.constant 0 : i32
    %c0_i32_0 = arith.constant 0 : i32
    %c0_i32_1 = arith.constant 0 : i32
    return %c0_i32, %c0_i32_0 : i32, i32
  }
  func.func @transform_3(%arg0: i32) -> (i32, i32) {
    %c0_i32 = arith.constant 0 : i32
    %c0_i32_0 = arith.constant 0 : i32
    %c0_i32_1 = arith.constant 0 : i32
    return %c0_i32, %c0_i32_0 : i32, i32
  }
  func.func @transform_4(%arg0: i32) -> (i32, i32) {
    %c0_i32 = arith.constant 0 : i32
    %c0_i32_0 = arith.constant 0 : i32
    %c0_i32_1 = arith.constant 0 : i32
    return %c0_i32, %c0_i32_0 : i32, i32
  }
  func.func @transform_5(%arg0: i32) -> (i32, i32) {
    %c0_i32 = arith.constant 0 : i32
    %c0_i32_0 = arith.constant 0 : i32
    %c0_i32_1 = arith.constant 0 : i32
    return %c0_i32, %c0_i32_0 : i32, i32
  }
  func.func @transform_6(%arg0: i32) -> (i32, i32) {
    %c0_i32 = arith.constant 0 : i32
    %c0_i32_0 = arith.constant 0 : i32
    %c0_i32_1 = arith.constant 0 : i32
    return %c0_i32, %c0_i32_0 : i32, i32
  }
  func.func @transform_7(%arg0: i32) -> (i32, i32) {
    %c0_i32 = arith.constant 0 : i32
    %c0_i32_0 = arith.constant 0 : i32
    %c0_i32_1 = arith.constant 0 : i32
    return %c0_i32, %c0_i32_0 : i32, i32
  }
  func.func @transform_8(%arg0: i32) -> (i32, i32) {
    %c0_i32 = arith.constant 0 : i32
    %c0_i32_0 = arith.constant 0 : i32
    %c0_i32_1 = arith.constant 0 : i32
    return %c0_i32, %c0_i32_0 : i32, i32
  }
  func.func @transform_9(%arg0: i32) -> (i32, i32) {
    %c0_i32 = arith.constant 0 : i32
    %c0_i32_0 = arith.constant 0 : i32
    %c0_i32_1 = arith.constant 0 : i32
    return %c0_i32, %c0_i32_0 : i32, i32
  }
  func.func @transform_10(%arg0: i32) -> (i32, i32) {
    %c0_i32 = arith.constant 0 : i32
    %c0_i32_0 = arith.constant 0 : i32
    %c0_i32_1 = arith.constant 0 : i32
    return %c0_i32, %c0_i32_0 : i32, i32
  }
}

</mosaic_0001>

<llo_original>
// kernel: tpu_custom_call.1
$region0: #{tpu_custom_call.1}
  #allocation0 [shape = 'u32[]', space=smem, size = 0x4, offset = 0x4, fixed_abs, tag = 'smem constant byte address 0x4 - core index']
  #allocation1 [shape = 'u32[144,128]{1,0:T(1,128)}', space=vmem, size = 0x12000, scoped, tag = 'internal scratch']
  %s0 = inlined_call_operand.hbm [shape: f32[16,64], index: 0, kind: input, shape index: {}]
  %s1 = inlined_call_operand.vmem [shape: f32[1,64], index: 1, kind: input, shape index: {}]
  %s2 = inlined_call_operand.vmem [shape: f32[1,64], index: 2, kind: input, shape index: {}]
  %s3 = inlined_call_operand.vmem [shape: f32[64,192], index: 3, kind: input, shape index: {}]
  %s4 = inlined_call_operand.hbm [shape: f32[64,64], index: 4, kind: input, shape index: {}]
  %s5 = inlined_call_operand.vmem [shape: f32[64,384], index: 5, kind: input, shape index: {}]
  %s6 = inlined_call_operand.vmem [shape: f32[192,64], index: 6, kind: input, shape index: {}]
  %s7 = inlined_call_operand.hbm [shape: f32[16,32], index: 7, kind: input, shape index: {}]
  %s8 = inlined_call_operand.hbm [shape: f32[16,32], index: 8, kind: input, shape index: {}]
  %s9 = inlined_call_operand.hbm [shape: f32[16,16], index: 9, kind: input, shape index: {}]
  %s10 = inlined_call_operand.hbm [shape: f32[16,64], index: 10, kind: output, shape index: {}]
  %s11 = sld [smem:[#allocation0]]
  $region70: #{tpu_custom_call.1} parent=0
    _
  %s13 = ssub.s32 1, %s11
  %s14 = scalar_select 0, %s13, %s11
  $region1: #{tpu_custom_call.1} parent=0
    #allocation2 [shape = 'u8[8192]{0}', space=vmem, size = 0x2000, scoped, tag = 'input window, operand 0, single buffered']
    #allocation3 [shape = 's32[1]{0}', space=sflag, size = 0x4, scoped, tag = 'scoped memory for tpu_custom_call.1']
    #allocation4 [shape = 's32[1]{0}', space=sflag, size = 0x4, scoped, tag = 'scoped memory for tpu_custom_call.1']
    #allocation5 [shape = 'u8[32768]{0}', space=vmem, size = 0x8000, scoped, tag = 'input window, operand 4, single buffered']
    #allocation6 [shape = 's32[1]{0}', space=sflag, size = 0x4, scoped, tag = 'scoped memory for tpu_custom_call.1']
    #allocation7 [shape = 'u8[8192]{0}', space=vmem, size = 0x2000, scoped, tag = 'input window, operand 7, single buffered']
    #allocation8 [shape = 'u8[8192]{0}', space=vmem, size = 0x2000, scoped, tag = 'input window, operand 8, single buffered']
    #allocation9 [shape = 's32[1]{0}', space=sflag, size = 0x4, scoped, tag = 'scoped memory for tpu_custom_call.1']
    #allocation10 [shape = 'u8[8192]{0}', space=vmem, size = 0x2000, scoped, tag = 'input window, operand 9, single buffered']
    #allocation11 [shape = 'u8[8192]{0}', space=vmem, size = 0x2000, scoped, tag = 'output window, operand 0, single buffered']
    %15 = vsyncpa [#allocation3], 0
    %16 = vsyncpa [#allocation6], 0
    %17 = vsyncpa [#allocation9], 0
    %18 = vsyncpa [#allocation4], 0
    // Predicated region
    $region2: #{tpu_custom_call.1} parent=1 // pred_check
      _
    $region3: #{tpu_custom_call.1} parent=1 // pred_check_branch
      %20 = sbr.rel (0) target = $region5
    $region4: #{tpu_custom_call.1} parent=1 // pred_region
      %s22 = ssub.s32 256, 256
      %23 = vsyncadd [#allocation3], %s22
      %s24 = sshll.u32 [#allocation2], 4
      %s25 = int_to_ptr.vmem [resolvable:$true] %s24
      %30 = dma.hbm_to_vmem [thread:$0]  %s0, 256, %s25, [#allocation3], 128, 128, 8
    $region5: #{tpu_custom_call.1} parent=1 // pred_fallthru
      _
    // Predicated region
    $region6: #{tpu_custom_call.1} parent=1 // pred_check
      _
    $region7: #{tpu_custom_call.1} parent=1 // pred_check_branch
      %32 = sbr.rel (0) target = $region9
    $region8: #{tpu_custom_call.1} parent=1 // pred_region
      _
    $region9: #{tpu_custom_call.1} parent=1 // pred_fallthru
      _
    // Predicated region
    $region10: #{tpu_custom_call.1} parent=1 // pred_check
      _
    $region11: #{tpu_custom_call.1} parent=1 // pred_check_branch
      %34 = sbr.rel (0) target = $region13
    $region12: #{tpu_custom_call.1} parent=1 // pred_region
      _
    $region13: #{tpu_custom_call.1} parent=1 // pred_fallthru
      _
    // Predicated region
    $region14: #{tpu_custom_call.1} parent=1 // pred_check
      _
    $region15: #{tpu_custom_call.1} parent=1 // pred_check_branch
      %36 = sbr.rel (0) target = $region17
    $region16: #{tpu_custom_call.1} parent=1 // pred_region
      _
    $region17: #{tpu_custom_call.1} parent=1 // pred_fallthru
      _
    // Predicated region
    $region18: #{tpu_custom_call.1} parent=1 // pred_check
      _
    $region19: #{tpu_custom_call.1} parent=1 // pred_check_branch
      %38 = sbr.rel (0) target = $region21
    $region20: #{tpu_custom_call.1} parent=1 // pred_region
      %s40 = ssub.s32 1024, 1024
      %41 = vsyncadd [#allocation6], %s40
      %s42 = sshll.u32 [#allocation5], 4
      %s43 = int_to_ptr.vmem [resolvable:$true] %s42
      %48 = dma.hbm_to_vmem [thread:$0]  %s4, 1024, %s43, [#allocation6], 128, 128, 8
    $region21: #{tpu_custom_call.1} parent=1 // pred_fallthru
      _
    // Predicated region
    $region22: #{tpu_custom_call.1} parent=1 // pred_check
      _
    $region23: #{tpu_custom_call.1} parent=1 // pred_check_branch
      %50 = sbr.rel (0) target = $region25
    $region24: #{tpu_custom_call.1} parent=1 // pred_region
      _
    $region25: #{tpu_custom_call.1} parent=1 // pred_fallthru
      _
    // Predicated region
    $region26: #{tpu_custom_call.1} parent=1 // pred_check
      _
    $region27: #{tpu_custom_call.1} parent=1 // pred_check_branch
      %52 = sbr.rel (0) target = $region29
    $region28: #{tpu_custom_call.1} parent=1 // pred_region
      _
    $region29: #{tpu_custom_call.1} parent=1 // pred_fallthru
      _
    // Predicated region
    $region30: #{tpu_custom_call.1} parent=1 // pred_check
      _
    $region31: #{tpu_custom_call.1} parent=1 // pred_check_branch
      %54 = sbr.rel (0) target = $region33
    $region32: #{tpu_custom_call.1} parent=1 // pred_region
      %s56 = ssub.s32 256, 256
      %57 = vsyncadd [#allocation6], %s56
      %s58 = sshll.u32 [#allocation7], 4
      %s59 = int_to_ptr.vmem [resolvable:$true] %s58
      %64 = dma.hbm_to_vmem [thread:$0]  %s7, 256, %s59, [#allocation6], 128, 128, 8
    $region33: #{tpu_custom_call.1} parent=1 // pred_fallthru
      _
    // Predicated region
    $region34: #{tpu_custom_call.1} parent=1 // pred_check
      _
    $region35: #{tpu_custom_call.1} parent=1 // pred_check_branch
      %66 = sbr.rel (0) target = $region37
    $region36: #{tpu_custom_call.1} parent=1 // pred_region
      %s68 = ssub.s32 256, 256
      %69 = vsyncadd [#allocation9], %s68
      %s70 = sshll.u32 [#allocation8], 4
      %s71 = int_to_ptr.vmem [resolvable:$true] %s70
      %76 = dma.hbm_to_vmem [thread:$0]  %s8, 256, %s71, [#allocation9], 128, 128, 8
    $region37: #{tpu_custom_call.1} parent=1 // pred_fallthru
      _
    // Predicated region
    $region38: #{tpu_custom_call.1} parent=1 // pred_check
      _
    $region39: #{tpu_custom_call.1} parent=1 // pred_check_branch
      %78 = sbr.rel (0) target = $region41
    $region40: #{tpu_custom_call.1} parent=1 // pred_region
      %s80 = ssub.s32 256, 256
      %81 = vsyncadd [#allocation9], %s80
      %s82 = sshll.u32 [#allocation10], 4
      %s83 = int_to_ptr.vmem [resolvable:$true] %s82
      %88 = dma.hbm_to_vmem [thread:$0]  %s9, 256, %s83, [#allocation9], 128, 128, 8
    $region41: #{tpu_custom_call.1} parent=1 // pred_fallthru
      _
    // Predicated region
    $region42: #{tpu_custom_call.1} parent=1 // pred_check
      _
    $region43: #{tpu_custom_call.1} parent=1 // pred_check_branch
      %90 = sbr.rel (0) target = $region45
    $region44: #{tpu_custom_call.1} parent=1 // pred_region
      %91 = dma.done [#allocation3], 256
    $region45: #{tpu_custom_call.1} parent=1 // pred_fallthru
      _
    // Predicated region
    $region46: #{tpu_custom_call.1} parent=1 // pred_check
      _
    $region47: #{tpu_custom_call.1} parent=1 // pred_check_branch
      %93 = sbr.rel (0) target = $region49
    $region48: #{tpu_custom_call.1} parent=1 // pred_region
      %94 = dma.done [#allocation6], 1024
    $region49: #{tpu_custom_call.1} parent=1 // pred_fallthru
      _
    // Predicated region
    $region50: #{tpu_custom_call.1} parent=1 // pred_check
      _
    $region51: #{tpu_custom_call.1} parent=1 // pred_check_branch
      %96 = sbr.rel (0) target = $region53
    $region52: #{tpu_custom_call.1} parent=1 // pred_region
      %97 = dma.done [#allocation6], 256
    $region53: #{tpu_custom_call.1} parent=1 // pred_fallthru
      _
    // Predicated region
    $region54: #{tpu_custom_call.1} parent=1 // pred_check
      _
    $region55: #{tpu_custom_call.1} parent=1 // pred_check_branch
      %99 = sbr.rel (0) target = $region57
    $region56: #{tpu_custom_call.1} parent=1 // pred_region
      %100 = dma.done [#allocation9], 256
    $region57: #{tpu_custom_call.1} parent=1 // pred_fallthru
      _
    // Predicated region
    $region58: #{tpu_custom_call.1} parent=1 // pred_check
      _
    $region59: #{tpu_custom_call.1} parent=1 // pred_check_branch
      %102 = sbr.rel (0) target = $region61
    $region60: #{tpu_custom_call.1} parent=1 // pred_region
      %103 = dma.done [#allocation9], 256
    $region61: #{tpu_custom_call.1} parent=1 // pred_fallthru
      _
    %v104 = vld [vmem:[#allocation2] sm:$0xff]
    %v105 = vld [vmem:[#allocation2 + $0x8] sm:$0xff]
    %v106 = vld [vmem:[%s1] sm:$0x1]
    %v107 = vmul.f32 %v104, %v104
    %v108 = vmul.f32 %v105, %v105
    %vm109 = vcmask 523264
    %v110 = vsel %vm109, %v107, 0.0
    %111 = vadd.xlane.f32.xlu0 %v110
    %v112 = vpop.xlane.xlu0 %111
    %v113 = vsel %vm109, %v108, 0.0
    %114 = vadd.xlane.f32.xlu0 %v113
    %v115 = vpop.xlane.xlu0 %114
    %v116 = vrcp.pop 64.0
    %v117 = vmul.f32 %v112, %v116
    %v118 = vmul.f32 %v115, %v116
    %v119 = vadd.f32 %v117, 1e-05
    %v120 = vadd.f32 %v118, 1e-05
    %v121 = vrsqrt.pop %v119
    %v122 = vrsqrt.pop %v120
    %v123 = vmul.f32 %v104, %v121
    %v124 = vmul.f32 %v105, %v122
    %v126 = vlaneseq
    %v127 = vshrl.u32 %v126, 7
    %v128 = vsub.s32 0, %v127
    %v129 = vrot.slane %v106, %v128
    %v131 = vmul.f32 %v123, %v129
    %v132 = vmul.f32 %v124, %v129
    %v133 = vld [vmem:[%s3] sm:$0xff]
    %v134 = vld [vmem:[%s3 + $0x8] sm:$0xff]
    %v135 = vld [vmem:[%s3 + $0x10] sm:$0xff]
    %v136 = vld [vmem:[%s3 + $0x18] sm:$0xff]
    %v137 = vld [vmem:[%s3 + $0x20] sm:$0xff]
    %v138 = vld [vmem:[%s3 + $0x28] sm:$0xff]
    %v139 = vld [vmem:[%s3 + $0x30] sm:$0xff]
    %v140 = vld [vmem:[%s3 + $0x38] sm:$0xff]
    %v141 = vld [vmem:[%s3 + $0x40] sm:$0xff]
    %v142 = vld [vmem:[%s3 + $0x48] sm:$0xff]
    %v143 = vld [vmem:[%s3 + $0x50] sm:$0xff]
    %v144 = vld [vmem:[%s3 + $0x58] sm:$0xff]
    %v145 = vld [vmem:[%s3 + $0x60] sm:$0xff]
    %v146 = vld [vmem:[%s3 + $0x68] sm:$0xff]
    %v147 = vld [vmem:[%s3 + $0x70] sm:$0xff]
    %v148 = vld [vmem:[%s3 + $0x78] sm:$0xff]
    %v150 = vsel %vm109, %v131, 0
    %v153 = vsel %vm109, %v132, 0
    %155 = vmatprep.subr.mxu0 0.0
    %156 = vmatpush1.msra.mxu0 0.0
    %157 = vmatprep.subr.mxu0 0.0
    %158 = vmatpush1.msra.mxu0 0.0
    %159 = vmatprep.subr.mxu0 0.0
    %160 = vmatpush1.msra.mxu0 0.0
    %161 = vmatprep.subr.mxu0 0.0
    %162 = vmatpush1.msra.mxu0 0.0
    %163 = vmatprep.subr.mxu0 0.0
    %164 = vmatpush1.msra.mxu0 0.0
    %165 = vmatprep.subr.mxu0 0.0
    %166 = vmatpush1.msra.mxu0 0.0
    %167 = vmatprep.subr.mxu0 0.0
    %168 = vmatpush1.msra.mxu0 0.0
    %169 = vmatprep.subr.mxu0 0.0
    %170 = vmatpush1.msra.mxu0 0.0
    %171 = vmatprep.subr.mxu0 %v148
    %172 = vmatpush1.msra.mxu0 %v147
    %173 = vmatprep.subr.mxu0 %v146
    %174 = vmatpush1.msra.mxu0 %v145
    %175 = vmatprep.subr.mxu0 %v144
    %176 = vmatpush1.msra.mxu0 %v143
    %177 = vmatprep.subr.mxu0 %v142
    %178 = vmatpush1.msra.mxu0 %v141
    %179 = vmatprep.subr.mxu0 %v140
    %180 = vmatpush1.msra.mxu0 %v139
    %181 = vmatprep.subr.mxu0 %v138
    %182 = vmatpush1.msra.mxu0 %v137
    %183 = vmatprep.subr.mxu0 %v136
    %184 = vmatpush1.msra.mxu0 %v135
    %185 = vmatprep.subr.mxu0 %v134
    %186 = vmatpush1.msra.mxu0 %v133
    %187 = vmatprep.subr.mxu0 0.0
    %188 = vmatpush2.msra.mxu0 0.0
    %189 = vmatprep.subr.mxu0 0.0
    %190 = vmatpush2.msra.mxu0 0.0
    %191 = vmatprep.subr.mxu0 0.0
    %192 = vmatpush2.msra.mxu0 0.0
    %193 = vmatprep.subr.mxu0 0.0
    %194 = vmatpush2.msra.mxu0 0.0
    %195 = vmatprep.subr.mxu0 0.0
    %196 = vmatpush2.msra.mxu0 0.0
    %197 = vmatprep.subr.mxu0 0.0
    %198 = vmatpush2.msra.mxu0 0.0
    %199 = vmatprep.subr.mxu0 0.0
    %200 = vmatpush2.msra.mxu0 0.0
    %201 = vmatprep.subr.mxu0 0.0
    %202 = vmatpush2.msra.mxu0 0.0
    %203 = vmatprep.subr.mxu0 0.0
    %204 = vmatpush2.msra.mxu0 0.0
    %205 = vmatprep.subr.mxu0 0.0
    %206 = vmatpush2.msra.mxu0 0.0
    %207 = vmatprep.subr.mxu0 0.0
    %208 = vmatpush2.msra.mxu0 0.0
    %209 = vmatprep.subr.mxu0 0.0
    %210 = vmatpush2.msra.mxu0 0.0
    %211 = vmatprep.subr.mxu0 0.0
    %212 = vmatpush2.msra.mxu0 0.0
    %213 = vmatprep.subr.mxu0 0.0
    %214 = vmatpush2.msra.mxu0 0.0
    %215 = vmatprep.subr.mxu0 0.0
    %216 = vmatpush2.msra.mxu0 0.0
    %217 = vmatprep.subr.mxu0 0.0
    %218 = vmatpush2.msra.mxu0 0.0
    %219 = vmatprep.mubr.f32.mxu0 0.0
    %220 = vmatmul.mubr.f32.gmra.mxu0 %v150
    %v221 = vpop.f32.mrf.mxu0
    %v222 = vadd.f32 0.0, %v221
    %v223 = vpop.f32.mrf.mxu0
    %v224 = vadd.f32 0.0, %v223
    %225 = vmatprep.mubr.f32.mxu0 0.0
    %226 = vmatmul.mubr.f32.gmra.mxu0 %v153
    %v227 = vpop.f32.mrf.mxu0
    %v228 = vadd.f32 0.0, %v227
    %v229 = vpop.f32.mrf.mxu0
    %v230 = vadd.f32 0.0, %v229
    %231 = vdwg.mxu0
    %v232 = vld [vmem:[#allocation7] sm:$0xff]
    %v233 = vld [vmem:[#allocation7 + $0x8] sm:$0xff]
    %v234 = vld [vmem:[#allocation8] sm:$0xff]
    %v235 = vld [vmem:[#allocation8 + $0x8] sm:$0xff]
    %v236 = vmul.f32 %v222, %v232
    %v237 = vmul.f32 %v228, %v233
    %240 = vrot.lane.b32.xlu0 %v234, 32
    %v241 = vpop.permute.xlu0 %240
    %242 = vrot.lane.b32.xlu0 %v235, 32
    %v243 = vpop.permute.xlu0 %242
    %v246 = vmul.f32 %v222, %v241
    %v247 = vmul.f32 %v228, %v243
    %250 = vrot.lane.b32.xlu0 %v246, 96
    %v251 = vpop.permute.xlu0 %250
    %252 = vrot.lane.b32.xlu0 %v247, 96
    %v253 = vpop.permute.xlu0 %252
    %v256 = vsub.f32 %v236, %v251
    %v257 = vsub.f32 %v237, %v253
    %260 = vrot.lane.b32.xlu0 %v232, 32
    %v261 = vpop.permute.xlu0 %260
    %262 = vrot.lane.b32.xlu0 %v233, 32
    %v263 = vpop.permute.xlu0 %262
    %v266 = vmul.f32 %v222, %v261
    %v267 = vmul.f32 %v228, %v263
    %v268 = vmul.f32 %v222, %v234
    %v269 = vmul.f32 %v228, %v235
    %272 = vrot.lane.b32.xlu0 %v268, 32
    %v273 = vpop.permute.xlu0 %272
    %274 = vrot.lane.b32.xlu0 %v269, 32
    %v275 = vpop.permute.xlu0 %274
    %v278 = vadd.f32 %v266, %v273
    %v279 = vadd.f32 %v267, %v275
    %280 = vrot.lane.b32.xlu0 %v232, 64
    %v281 = vpop.permute.xlu0 %280
    %282 = vrot.lane.b32.xlu0 %v233, 64
    %v283 = vpop.permute.xlu0 %282
    %v286 = vmul.f32 %v222, %v281
    %v287 = vmul.f32 %v228, %v283
    %288 = vrot.lane.b32.xlu0 %v234, 96
    %v289 = vpop.permute.xlu0 %288
    %290 = vrot.lane.b32.xlu0 %v235, 96
    %v291 = vpop.permute.xlu0 %290
    %v294 = vmul.f32 %v222, %v289
    %v295 = vmul.f32 %v228, %v291
    %298 = vrot.lane.b32.xlu0 %v294, 96
    %v299 = vpop.permute.xlu0 %298
    %300 = vrot.lane.b32.xlu0 %v295, 96
    %v301 = vpop.permute.xlu0 %300
    %v304 = vsub.f32 %v286, %v299
    %v305 = vsub.f32 %v287, %v301
    %306 = vrot.lane.b32.xlu0 %v232, 96
    %v307 = vpop.permute.xlu0 %306
    %308 = vrot.lane.b32.xlu0 %v233, 96
    %v309 = vpop.permute.xlu0 %308
    %v312 = vmul.f32 %v222, %v307
    %v313 = vmul.f32 %v228, %v309
    %314 = vrot.lane.b32.xlu0 %v234, 64
    %v315 = vpop.permute.xlu0 %314
    %316 = vrot.lane.b32.xlu0 %v235, 64
    %v317 = vpop.permute.xlu0 %316
    %v320 = vmul.f32 %v222, %v315
    %v321 = vmul.f32 %v228, %v317
    %324 = vrot.lane.b32.xlu0 %v320, 32
    %v325 = vpop.permute.xlu0 %324
    %326 = vrot.lane.b32.xlu0 %v321, 32
    %v327 = vpop.permute.xlu0 %326
    %v330 = vadd.f32 %v312, %v325
    %v331 = vadd.f32 %v313, %v327
    %334 = vrot.lane.b32.xlu0 %v256, 120
    %v335 = vpop.permute.xlu0 %334
    %336 = vrot.lane.b32.xlu0 %v257, 120
    %v337 = vpop.permute.xlu0 %336
    %340 = vrot.lane.b32.xlu0 %v256, 112
    %v341 = vpop.permute.xlu0 %340
    %342 = vrot.lane.b32.xlu0 %v257, 112
    %v343 = vpop.permute.xlu0 %342
    %346 = vrot.lane.b32.xlu0 %v256, 104
    %v347 = vpop.permute.xlu0 %346
    %348 = vrot.lane.b32.xlu0 %v257, 104
    %v349 = vpop.permute.xlu0 %348
    %v352 = vcombine.low %v256, %v341
    %v353 = vcombine.high %v256, %v341
    %v355 = vunpack.c.l.s4 1983009808
    %v356 = vunpack.c.0.s8 %v355
    %v357 = vlaneseq
    %v358 = vshrl.u32 %v357, 7
    %v359 = vsub.s32 %v356, %v358
    %v360 = vrot.slane %v352, %v359
    %v362 = vunpack.c.l.s4 1983009808
    %v363 = vunpack.c.0.s8 %v362
    %v364 = vlaneseq
    %v365 = vshrl.u32 %v364, 7
    %v366 = vsub.s32 %v363, %v365
    %v367 = vrot.slane %v353, %v366
    %v368 = vcombine.low %v335, %v347
    %v369 = vcombine.high %v335, %v347
    %v371 = vunpack.c.l.s4 1983009808
    %v372 = vunpack.c.0.s8 %v371
    %v373 = vlaneseq
    %v374 = vshrl.u32 %v373, 7
    %v375 = vsub.s32 %v372, %v374
    %v376 = vrot.slane %v368, %v375
    %v378 = vunpack.c.l.s4 1983009808
    %v379 = vunpack.c.0.s8 %v378
    %v380 = vlaneseq
    %v381 = vshrl.u32 %v380, 7
    %v382 = vsub.s32 %v379, %v381
    %v383 = vrot.slane %v369, %v382
    %v384 = vcombine.low %v360, %v376
    %v385 = vcombine.high %v360, %v376
    %v387 = vunpack.c.l.s4 1934713408
    %v388 = vunpack.c.0.s8 %v387
    %v389 = vlaneseq
    %v390 = vshrl.u32 %v389, 7
    %v391 = vsub.s32 %v388, %v390
    %v392 = vrot.slane %v384, %v391
    %v394 = vunpack.c.l.s4 1934713408
    %v395 = vunpack.c.0.s8 %v394
    %v396 = vlaneseq
    %v397 = vshrl.u32 %v396, 7
    %v398 = vsub.s32 %v395, %v397
    %v399 = vrot.slane %v385, %v398
    %v400 = vcombine.low %v367, %v383
    %v401 = vcombine.high %v367, %v383
    %v403 = vunpack.c.l.s4 1934713408
    %v404 = vunpack.c.0.s8 %v403
    %v405 = vlaneseq
    %v406 = vshrl.u32 %v405, 7
    %v407 = vsub.s32 %v404, %v406
    %v408 = vrot.slane %v400, %v407
    %v410 = vunpack.c.l.s4 1934713408
    %v411 = vunpack.c.0.s8 %v410
    %v412 = vlaneseq
    %v413 = vshrl.u32 %v412, 7
    %v414 = vsub.s32 %v411, %v413
    %v415 = vrot.slane %v401, %v414
    %v416 = vcombine.high %v392, 0.0
    %v417 = vcombine.high %v399, 0.0
    %v418 = vcombine.high %v408, 0.0
    %v419 = vcombine.high %v415, 0.0
    %v420 = vcombine.low %v257, %v343
    %v421 = vcombine.high %v257, %v343
    %v423 = vunpack.c.l.s4 1983009808
    %v424 = vunpack.c.0.s8 %v423
    %v425 = vlaneseq
    %v426 = vshrl.u32 %v425, 7
    %v427 = vsub.s32 %v424, %v426
    %v428 = vrot.slane %v420, %v427
    %v430 = vunpack.c.l.s4 1983009808
    %v431 = vunpack.c.0.s8 %v430
    %v432 = vlaneseq
    %v433 = vshrl.u32 %v432, 7
    %v434 = vsub.s32 %v431, %v433
    %v435 = vrot.slane %v421, %v434
    %v436 = vcombine.low %v337, %v349
    %v437 = vcombine.high %v337, %v349
    %v439 = vunpack.c.l.s4 1983009808
    %v440 = vunpack.c.0.s8 %v439
    %v441 = vlaneseq
    %v442 = vshrl.u32 %v441, 7
    %v443 = vsub.s32 %v440, %v442
    %v444 = vrot.slane %v436, %v443
    %v446 = vunpack.c.l.s4 1983009808
    %v447 = vunpack.c.0.s8 %v446
    %v448 = vlaneseq
    %v449 = vshrl.u32 %v448, 7
    %v450 = vsub.s32 %v447, %v449
    %v451 = vrot.slane %v437, %v450
    %v452 = vcombine.low %v428, %v444
    %v453 = vcombine.high %v428, %v444
    %v455 = vunpack.c.l.s4 1934713408
    %v456 = vunpack.c.0.s8 %v455
    %v457 = vlaneseq
    %v458 = vshrl.u32 %v457, 7
    %v459 = vsub.s32 %v456, %v458
    %v460 = vrot.slane %v452, %v459
    %v462 = vunpack.c.l.s4 1934713408
    %v463 = vunpack.c.0.s8 %v462
    %v464 = vlaneseq
    %v465 = vshrl.u32 %v464, 7
    %v466 = vsub.s32 %v463, %v465
    %v467 = vrot.slane %v453, %v466
    %v468 = vcombine.low %v435, %v451
    %v469 = vcombine.high %v435, %v451
    %v471 = vunpack.c.l.s4 1934713408
    %v472 = vunpack.c.0.s8 %v471
    %v473 = vlaneseq
    %v474 = vshrl.u32 %v473, 7
    %v475 = vsub.s32 %v472, %v474
    %v476 = vrot.slane %v468, %v475
    %v478 = vunpack.c.l.s4 1934713408
    %v479 = vunpack.c.0.s8 %v478
    %v480 = vlaneseq
    %v481 = vshrl.u32 %v480, 7
    %v482 = vsub.s32 %v479, %v481
    %v483 = vrot.slane %v469, %v482
    %v484 = vcombine.high %v460, 0.0
    %v485 = vcombine.high %v467, 0.0
    %v486 = vcombine.high %v476, 0.0
    %v487 = vcombine.high %v483, 0.0
    %v488 = vcombine.low %v392, %v399
    %v490 = vunpack.c.l.s4 1983009808
    %v491 = vunpack.c.0.s8 %v490
    %v492 = vlaneseq
    %v493 = vshrl.u32 %v492, 7
    %v494 = vsub.s32 %v491, %v493
    %v495 = vrot.slane %v488, %v494
    %v496 = vcombine.low %v416, %v417
    %v498 = vunpack.c.l.s4 1983009808
    %v499 = vunpack.c.0.s8 %v498
    %v500 = vlaneseq
    %v501 = vshrl.u32 %v500, 7
    %v502 = vsub.s32 %v499, %v501
    %v503 = vrot.slane %v496, %v502
    %v504 = vcombine.low %v408, %v415
    %v506 = vunpack.c.l.s4 1983009808
    %v507 = vunpack.c.0.s8 %v506
    %v508 = vlaneseq
    %v509 = vshrl.u32 %v508, 7
    %v510 = vsub.s32 %v507, %v509
    %v511 = vrot.slane %v504, %v510
    %v512 = vcombine.low %v418, %v419
    %v514 = vunpack.c.l.s4 1983009808
    %v515 = vunpack.c.0.s8 %v514
    %v516 = vlaneseq
    %v517 = vshrl.u32 %v516, 7
    %v518 = vsub.s32 %v515, %v517
    %v519 = vrot.slane %v512, %v518
    %v520 = vcombine.low %v495, %v503
    %v521 = vcombine.high %v495, %v503
    %v523 = vunpack.c.l.s4 1934713408
    %v524 = vunpack.c.0.s8 %v523
    %v525 = vlaneseq
    %v526 = vshrl.u32 %v525, 7
    %v527 = vsub.s32 %v524, %v526
    %v528 = vrot.slane %v520, %v527
    %v530 = vunpack.c.l.s4 1934713408
    %v531 = vunpack.c.0.s8 %v530
    %v532 = vlaneseq
    %v533 = vshrl.u32 %v532, 7
    %v534 = vsub.s32 %v531, %v533
    %v535 = vrot.slane %v521, %v534
    %v536 = vcombine.low %v511, %v519
    %v537 = vcombine.high %v511, %v519
    %v539 = vunpack.c.l.s4 1934713408
    %v540 = vunpack.c.0.s8 %v539
    %v541 = vlaneseq
    %v542 = vshrl.u32 %v541, 7
    %v543 = vsub.s32 %v540, %v542
    %v544 = vrot.slane %v536, %v543
    %v546 = vunpack.c.l.s4 1934713408
    %v547 = vunpack.c.0.s8 %v546
    %v548 = vlaneseq
    %v549 = vshrl.u32 %v548, 7
    %v550 = vsub.s32 %v547, %v549
    %v551 = vrot.slane %v537, %v550
    %v552 = vcombine.low %v528, %v544
    %v553 = vcombine.high %v528, %v544
    %v554 = vcombine.low %v535, %v551
    %v555 = vcombine.high %v535, %v551
    %v556 = vcombine.low %v460, %v467
    %v558 = vunpack.c.l.s4 1983009808
    %v559 = vunpack.c.0.s8 %v558
    %v560 = vlaneseq
    %v561 = vshrl.u32 %v560, 7
    %v562 = vsub.s32 %v559, %v561
    %v563 = vrot.slane %v556, %v562
    %v564 = vcombine.low %v484, %v485
    %v566 = vunpack.c.l.s4 1983009808
    %v567 = vunpack.c.0.s8 %v566
    %v568 = vlaneseq
    %v569 = vshrl.u32 %v568, 7
    %v570 = vsub.s32 %v567, %v569
    %v571 = vrot.slane %v564, %v570
    %v572 = vcombine.low %v476, %v483
    %v574 = vunpack.c.l.s4 1983009808
    %v575 = vunpack.c.0.s8 %v574
    %v576 = vlaneseq
    %v577 = vshrl.u32 %v576, 7
    %v578 = vsub.s32 %v575, %v577
    %v579 = vrot.slane %v572, %v578
    %v580 = vcombine.low %v486, %v487
    %v582 = vunpack.c.l.s4 1983009808
    %v583 = vunpack.c.0.s8 %v582
    %v584 = vlaneseq
    %v585 = vshrl.u32 %v584, 7
    %v586 = vsub.s32 %v583, %v585
    %v587 = vrot.slane %v580, %v586
    %v588 = vcombine.low %v563, %v571
    %v589 = vcombine.high %v563, %v571
    %v591 = vunpack.c.l.s4 1934713408
    %v592 = vunpack.c.0.s8 %v591
    %v593 = vlaneseq
    %v594 = vshrl.u32 %v593, 7
    %v595 = vsub.s32 %v592, %v594
    %v596 = vrot.slane %v588, %v595
    %v598 = vunpack.c.l.s4 1934713408
    %v599 = vunpack.c.0.s8 %v598
    %v600 = vlaneseq
    %v601 = vshrl.u32 %v600, 7
    %v602 = vsub.s32 %v599, %v601
    %v603 = vrot.slane %v589, %v602
    %v604 = vcombine.low %v579, %v587
    %v605 = vcombine.high %v579, %v587
    %v607 = vunpack.c.l.s4 1934713408
    %v608 = vunpack.c.0.s8 %v607
    %v609 = vlaneseq
    %v610 = vshrl.u32 %v609, 7
    %v611 = vsub.s32 %v608, %v610
    %v612 = vrot.slane %v604, %v611
    %v614 = vunpack.c.l.s4 1934713408
    %v615 = vunpack.c.0.s8 %v614
    %v616 = vlaneseq
    %v617 = vshrl.u32 %v616, 7
    %v618 = vsub.s32 %v615, %v617
    %v619 = vrot.slane %v605, %v618
    %v620 = vcombine.low %v596, %v612
    %v621 = vcombine.high %v596, %v612
    %v622 = vcombine.low %v603, %v619
    %v623 = vcombine.high %v603, %v619
    %626 = vrot.lane.b32.xlu0 %v304, 120
    %v627 = vpop.permute.xlu0 %626
    %628 = vrot.lane.b32.xlu0 %v305, 120
    %v629 = vpop.permute.xlu0 %628
    %630 = vrot.lane.b32.xlu0 %v304, 112
    %v631 = vpop.permute.xlu0 %630
    %632 = vrot.lane.b32.xlu0 %v305, 112
    %v633 = vpop.permute.xlu0 %632
    %634 = vrot.lane.b32.xlu0 %v304, 104
    %v635 = vpop.permute.xlu0 %634
    %636 = vrot.lane.b32.xlu0 %v305, 104
    %v637 = vpop.permute.xlu0 %636
    %638 = vrot.lane.b32.xlu0 %v304, 64
    %v639 = vpop.permute.xlu0 %638
    %640 = vrot.lane.b32.xlu0 %v305, 64
    %v641 = vpop.permute.xlu0 %640
    %642 = vrot.lane.b32.xlu0 %v627, 64
    %v643 = vpop.permute.xlu0 %642
    %644 = vrot.lane.b32.xlu0 %v629, 64
    %v645 = vpop.permute.xlu0 %644
    %646 = vrot.lane.b32.xlu0 %v631, 64
    %v647 = vpop.permute.xlu0 %646
    %648 = vrot.lane.b32.xlu0 %v633, 64
    %v649 = vpop.permute.xlu0 %648
    %650 = vrot.lane.b32.xlu0 %v635, 64
    %v651 = vpop.permute.xlu0 %650
    %652 = vrot.lane.b32.xlu0 %v637, 64
    %v653 = vpop.permute.xlu0 %652
    %v662 = vcombine.low %v639, %v647
    %v663 = vcombine.high %v639, %v647
    %v665 = vunpack.c.l.s4 1983009808
    %v666 = vunpack.c.0.s8 %v665
    %v667 = vlaneseq
    %v668 = vshrl.u32 %v667, 7
    %v669 = vsub.s32 %v666, %v668
    %v670 = vrot.slane %v662, %v669
    %v672 = vunpack.c.l.s4 1983009808
    %v673 = vunpack.c.0.s8 %v672
    %v674 = vlaneseq
    %v675 = vshrl.u32 %v674, 7
    %v676 = vsub.s32 %v673, %v675
    %v677 = vrot.slane %v663, %v676
    %v678 = vcombine.low %v643, %v651
    %v679 = vcombine.high %v643, %v651
    %v681 = vunpack.c.l.s4 1983009808
    %v682 = vunpack.c.0.s8 %v681
    %v683 = vlaneseq
    %v684 = vshrl.u32 %v683, 7
    %v685 = vsub.s32 %v682, %v684
    %v686 = vrot.slane %v678, %v685
    %v688 = vunpack.c.l.s4 1983009808
    %v689 = vunpack.c.0.s8 %v688
    %v690 = vlaneseq
    %v691 = vshrl.u32 %v690, 7
    %v692 = vsub.s32 %v689, %v691
    %v693 = vrot.slane %v679, %v692
    %v694 = vcombine.low %v670, %v686
    %v695 = vcombine.high %v670, %v686
    %v697 = vunpack.c.l.s4 1934713408
    %v698 = vunpack.c.0.s8 %v697
    %v699 = vlaneseq
    %v700 = vshrl.u32 %v699, 7
    %v701 = vsub.s32 %v698, %v700
    %v702 = vrot.slane %v694, %v701
    %v704 = vunpack.c.l.s4 1934713408
    %v705 = vunpack.c.0.s8 %v704
    %v706 = vlaneseq
    %v707 = vshrl.u32 %v706, 7
    %v708 = vsub.s32 %v705, %v707
    %v709 = vrot.slane %v695, %v708
    %v710 = vcombine.low %v677, %v693
    %v711 = vcombine.high %v677, %v693
    %v713 = vunpack.c.l.s4 1934713408
    %v714 = vunpack.c.0.s8 %v713
    %v715 = vlaneseq
    %v716 = vshrl.u32 %v715, 7
    %v717 = vsub.s32 %v714, %v716
    %v718 = vrot.slane %v710, %v717
    %v720 = vunpack.c.l.s4 1934713408
    %v721 = vunpack.c.0.s8 %v720
    %v722 = vlaneseq
    %v723 = vshrl.u32 %v722, 7
    %v724 = vsub.s32 %v721, %v723
    %v725 = vrot.slane %v711, %v724
    %v726 = vcombine.high %v702, 0.0
    %v727 = vcombine.high %v709, 0.0
    %v728 = vcombine.high %v718, 0.0
    %v729 = vcombine.high %v725, 0.0
    %v730 = vcombine.low %v641, %v649
    %v731 = vcombine.high %v641, %v649
    %v733 = vunpack.c.l.s4 1983009808
    %v734 = vunpack.c.0.s8 %v733
    %v735 = vlaneseq
    %v736 = vshrl.u32 %v735, 7
    %v737 = vsub.s32 %v734, %v736
    %v738 = vrot.slane %v730, %v737
    %v740 = vunpack.c.l.s4 1983009808
    %v741 = vunpack.c.0.s8 %v740
    %v742 = vlaneseq
    %v743 = vshrl.u32 %v742, 7
    %v744 = vsub.s32 %v741, %v743
    %v745 = vrot.slane %v731, %v744
    %v746 = vcombine.low %v645, %v653
    %v747 = vcombine.high %v645, %v653
    %v749 = vunpack.c.l.s4 1983009808
    %v750 = vunpack.c.0.s8 %v749
    %v751 = vlaneseq
    %v752 = vshrl.u32 %v751, 7
    %v753 = vsub.s32 %v750, %v752
    %v754 = vrot.slane %v746, %v753
    %v756 = vunpack.c.l.s4 1983009808
    %v757 = vunpack.c.0.s8 %v756
    %v758 = vlaneseq
    %v759 = vshrl.u32 %v758, 7
    %v760 = vsub.s32 %v757, %v759
    %v761 = vrot.slane %v747, %v760
    %v762 = vcombine.low %v738, %v754
    %v763 = vcombine.high %v738, %v754
    %v765 = vunpack.c.l.s4 1934713408
    %v766 = vunpack.c.0.s8 %v765
    %v767 = vlaneseq
    %v768 = vshrl.u32 %v767, 7
    %v769 = vsub.s32 %v766, %v768
    %v770 = vrot.slane %v762, %v769
    %v772 = vunpack.c.l.s4 1934713408
    %v773 = vunpack.c.0.s8 %v772
    %v774 = vlaneseq
    %v775 = vshrl.u32 %v774, 7
    %v776 = vsub.s32 %v773, %v775
    %v777 = vrot.slane %v763, %v776
    %v778 = vcombine.low %v745, %v761
    %v779 = vcombine.high %v745, %v761
    %v781 = vunpack.c.l.s4 1934713408
    %v782 = vunpack.c.0.s8 %v781
    %v783 = vlaneseq
    %v784 = vshrl.u32 %v783, 7
    %v785 = vsub.s32 %v782, %v784
    %v786 = vrot.slane %v778, %v785
    %v788 = vunpack.c.l.s4 1934713408
    %v789 = vunpack.c.0.s8 %v788
    %v790 = vlaneseq
    %v791 = vshrl.u32 %v790, 7
    %v792 = vsub.s32 %v789, %v791
    %v793 = vrot.slane %v779, %v792
    %v794 = vcombine.high %v770, 0.0
    %v795 = vcombine.high %v777, 0.0
    %v796 = vcombine.high %v786, 0.0
    %v797 = vcombine.high %v793, 0.0
    %v798 = vcombine.low %v702, %v709
    %v800 = vunpack.c.l.s4 1983009808
    %v801 = vunpack.c.0.s8 %v800
    %v802 = vlaneseq
    %v803 = vshrl.u32 %v802, 7
    %v804 = vsub.s32 %v801, %v803
    %v805 = vrot.slane %v798, %v804
    %v806 = vcombine.low %v726, %v727
    %v808 = vunpack.c.l.s4 1983009808
    %v809 = vunpack.c.0.s8 %v808
    %v810 = vlaneseq
    %v811 = vshrl.u32 %v810, 7
    %v812 = vsub.s32 %v809, %v811
    %v813 = vrot.slane %v806, %v812
    %v814 = vcombine.low %v718, %v725
    %v816 = vunpack.c.l.s4 1983009808
    %v817 = vunpack.c.0.s8 %v816
    %v818 = vlaneseq
    %v819 = vshrl.u32 %v818, 7
    %v820 = vsub.s32 %v817, %v819
    %v821 = vrot.slane %v814, %v820
    %v822 = vcombine.low %v728, %v729
    %v824 = vunpack.c.l.s4 1983009808
    %v825 = vunpack.c.0.s8 %v824
    %v826 = vlaneseq
    %v827 = vshrl.u32 %v826, 7
    %v828 = vsub.s32 %v825, %v827
    %v829 = vrot.slane %v822, %v828
    %v830 = vcombine.low %v805, %v813
    %v831 = vcombine.high %v805, %v813
    %v833 = vunpack.c.l.s4 1934713408
    %v834 = vunpack.c.0.s8 %v833
    %v835 = vlaneseq
    %v836 = vshrl.u32 %v835, 7
    %v837 = vsub.s32 %v834, %v836
    %v838 = vrot.slane %v830, %v837
    %v840 = vunpack.c.l.s4 1934713408
    %v841 = vunpack.c.0.s8 %v840
    %v842 = vlaneseq
    %v843 = vshrl.u32 %v842, 7
    %v844 = vsub.s32 %v841, %v843
    %v845 = vrot.slane %v831, %v844
    %v846 = vcombine.low %v821, %v829
    %v847 = vcombine.high %v821, %v829
    %v849 = vunpack.c.l.s4 1934713408
    %v850 = vunpack.c.0.s8 %v849
    %v851 = vlaneseq
    %v852 = vshrl.u32 %v851, 7
    %v853 = vsub.s32 %v850, %v852
    %v854 = vrot.slane %v846, %v853
    %v856 = vunpack.c.l.s4 1934713408
    %v857 = vunpack.c.0.s8 %v856
    %v858 = vlaneseq
    %v859 = vshrl.u32 %v858, 7
    %v860 = vsub.s32 %v857, %v859
    %v861 = vrot.slane %v847, %v860
    %v862 = vcombine.low %v838, %v854
    %v863 = vcombine.high %v838, %v854
    %v864 = vcombine.low %v845, %v861
    %v865 = vcombine.high %v845, %v861
    %v866 = vcombine.low %v770, %v777
    %v868 = vunpack.c.l.s4 1983009808
    %v869 = vunpack.c.0.s8 %v868
    %v870 = vlaneseq
    %v871 = vshrl.u32 %v870, 7
    %v872 = vsub.s32 %v869, %v871
    %v873 = vrot.slane %v866, %v872
    %v874 = vcombine.low %v794, %v795
    %v876 = vunpack.c.l.s4 1983009808
    %v877 = vunpack.c.0.s8 %v876
    %v878 = vlaneseq
    %v879 = vshrl.u32 %v878, 7
    %v880 = vsub.s32 %v877, %v879
    %v881 = vrot.slane %v874, %v880
    %v882 = vcombine.low %v786, %v793
    %v884 = vunpack.c.l.s4 1983009808
    %v885 = vunpack.c.0.s8 %v884
    %v886 = vlaneseq
    %v887 = vshrl.u32 %v886, 7
    %v888 = vsub.s32 %v885, %v887
    %v889 = vrot.slane %v882, %v888
    %v890 = vcombine.low %v796, %v797
    %v892 = vunpack.c.l.s4 1983009808
    %v893 = vunpack.c.0.s8 %v892
    %v894 = vlaneseq
    %v895 = vshrl.u32 %v894, 7
    %v896 = vsub.s32 %v893, %v895
    %v897 = vrot.slane %v890, %v896
    %v898 = vcombine.low %v873, %v881
    %v899 = vcombine.high %v873, %v881
    %v901 = vunpack.c.l.s4 1934713408
    %v902 = vunpack.c.0.s8 %v901
    %v903 = vlaneseq
    %v904 = vshrl.u32 %v903, 7
    %v905 = vsub.s32 %v902, %v904
    %v906 = vrot.slane %v898, %v905
    %v908 = vunpack.c.l.s4 1934713408
    %v909 = vunpack.c.0.s8 %v908
    %v910 = vlaneseq
    %v911 = vshrl.u32 %v910, 7
    %v912 = vsub.s32 %v909, %v911
    %v913 = vrot.slane %v899, %v912
    %v914 = vcombine.low %v889, %v897
    %v915 = vcombine.high %v889, %v897
    %v917 = vunpack.c.l.s4 1934713408
    %v918 = vunpack.c.0.s8 %v917
    %v919 = vlaneseq
    %v920 = vshrl.u32 %v919, 7
    %v921 = vsub.s32 %v918, %v920
    %v922 = vrot.slane %v914, %v921
    %v924 = vunpack.c.l.s4 1934713408
    %v925 = vunpack.c.0.s8 %v924
    %v926 = vlaneseq
    %v927 = vshrl.u32 %v926, 7
    %v928 = vsub.s32 %v925, %v927
    %v929 = vrot.slane %v915, %v928
    %v930 = vcombine.low %v906, %v922
    %v931 = vcombine.high %v906, %v922
    %v932 = vcombine.low %v913, %v929
    %v933 = vcombine.high %v913, %v929
    %936 = vrot.lane.b32.xlu0 %v278, 120
    %v937 = vpop.permute.xlu0 %936
    %938 = vrot.lane.b32.xlu0 %v279, 120
    %v939 = vpop.permute.xlu0 %938
    %940 = vrot.lane.b32.xlu0 %v278, 112
    %v941 = vpop.permute.xlu0 %940
    %942 = vrot.lane.b32.xlu0 %v279, 112
    %v943 = vpop.permute.xlu0 %942
    %944 = vrot.lane.b32.xlu0 %v278, 104
    %v945 = vpop.permute.xlu0 %944
    %946 = vrot.lane.b32.xlu0 %v279, 104
    %v947 = vpop.permute.xlu0 %946
    %948 = vrot.lane.b32.xlu0 %v278, 96
    %v949 = vpop.permute.xlu0 %948
    %950 = vrot.lane.b32.xlu0 %v279, 96
    %v951 = vpop.permute.xlu0 %950
    %952 = vrot.lane.b32.xlu0 %v937, 96
    %v953 = vpop.permute.xlu0 %952
    %954 = vrot.lane.b32.xlu0 %v939, 96
    %v955 = vpop.permute.xlu0 %954
    %956 = vrot.lane.b32.xlu0 %v941, 96
    %v957 = vpop.permute.xlu0 %956
    %958 = vrot.lane.b32.xlu0 %v943, 96
    %v959 = vpop.permute.xlu0 %958
    %960 = vrot.lane.b32.xlu0 %v945, 96
    %v961 = vpop.permute.xlu0 %960
    %962 = vrot.lane.b32.xlu0 %v947, 96
    %v963 = vpop.permute.xlu0 %962
    %v972 = vcombine.low %v949, %v957
    %v973 = vcombine.high %v949, %v957
    %v975 = vunpack.c.l.s4 1983009808
    %v976 = vunpack.c.0.s8 %v975
    %v977 = vlaneseq
    %v978 = vshrl.u32 %v977, 7
    %v979 = vsub.s32 %v976, %v978
    %v980 = vrot.slane %v972, %v979
    %v982 = vunpack.c.l.s4 1983009808
    %v983 = vunpack.c.0.s8 %v982
    %v984 = vlaneseq
    %v985 = vshrl.u32 %v984, 7
    %v986 = vsub.s32 %v983, %v985
    %v987 = vrot.slane %v973, %v986
    %v988 = vcombine.low %v953, %v961
    %v989 = vcombine.high %v953, %v961
    %v991 = vunpack.c.l.s4 1983009808
    %v992 = vunpack.c.0.s8 %v991
    %v993 = vlaneseq
    %v994 = vshrl.u32 %v993, 7
    %v995 = vsub.s32 %v992, %v994
    %v996 = vrot.slane %v988, %v995
    %v998 = vunpack.c.l.s4 1983009808
    %v999 = vunpack.c.0.s8 %v998
    %v1000 = vlaneseq
    %v1001 = vshrl.u32 %v1000, 7
    %v1002 = vsub.s32 %v999, %v1001
    %v1003 = vrot.slane %v989, %v1002
    %v1004 = vcombine.low %v980, %v996
    %v1005 = vcombine.high %v980, %v996
    %v1007 = vunpack.c.l.s4 1934713408
    %v1008 = vunpack.c.0.s8 %v1007
    %v1009 = vlaneseq
    %v1010 = vshrl.u32 %v1009, 7
    %v1011 = vsub.s32 %v1008, %v1010
    %v1012 = vrot.slane %v1004, %v1011
    %v1014 = vunpack.c.l.s4 1934713408
    %v1015 = vunpack.c.0.s8 %v1014
    %v1016 = vlaneseq
    %v1017 = vshrl.u32 %v1016, 7
    %v1018 = vsub.s32 %v1015, %v1017
    %v1019 = vrot.slane %v1005, %v1018
    %v1020 = vcombine.low %v987, %v1003
    %v1021 = vcombine.high %v987, %v1003
    %v1023 = vunpack.c.l.s4 1934713408
    %v1024 = vunpack.c.0.s8 %v1023
    %v1025 = vlaneseq
    %v1026 = vshrl.u32 %v1025, 7
    %v1027 = vsub.s32 %v1024, %v1026
    %v1028 = vrot.slane %v1020, %v1027
    %v1030 = vunpack.c.l.s4 1934713408
    %v1031 = vunpack.c.0.s8 %v1030
    %v1032 = vlaneseq
    %v1033 = vshrl.u32 %v1032, 7
    %v1034 = vsub.s32 %v1031, %v1033
    %v1035 = vrot.slane %v1021, %v1034
    %v1036 = vcombine.high %v1012, 0.0
    %v1037 = vcombine.high %v1019, 0.0
    %v1038 = vcombine.high %v1028, 0.0
    %v1039 = vcombine.high %v1035, 0.0
    %v1040 = vcombine.low %v951, %v959
    %v1041 = vcombine.high %v951, %v959
    %v1043 = vunpack.c.l.s4 1983009808
    %v1044 = vunpack.c.0.s8 %v1043
    %v1045 = vlaneseq
    %v1046 = vshrl.u32 %v1045, 7
    %v1047 = vsub.s32 %v1044, %v1046
    %v1048 = vrot.slane %v1040, %v1047
    %v1050 = vunpack.c.l.s4 1983009808
    %v1051 = vunpack.c.0.s8 %v1050
    %v1052 = vlaneseq
    %v1053 = vshrl.u32 %v1052, 7
    %v1054 = vsub.s32 %v1051, %v1053
    %v1055 = vrot.slane %v1041, %v1054
    %v1056 = vcombine.low %v955, %v963
    %v1057 = vcombine.high %v955, %v963
    %v1059 = vunpack.c.l.s4 1983009808
    %v1060 = vunpack.c.0.s8 %v1059
    %v1061 = vlaneseq
    %v1062 = vshrl.u32 %v1061, 7
    %v1063 = vsub.s32 %v1060, %v1062
    %v1064 = vrot.slane %v1056, %v1063
    %v1066 = vunpack.c.l.s4 1983009808
    %v1067 = vunpack.c.0.s8 %v1066
    %v1068 = vlaneseq
    %v1069 = vshrl.u32 %v1068, 7
    %v1070 = vsub.s32 %v1067, %v1069
    %v1071 = vrot.slane %v1057, %v1070
    %v1072 = vcombine.low %v1048, %v1064
    %v1073 = vcombine.high %v1048, %v1064
    %v1075 = vunpack.c.l.s4 1934713408
    %v1076 = vunpack.c.0.s8 %v1075
    %v1077 = vlaneseq
    %v1078 = vshrl.u32 %v1077, 7
    %v1079 = vsub.s32 %v1076, %v1078
    %v1080 = vrot.slane %v1072, %v1079
    %v1082 = vunpack.c.l.s4 1934713408
    %v1083 = vunpack.c.0.s8 %v1082
    %v1084 = vlaneseq
    %v1085 = vshrl.u32 %v1084, 7
    %v1086 = vsub.s32 %v1083, %v1085
    %v1087 = vrot.slane %v1073, %v1086
    %v1088 = vcombine.low %v1055, %v1071
    %v1089 = vcombine.high %v1055, %v1071
    %v1091 = vunpack.c.l.s4 1934713408
    %v1092 = vunpack.c.0.s8 %v1091
    %v1093 = vlaneseq
    %v1094 = vshrl.u32 %v1093, 7
    %v1095 = vsub.s32 %v1092, %v1094
    %v1096 = vrot.slane %v1088, %v1095
    %v1098 = vunpack.c.l.s4 1934713408
    %v1099 = vunpack.c.0.s8 %v1098
    %v1100 = vlaneseq
    %v1101 = vshrl.u32 %v1100, 7
    %v1102 = vsub.s32 %v1099, %v1101
    %v1103 = vrot.slane %v1089, %v1102
    %v1104 = vcombine.high %v1080, 0.0
    %v1105 = vcombine.high %v1087, 0.0
    %v1106 = vcombine.high %v1096, 0.0
    %v1107 = vcombine.high %v1103, 0.0
    %v1108 = vcombine.low %v1012, %v1019
    %v1110 = vunpack.c.l.s4 1983009808
    %v1111 = vunpack.c.0.s8 %v1110
    %v1112 = vlaneseq
    %v1113 = vshrl.u32 %v1112, 7
    %v1114 = vsub.s32 %v1111, %v1113
    %v1115 = vrot.slane %v1108, %v1114
    %v1116 = vcombine.low %v1036, %v1037
    %v1118 = vunpack.c.l.s4 1983009808
    %v1119 = vunpack.c.0.s8 %v1118
    %v1120 = vlaneseq
    %v1121 = vshrl.u32 %v1120, 7
    %v1122 = vsub.s32 %v1119, %v1121
    %v1123 = vrot.slane %v1116, %v1122
    %v1124 = vcombine.low %v1028, %v1035
    %v1126 = vunpack.c.l.s4 1983009808
    %v1127 = vunpack.c.0.s8 %v1126
    %v1128 = vlaneseq
    %v1129 = vshrl.u32 %v1128, 7
    %v1130 = vsub.s32 %v1127, %v1129
    %v1131 = vrot.slane %v1124, %v1130
    %v1132 = vcombine.low %v1038, %v1039
    %v1134 = vunpack.c.l.s4 1983009808
    %v1135 = vunpack.c.0.s8 %v1134
    %v1136 = vlaneseq
    %v1137 = vshrl.u32 %v1136, 7
    %v1138 = vsub.s32 %v1135, %v1137
    %v1139 = vrot.slane %v1132, %v1138
    %v1140 = vcombine.low %v1115, %v1123
    %v1141 = vcombine.high %v1115, %v1123
    %v1143 = vunpack.c.l.s4 1934713408
    %v1144 = vunpack.c.0.s8 %v1143
    %v1145 = vlaneseq
    %v1146 = vshrl.u32 %v1145, 7
    %v1147 = vsub.s32 %v1144, %v1146
    %v1148 = vrot.slane %v1140, %v1147
    %v1150 = vunpack.c.l.s4 1934713408
    %v1151 = vunpack.c.0.s8 %v1150
    %v1152 = vlaneseq
    %v1153 = vshrl.u32 %v1152, 7
    %v1154 = vsub.s32 %v1151, %v1153
    %v1155 = vrot.slane %v1141, %v1154
    %v1156 = vcombine.low %v1131, %v1139
    %v1157 = vcombine.high %v1131, %v1139
    %v1159 = vunpack.c.l.s4 1934713408
    %v1160 = vunpack.c.0.s8 %v1159
    %v1161 = vlaneseq
    %v1162 = vshrl.u32 %v1161, 7
    %v1163 = vsub.s32 %v1160, %v1162
    %v1164 = vrot.slane %v1156, %v1163
    %v1166 = vunpack.c.l.s4 1934713408
    %v1167 = vunpack.c.0.s8 %v1166
    %v1168 = vlaneseq
    %v1169 = vshrl.u32 %v1168, 7
    %v1170 = vsub.s32 %v1167, %v1169
    %v1171 = vrot.slane %v1157, %v1170
    %v1172 = vcombine.low %v1148, %v1164
    %v1173 = vcombine.high %v1148, %v1164
    %v1174 = vcombine.low %v1155, %v1171
    %v1175 = vcombine.high %v1155, %v1171
    %v1176 = vcombine.low %v1080, %v1087
    %v1178 = vunpack.c.l.s4 1983009808
    %v1179 = vunpack.c.0.s8 %v1178
    %v1180 = vlaneseq
    %v1181 = vshrl.u32 %v1180, 7
    %v1182 = vsub.s32 %v1179, %v1181
    %v1183 = vrot.slane %v1176, %v1182
    %v1184 = vcombine.low %v1104, %v1105
    %v1186 = vunpack.c.l.s4 1983009808
    %v1187 = vunpack.c.0.s8 %v1186
    %v1188 = vlaneseq
    %v1189 = vshrl.u32 %v1188, 7
    %v1190 = vsub.s32 %v1187, %v1189
    %v1191 = vrot.slane %v1184, %v1190
    %v1192 = vcombine.low %v1096, %v1103
    %v1194 = vunpack.c.l.s4 1983009808
    %v1195 = vunpack.c.0.s8 %v1194
    %v1196 = vlaneseq
    %v1197 = vshrl.u32 %v1196, 7
    %v1198 = vsub.s32 %v1195, %v1197
    %v1199 = vrot.slane %v1192, %v1198
    %v1200 = vcombine.low %v1106, %v1107
    %v1202 = vunpack.c.l.s4 1983009808
    %v1203 = vunpack.c.0.s8 %v1202
    %v1204 = vlaneseq
    %v1205 = vshrl.u32 %v1204, 7
    %v1206 = vsub.s32 %v1203, %v1205
    %v1207 = vrot.slane %v1200, %v1206
    %v1208 = vcombine.low %v1183, %v1191
    %v1209 = vcombine.high %v1183, %v1191
    %v1211 = vunpack.c.l.s4 1934713408
    %v1212 = vunpack.c.0.s8 %v1211
    %v1213 = vlaneseq
    %v1214 = vshrl.u32 %v1213, 7
    %v1215 = vsub.s32 %v1212, %v1214
    %v1216 = vrot.slane %v1208, %v1215
    %v1218 = vunpack.c.l.s4 1934713408
    %v1219 = vunpack.c.0.s8 %v1218
    %v1220 = vlaneseq
    %v1221 = vshrl.u32 %v1220, 7
    %v1222 = vsub.s32 %v1219, %v1221
    %v1223 = vrot.slane %v1209, %v1222
    %v1224 = vcombine.low %v1199, %v1207
    %v1225 = vcombine.high %v1199, %v1207
    %v1227 = vunpack.c.l.s4 1934713408
    %v1228 = vunpack.c.0.s8 %v1227
    %v1229 = vlaneseq
    %v1230 = vshrl.u32 %v1229, 7
    %v1231 = vsub.s32 %v1228, %v1230
    %v1232 = vrot.slane %v1224, %v1231
    %v1234 = vunpack.c.l.s4 1934713408
    %v1235 = vunpack.c.0.s8 %v1234
    %v1236 = vlaneseq
    %v1237 = vshrl.u32 %v1236, 7
    %v1238 = vsub.s32 %v1235, %v1237
    %v1239 = vrot.slane %v1225, %v1238
    %v1240 = vcombine.low %v1216, %v1232
    %v1241 = vcombine.high %v1216, %v1232
    %v1242 = vcombine.low %v1223, %v1239
    %v1243 = vcombine.high %v1223, %v1239
    %1246 = vrot.lane.b32.xlu0 %v330, 120
    %v1247 = vpop.permute.xlu0 %1246
    %1248 = vrot.lane.b32.xlu0 %v331, 120
    %v1249 = vpop.permute.xlu0 %1248
    %1250 = vrot.lane.b32.xlu0 %v330, 112
    %v1251 = vpop.permute.xlu0 %1250
    %1252 = vrot.lane.b32.xlu0 %v331, 112
    %v1253 = vpop.permute.xlu0 %1252
    %1254 = vrot.lane.b32.xlu0 %v330, 104
    %v1255 = vpop.permute.xlu0 %1254
    %1256 = vrot.lane.b32.xlu0 %v331, 104
    %v1257 = vpop.permute.xlu0 %1256
    %1258 = vrot.lane.b32.xlu0 %v330, 32
    %v1259 = vpop.permute.xlu0 %1258
    %1260 = vrot.lane.b32.xlu0 %v331, 32
    %v1261 = vpop.permute.xlu0 %1260
    %1262 = vrot.lane.b32.xlu0 %v1247, 32
    %v1263 = vpop.permute.xlu0 %1262
    %1264 = vrot.lane.b32.xlu0 %v1249, 32
    %v1265 = vpop.permute.xlu0 %1264
    %1266 = vrot.lane.b32.xlu0 %v1251, 32
    %v1267 = vpop.permute.xlu0 %1266
    %1268 = vrot.lane.b32.xlu0 %v1253, 32
    %v1269 = vpop.permute.xlu0 %1268
    %1270 = vrot.lane.b32.xlu0 %v1255, 32
    %v1271 = vpop.permute.xlu0 %1270
    %1272 = vrot.lane.b32.xlu0 %v1257, 32
    %v1273 = vpop.permute.xlu0 %1272
    %v1282 = vcombine.low %v1259, %v1267
    %v1283 = vcombine.high %v1259, %v1267
    %v1285 = vunpack.c.l.s4 1983009808
    %v1286 = vunpack.c.0.s8 %v1285
    %v1287 = vlaneseq
    %v1288 = vshrl.u32 %v1287, 7
    %v1289 = vsub.s32 %v1286, %v1288
    %v1290 = vrot.slane %v1282, %v1289
    %v1292 = vunpack.c.l.s4 1983009808
    %v1293 = vunpack.c.0.s8 %v1292
    %v1294 = vlaneseq
    %v1295 = vshrl.u32 %v1294, 7
    %v1296 = vsub.s32 %v1293, %v1295
    %v1297 = vrot.slane %v1283, %v1296
    %v1298 = vcombine.low %v1263, %v1271
    %v1299 = vcombine.high %v1263, %v1271
    %v1301 = vunpack.c.l.s4 1983009808
    %v1302 = vunpack.c.0.s8 %v1301
    %v1303 = vlaneseq
    %v1304 = vshrl.u32 %v1303, 7
    %v1305 = vsub.s32 %v1302, %v1304
    %v1306 = vrot.slane %v1298, %v1305
    %v1308 = vunpack.c.l.s4 1983009808
    %v1309 = vunpack.c.0.s8 %v1308
    %v1310 = vlaneseq
    %v1311 = vshrl.u32 %v1310, 7
    %v1312 = vsub.s32 %v1309, %v1311
    %v1313 = vrot.slane %v1299, %v1312
    %v1314 = vcombine.low %v1290, %v1306
    %v1315 = vcombine.high %v1290, %v1306
    %v1317 = vunpack.c.l.s4 1934713408
    %v1318 = vunpack.c.0.s8 %v1317
    %v1319 = vlaneseq
    %v1320 = vshrl.u32 %v1319, 7
    %v1321 = vsub.s32 %v1318, %v1320
    %v1322 = vrot.slane %v1314, %v1321
    %v1324 = vunpack.c.l.s4 1934713408
    %v1325 = vunpack.c.0.s8 %v1324
    %v1326 = vlaneseq
    %v1327 = vshrl.u32 %v1326, 7
    %v1328 = vsub.s32 %v1325, %v1327
    %v1329 = vrot.slane %v1315, %v1328
    %v1330 = vcombine.low %v1297, %v1313
    %v1331 = vcombine.high %v1297, %v1313
    %v1333 = vunpack.c.l.s4 1934713408
    %v1334 = vunpack.c.0.s8 %v1333
    %v1335 = vlaneseq
    %v1336 = vshrl.u32 %v1335, 7
    %v1337 = vsub.s32 %v1334, %v1336
    %v1338 = vrot.slane %v1330, %v1337
    %v1340 = vunpack.c.l.s4 1934713408
    %v1341 = vunpack.c.0.s8 %v1340
    %v1342 = vlaneseq
    %v1343 = vshrl.u32 %v1342, 7
    %v1344 = vsub.s32 %v1341, %v1343
    %v1345 = vrot.slane %v1331, %v1344
    %v1346 = vcombine.high %v1322, 0.0
    %v1347 = vcombine.high %v1329, 0.0
    %v1348 = vcombine.high %v1338, 0.0
    %v1349 = vcombine.high %v1345, 0.0
    %v1350 = vcombine.low %v1261, %v1269
    %v1351 = vcombine.high %v1261, %v1269
    %v1353 = vunpack.c.l.s4 1983009808
    %v1354 = vunpack.c.0.s8 %v1353
    %v1355 = vlaneseq
    %v1356 = vshrl.u32 %v1355, 7
    %v1357 = vsub.s32 %v1354, %v1356
    %v1358 = vrot.slane %v1350, %v1357
    %v1360 = vunpack.c.l.s4 1983009808
    %v1361 = vunpack.c.0.s8 %v1360
    %v1362 = vlaneseq
    %v1363 = vshrl.u32 %v1362, 7
    %v1364 = vsub.s32 %v1361, %v1363
    %v1365 = vrot.slane %v1351, %v1364
    %v1366 = vcombine.low %v1265, %v1273
    %v1367 = vcombine.high %v1265, %v1273
    %v1369 = vunpack.c.l.s4 1983009808
    %v1370 = vunpack.c.0.s8 %v1369
    %v1371 = vlaneseq
    %v1372 = vshrl.u32 %v1371, 7
    %v1373 = vsub.s32 %v1370, %v1372
    %v1374 = vrot.slane %v1366, %v1373
    %v1376 = vunpack.c.l.s4 1983009808
    %v1377 = vunpack.c.0.s8 %v1376
    %v1378 = vlaneseq
    %v1379 = vshrl.u32 %v1378, 7
    %v1380 = vsub.s32 %v1377, %v1379
    %v1381 = vrot.slane %v1367, %v1380
    %v1382 = vcombine.low %v1358, %v1374
    %v1383 = vcombine.high %v1358, %v1374
    %v1385 = vunpack.c.l.s4 1934713408
    %v1386 = vunpack.c.0.s8 %v1385
    %v1387 = vlaneseq
    %v1388 = vshrl.u32 %v1387, 7
    %v1389 = vsub.s32 %v1386, %v1388
    %v1390 = vrot.slane %v1382, %v1389
    %v1392 = vunpack.c.l.s4 1934713408
    %v1393 = vunpack.c.0.s8 %v1392
    %v1394 = vlaneseq
    %v1395 = vshrl.u32 %v1394, 7
    %v1396 = vsub.s32 %v1393, %v1395
    %v1397 = vrot.slane %v1383, %v1396
    %v1398 = vcombine.low %v1365, %v1381
    %v1399 = vcombine.high %v1365, %v1381
    %v1401 = vunpack.c.l.s4 1934713408
    %v1402 = vunpack.c.0.s8 %v1401
    %v1403 = vlaneseq
    %v1404 = vshrl.u32 %v1403, 7
    %v1405 = vsub.s32 %v1402, %v1404
    %v1406 = vrot.slane %v1398, %v1405
    %v1408 = vunpack.c.l.s4 1934713408
    %v1409 = vunpack.c.0.s8 %v1408
    %v1410 = vlaneseq
    %v1411 = vshrl.u32 %v1410, 7
    %v1412 = vsub.s32 %v1409, %v1411
    %v1413 = vrot.slane %v1399, %v1412
    %v1414 = vcombine.high %v1390, 0.0
    %v1415 = vcombine.high %v1397, 0.0
    %v1416 = vcombine.high %v1406, 0.0
    %v1417 = vcombine.high %v1413, 0.0
    %v1418 = vcombine.low %v1322, %v1329
    %v1420 = vunpack.c.l.s4 1983009808
    %v1421 = vunpack.c.0.s8 %v1420
    %v1422 = vlaneseq
    %v1423 = vshrl.u32 %v1422, 7
    %v1424 = vsub.s32 %v1421, %v1423
    %v1425 = vrot.slane %v1418, %v1424
    %v1426 = vcombine.low %v1346, %v1347
    %v1428 = vunpack.c.l.s4 1983009808
    %v1429 = vunpack.c.0.s8 %v1428
    %v1430 = vlaneseq
    %v1431 = vshrl.u32 %v1430, 7
    %v1432 = vsub.s32 %v1429, %v1431
    %v1433 = vrot.slane %v1426, %v1432
    %v1434 = vcombine.low %v1338, %v1345
    %v1436 = vunpack.c.l.s4 1983009808
    %v1437 = vunpack.c.0.s8 %v1436
    %v1438 = vlaneseq
    %v1439 = vshrl.u32 %v1438, 7
    %v1440 = vsub.s32 %v1437, %v1439
    %v1441 = vrot.slane %v1434, %v1440
    %v1442 = vcombine.low %v1348, %v1349
    %v1444 = vunpack.c.l.s4 1983009808
    %v1445 = vunpack.c.0.s8 %v1444
    %v1446 = vlaneseq
    %v1447 = vshrl.u32 %v1446, 7
    %v1448 = vsub.s32 %v1445, %v1447
    %v1449 = vrot.slane %v1442, %v1448
    %v1450 = vcombine.low %v1425, %v1433
    %v1451 = vcombine.high %v1425, %v1433
    %v1453 = vunpack.c.l.s4 1934713408
    %v1454 = vunpack.c.0.s8 %v1453
    %v1455 = vlaneseq
    %v1456 = vshrl.u32 %v1455, 7
    %v1457 = vsub.s32 %v1454, %v1456
    %v1458 = vrot.slane %v1450, %v1457
    %v1460 = vunpack.c.l.s4 1934713408
    %v1461 = vunpack.c.0.s8 %v1460
    %v1462 = vlaneseq
    %v1463 = vshrl.u32 %v1462, 7
    %v1464 = vsub.s32 %v1461, %v1463
    %v1465 = vrot.slane %v1451, %v1464
    %v1466 = vcombine.low %v1441, %v1449
    %v1467 = vcombine.high %v1441, %v1449
    %v1469 = vunpack.c.l.s4 1934713408
    %v1470 = vunpack.c.0.s8 %v1469
    %v1471 = vlaneseq
    %v1472 = vshrl.u32 %v1471, 7
    %v1473 = vsub.s32 %v1470, %v1472
    %v1474 = vrot.slane %v1466, %v1473
    %v1476 = vunpack.c.l.s4 1934713408
    %v1477 = vunpack.c.0.s8 %v1476
    %v1478 = vlaneseq
    %v1479 = vshrl.u32 %v1478, 7
    %v1480 = vsub.s32 %v1477, %v1479
    %v1481 = vrot.slane %v1467, %v1480
    %v1482 = vcombine.low %v1458, %v1474
    %v1483 = vcombine.high %v1458, %v1474
    %v1484 = vcombine.low %v1465, %v1481
    %v1485 = vcombine.high %v1465, %v1481
    %v1486 = vcombine.low %v1390, %v1397
    %v1488 = vunpack.c.l.s4 1983009808
    %v1489 = vunpack.c.0.s8 %v1488
    %v1490 = vlaneseq
    %v1491 = vshrl.u32 %v1490, 7
    %v1492 = vsub.s32 %v1489, %v1491
    %v1493 = vrot.slane %v1486, %v1492
    %v1494 = vcombine.low %v1414, %v1415
    %v1496 = vunpack.c.l.s4 1983009808
    %v1497 = vunpack.c.0.s8 %v1496
    %v1498 = vlaneseq
    %v1499 = vshrl.u32 %v1498, 7
    %v1500 = vsub.s32 %v1497, %v1499
    %v1501 = vrot.slane %v1494, %v1500
    %v1502 = vcombine.low %v1406, %v1413
    %v1504 = vunpack.c.l.s4 1983009808
    %v1505 = vunpack.c.0.s8 %v1504
    %v1506 = vlaneseq
    %v1507 = vshrl.u32 %v1506, 7
    %v1508 = vsub.s32 %v1505, %v1507
    %v1509 = vrot.slane %v1502, %v1508
    %v1510 = vcombine.low %v1416, %v1417
    %v1512 = vunpack.c.l.s4 1983009808
    %v1513 = vunpack.c.0.s8 %v1512
    %v1514 = vlaneseq
    %v1515 = vshrl.u32 %v1514, 7
    %v1516 = vsub.s32 %v1513, %v1515
    %v1517 = vrot.slane %v1510, %v1516
    %v1518 = vcombine.low %v1493, %v1501
    %v1519 = vcombine.high %v1493, %v1501
    %v1521 = vunpack.c.l.s4 1934713408
    %v1522 = vunpack.c.0.s8 %v1521
    %v1523 = vlaneseq
    %v1524 = vshrl.u32 %v1523, 7
    %v1525 = vsub.s32 %v1522, %v1524
    %v1526 = vrot.slane %v1518, %v1525
    %v1528 = vunpack.c.l.s4 1934713408
    %v1529 = vunpack.c.0.s8 %v1528
    %v1530 = vlaneseq
    %v1531 = vshrl.u32 %v1530, 7
    %v1532 = vsub.s32 %v1529, %v1531
    %v1533 = vrot.slane %v1519, %v1532
    %v1534 = vcombine.low %v1509, %v1517
    %v1535 = vcombine.high %v1509, %v1517
    %v1537 = vunpack.c.l.s4 1934713408
    %v1538 = vunpack.c.0.s8 %v1537
    %v1539 = vlaneseq
    %v1540 = vshrl.u32 %v1539, 7
    %v1541 = vsub.s32 %v1538, %v1540
    %v1542 = vrot.slane %v1534, %v1541
    %v1544 = vunpack.c.l.s4 1934713408
    %v1545 = vunpack.c.0.s8 %v1544
    %v1546 = vlaneseq
    %v1547 = vshrl.u32 %v1546, 7
    %v1548 = vsub.s32 %v1545, %v1547
    %v1549 = vrot.slane %v1535, %v1548
    %v1550 = vcombine.low %v1526, %v1542
    %v1551 = vcombine.high %v1526, %v1542
    %v1552 = vcombine.low %v1533, %v1549
    %v1553 = vcombine.high %v1533, %v1549
    %vm1554 = vcmask 64512
    %v1556 = vsel %vm1554, %v1172, 0
    %v1559 = vsel %vm1554, %v1240, 0
    %v1562 = vsel %vm1554, %v1482, 0
    %v1565 = vsel %vm1554, %v1550, 0
    %1567 = vmatprep.subr.mxu0 0.0
    %1568 = vmatpush1.xpose.msra.mxu0 0.0
    %1569 = vmatprep.subr.mxu0 0.0
    %1570 = vmatpush1.xpose.msra.mxu0 0.0
    %1571 = vmatprep.subr.mxu0 0.0
    %1572 = vmatpush1.xpose.msra.mxu0 0.0
    %1573 = vmatprep.subr.mxu0 0.0
    %1574 = vmatpush1.xpose.msra.mxu0 0.0
    %1575 = vmatprep.subr.mxu0 0.0
    %1576 = vmatpush1.xpose.msra.mxu0 0.0
    %1577 = vmatprep.subr.mxu0 0.0
    %1578 = vmatpush1.xpose.msra.mxu0 0.0
    %1579 = vmatprep.subr.mxu0 0.0
    %1580 = vmatpush1.xpose.msra.mxu0 0.0
    %1581 = vmatprep.subr.mxu0 0.0
    %1582 = vmatpush1.xpose.msra.mxu0 0.0
    %1583 = vmatprep.subr.mxu0 0.0
    %1584 = vmatpush1.xpose.msra.mxu0 0.0
    %1585 = vmatprep.subr.mxu0 0.0
    %1586 = vmatpush1.xpose.msra.mxu0 0.0
    %1587 = vmatprep.subr.mxu0 0.0
    %1588 = vmatpush1.xpose.msra.mxu0 0.0
    %1589 = vmatprep.subr.mxu0 0.0
    %1590 = vmatpush1.xpose.msra.mxu0 0.0
    %1591 = vmatprep.subr.mxu0 0.0
    %1592 = vmatpush1.xpose.msra.mxu0 0.0
    %1593 = vmatprep.subr.mxu0 0.0
    %1594 = vmatpush1.xpose.msra.mxu0 0.0
    %1595 = vmatprep.subr.mxu0 0.0
    %1596 = vmatpush1.xpose.msra.mxu0 %v1565
    %1597 = vmatprep.subr.mxu0 0.0
    %1598 = vmatpush1.xpose.msra.mxu0 %v1562
    %1599 = vmatprep.subr.mxu0 0.0
    %1600 = vmatpush2.xpose.msra.mxu0 0.0
    %1601 = vmatprep.subr.mxu0 0.0
    %1602 = vmatpush2.xpose.msra.mxu0 0.0
    %1603 = vmatprep.subr.mxu0 0.0
    %1604 = vmatpush2.xpose.msra.mxu0 0.0
    %1605 = vmatprep.subr.mxu0 0.0
    %1606 = vmatpush2.xpose.msra.mxu0 0.0
    %1607 = vmatprep.subr.mxu0 0.0
    %1608 = vmatpush2.xpose.msra.mxu0 0.0
    %1609 = vmatprep.subr.mxu0 0.0
    %1610 = vmatpush2.xpose.msra.mxu0 0.0
    %1611 = vmatprep.subr.mxu0 0.0
    %1612 = vmatpush2.xpose.msra.mxu0 0.0
    %1613 = vmatprep.subr.mxu0 0.0
    %1614 = vmatpush2.xpose.msra.mxu0 0.0
    %1615 = vmatprep.subr.mxu0 0.0
    %1616 = vmatpush2.xpose.msra.mxu0 0.0
    %1617 = vmatprep.subr.mxu0 0.0
    %1618 = vmatpush2.xpose.msra.mxu0 0.0
    %1619 = vmatprep.subr.mxu0 0.0
    %1620 = vmatpush2.xpose.msra.mxu0 0.0
    %1621 = vmatprep.subr.mxu0 0.0
    %1622 = vmatpush2.xpose.msra.mxu0 0.0
    %1623 = vmatprep.subr.mxu0 0.0
    %1624 = vmatpush2.xpose.msra.mxu0 0.0
    %1625 = vmatprep.subr.mxu0 0.0
    %1626 = vmatpush2.xpose.msra.mxu0 0.0
    %1627 = vmatprep.subr.mxu0 0.0
    %1628 = vmatpush2.xpose.msra.mxu0 0.0
    %1629 = vmatprep.subr.mxu0 0.0
    %1630 = vmatpush2.xpose.msra.mxu0 0.0
    %1631 = vmatprep.mubr.f32.mxu0 0.0
    %1632 = vmatmul.mubr.f32.gmra.mxu0 %v1556
    %v1633 = vpop.f32.mrf.mxu0
    %v1634 = vadd.f32 0.0, %v1633
    %v1635 = vpop.f32.mrf.mxu0
    %1636 = vmatprep.mubr.f32.mxu0 0.0
    %1637 = vmatmul.mubr.f32.gmra.mxu0 %v1559
    %v1638 = vpop.f32.mrf.mxu0
    %v1639 = vadd.f32 0.0, %v1638
    %v1640 = vpop.f32.mrf.mxu0
    %1641 = vdwg.mxu0
    %v1643 = vsel %vm1554, %v1173, 0
    %v1646 = vsel %vm1554, %v1241, 0
    %v1649 = vsel %vm1554, %v1483, 0
    %v1652 = vsel %vm1554, %v1551, 0
    %1654 = vmatprep.subr.mxu0 0.0
    %1655 = vmatpush1.xpose.msra.mxu0 0.0
    %1656 = vmatprep.subr.mxu0 0.0
    %1657 = vmatpush1.xpose.msra.mxu0 0.0
    %1658 = vmatprep.subr.mxu0 0.0
    %1659 = vmatpush1.xpose.msra.mxu0 0.0
    %1660 = vmatprep.subr.mxu0 0.0
    %1661 = vmatpush1.xpose.msra.mxu0 0.0
    %1662 = vmatprep.subr.mxu0 0.0
    %1663 = vmatpush1.xpose.msra.mxu0 0.0
    %1664 = vmatprep.subr.mxu0 0.0
    %1665 = vmatpush1.xpose.msra.mxu0 0.0
    %1666 = vmatprep.subr.mxu0 0.0
    %1667 = vmatpush1.xpose.msra.mxu0 0.0
    %1668 = vmatprep.subr.mxu0 0.0
    %1669 = vmatpush1.xpose.msra.mxu0 0.0
    %1670 = vmatprep.subr.mxu0 0.0
    %1671 = vmatpush1.xpose.msra.mxu0 0.0
    %1672 = vmatprep.subr.mxu0 0.0
    %1673 = vmatpush1.xpose.msra.mxu0 0.0
    %1674 = vmatprep.subr.mxu0 0.0
    %1675 = vmatpush1.xpose.msra.mxu0 0.0
    %1676 = vmatprep.subr.mxu0 0.0
    %1677 = vmatpush1.xpose.msra.mxu0 0.0
    %1678 = vmatprep.subr.mxu0 0.0
    %1679 = vmatpush1.xpose.msra.mxu0 0.0
    %1680 = vmatprep.subr.mxu0 0.0
    %1681 = vmatpush1.xpose.msra.mxu0 0.0
    %1682 = vmatprep.subr.mxu0 0.0
    %1683 = vmatpush1.xpose.msra.mxu0 %v1652
    %1684 = vmatprep.subr.mxu0 0.0
    %1685 = vmatpush1.xpose.msra.mxu0 %v1649
    %1686 = vmatprep.subr.mxu0 0.0
    %1687 = vmatpush2.xpose.msra.mxu0 0.0
    %1688 = vmatprep.subr.mxu0 0.0
    %1689 = vmatpush2.xpose.msra.mxu0 0.0
    %1690 = vmatprep.subr.mxu0 0.0
    %1691 = vmatpush2.xpose.msra.mxu0 0.0
    %1692 = vmatprep.subr.mxu0 0.0
    %1693 = vmatpush2.xpose.msra.mxu0 0.0
    %1694 = vmatprep.subr.mxu0 0.0
    %1695 = vmatpush2.xpose.msra.mxu0 0.0
    %1696 = vmatprep.subr.mxu0 0.0
    %1697 = vmatpush2.xpose.msra.mxu0 0.0
    %1698 = vmatprep.subr.mxu0 0.0
    %1699 = vmatpush2.xpose.msra.mxu0 0.0
    %1700 = vmatprep.subr.mxu0 0.0
    %1701 = vmatpush2.xpose.msra.mxu0 0.0
    %1702 = vmatprep.subr.mxu0 0.0
    %1703 = vmatpush2.xpose.msra.mxu0 0.0
    %1704 = vmatprep.subr.mxu0 0.0
    %1705 = vmatpush2.xpose.msra.mxu0 0.0
    %1706 = vmatprep.subr.mxu0 0.0
    %1707 = vmatpush2.xpose.msra.mxu0 0.0
    %1708 = vmatprep.subr.mxu0 0.0
    %1709 = vmatpush2.xpose.msra.mxu0 0.0
    %1710 = vmatprep.subr.mxu0 0.0
    %1711 = vmatpush2.xpose.msra.mxu0 0.0
    %1712 = vmatprep.subr.mxu0 0.0
    %1713 = vmatpush2.xpose.msra.mxu0 0.0
    %1714 = vmatprep.subr.mxu0 0.0
    %1715 = vmatpush2.xpose.msra.mxu0 0.0
    %1716 = vmatprep.subr.mxu0 0.0
    %1717 = vmatpush2.xpose.msra.mxu0 0.0
    %1718 = vmatprep.mubr.f32.mxu0 0.0
    %1719 = vmatmul.mubr.f32.gmra.mxu0 %v1643
    %v1720 = vpop.f32.mrf.mxu0
    %v1721 = vadd.f32 0.0, %v1720
    %v1722 = vpop.f32.mrf.mxu0
    %1723 = vmatprep.mubr.f32.mxu0 0.0
    %1724 = vmatmul.mubr.f32.gmra.mxu0 %v1646
    %v1725 = vpop.f32.mrf.mxu0
    %v1726 = vadd.f32 0.0, %v1725
    %v1727 = vpop.f32.mrf.mxu0
    %1728 = vdwg.mxu0
    %v1730 = vsel %vm1554, %v1174, 0
    %v1733 = vsel %vm1554, %v1242, 0
    %v1736 = vsel %vm1554, %v1484, 0
    %v1739 = vsel %vm1554, %v1552, 0
    %1741 = vmatprep.subr.mxu0 0.0
    %1742 = vmatpush1.xpose.msra.mxu0 0.0
    %1743 = vmatprep.subr.mxu0 0.0
    %1744 = vmatpush1.xpose.msra.mxu0 0.0
    %1745 = vmatprep.subr.mxu0 0.0
    %1746 = vmatpush1.xpose.msra.mxu0 0.0
    %1747 = vmatprep.subr.mxu0 0.0
    %1748 = vmatpush1.xpose.msra.mxu0 0.0
    %1749 = vmatprep.subr.mxu0 0.0
    %1750 = vmatpush1.xpose.msra.mxu0 0.0
    %1751 = vmatprep.subr.mxu0 0.0
    %1752 = vmatpush1.xpose.msra.mxu0 0.0
    %1753 = vmatprep.subr.mxu0 0.0
    %1754 = vmatpush1.xpose.msra.mxu0 0.0
    %1755 = vmatprep.subr.mxu0 0.0
    %1756 = vmatpush1.xpose.msra.mxu0 0.0
    %1757 = vmatprep.subr.mxu0 0.0
    %1758 = vmatpush1.xpose.msra.mxu0 0.0
    %1759 = vmatprep.subr.mxu0 0.0
    %1760 = vmatpush1.xpose.msra.mxu0 0.0
    %1761 = vmatprep.subr.mxu0 0.0
    %1762 = vmatpush1.xpose.msra.mxu0 0.0
    %1763 = vmatprep.subr.mxu0 0.0
    %1764 = vmatpush1.xpose.msra.mxu0 0.0
    %1765 = vmatprep.subr.mxu0 0.0
    %1766 = vmatpush1.xpose.msra.mxu0 0.0
    %1767 = vmatprep.subr.mxu0 0.0
    %1768 = vmatpush1.xpose.msra.mxu0 0.0
    %1769 = vmatprep.subr.mxu0 0.0
    %1770 = vmatpush1.xpose.msra.mxu0 %v1739
    %1771 = vmatprep.subr.mxu0 0.0
    %1772 = vmatpush1.xpose.msra.mxu0 %v1736
    %1773 = vmatprep.subr.mxu0 0.0
    %1774 = vmatpush2.xpose.msra.mxu0 0.0
    %1775 = vmatprep.subr.mxu0 0.0
    %1776 = vmatpush2.xpose.msra.mxu0 0.0
    %1777 = vmatprep.subr.mxu0 0.0
    %1778 = vmatpush2.xpose.msra.mxu0 0.0
    %1779 = vmatprep.subr.mxu0 0.0
    %1780 = vmatpush2.xpose.msra.mxu0 0.0
    %1781 = vmatprep.subr.mxu0 0.0
    %1782 = vmatpush2.xpose.msra.mxu0 0.0
    %1783 = vmatprep.subr.mxu0 0.0
    %1784 = vmatpush2.xpose.msra.mxu0 0.0
    %1785 = vmatprep.subr.mxu0 0.0
    %1786 = vmatpush2.xpose.msra.mxu0 0.0
    %1787 = vmatprep.subr.mxu0 0.0
    %1788 = vmatpush2.xpose.msra.mxu0 0.0
    %1789 = vmatprep.subr.mxu0 0.0
    %1790 = vmatpush2.xpose.msra.mxu0 0.0
    %1791 = vmatprep.subr.mxu0 0.0
    %1792 = vmatpush2.xpose.msra.mxu0 0.0
    %1793 = vmatprep.subr.mxu0 0.0
    %1794 = vmatpush2.xpose.msra.mxu0 0.0
    %1795 = vmatprep.subr.mxu0 0.0
    %1796 = vmatpush2.xpose.msra.mxu0 0.0
    %1797 = vmatprep.subr.mxu0 0.0
    %1798 = vmatpush2.xpose.msra.mxu0 0.0
    %1799 = vmatprep.subr.mxu0 0.0
    %1800 = vmatpush2.xpose.msra.mxu0 0.0
    %1801 = vmatprep.subr.mxu0 0.0
    %1802 = vmatpush2.xpose.msra.mxu0 0.0
    %1803 = vmatprep.subr.mxu0 0.0
    %1804 = vmatpush2.xpose.msra.mxu0 0.0
    %1805 = vmatprep.mubr.f32.mxu0 0.0
    %1806 = vmatmul.mubr.f32.gmra.mxu0 %v1730
    %v1807 = vpop.f32.mrf.mxu0
    %v1808 = vadd.f32 0.0, %v1807
    %v1809 = vpop.f32.mrf.mxu0
    %1810 = vmatprep.mubr.f32.mxu0 0.0
    %1811 = vmatmul.mubr.f32.gmra.mxu0 %v1733
    %v1812 = vpop.f32.mrf.mxu0
    %v1813 = vadd.f32 0.0, %v1812
    %v1814 = vpop.f32.mrf.mxu0
    %1815 = vdwg.mxu0
    %v1817 = vsel %vm1554, %v1175, 0
    %v1820 = vsel %vm1554, %v1243, 0
    %v1823 = vsel %vm1554, %v1485, 0
    %v1826 = vsel %vm1554, %v1553, 0
    %1828 = vmatprep.subr.mxu0 0.0
    %1829 = vmatpush1.xpose.msra.mxu0 0.0
    %1830 = vmatprep.subr.mxu0 0.0
    %1831 = vmatpush1.xpose.msra.mxu0 0.0
    %1832 = vmatprep.subr.mxu0 0.0
    %1833 = vmatpush1.xpose.msra.mxu0 0.0
    %1834 = vmatprep.subr.mxu0 0.0
    %1835 = vmatpush1.xpose.msra.mxu0 0.0
    %1836 = vmatprep.subr.mxu0 0.0
    %1837 = vmatpush1.xpose.msra.mxu0 0.0
    %1838 = vmatprep.subr.mxu0 0.0
    %1839 = vmatpush1.xpose.msra.mxu0 0.0
    %1840 = vmatprep.subr.mxu0 0.0
    %1841 = vmatpush1.xpose.msra.mxu0 0.0
    %1842 = vmatprep.subr.mxu0 0.0
    %1843 = vmatpush1.xpose.msra.mxu0 0.0
    %1844 = vmatprep.subr.mxu0 0.0
    %1845 = vmatpush1.xpose.msra.mxu0 0.0
    %1846 = vmatprep.subr.mxu0 0.0
    %1847 = vmatpush1.xpose.msra.mxu0 0.0
    %1848 = vmatprep.subr.mxu0 0.0
    %1849 = vmatpush1.xpose.msra.mxu0 0.0
    %1850 = vmatprep.subr.mxu0 0.0
    %1851 = vmatpush1.xpose.msra.mxu0 0.0
    %1852 = vmatprep.subr.mxu0 0.0
    %1853 = vmatpush1.xpose.msra.mxu0 0.0
    %1854 = vmatprep.subr.mxu0 0.0
    %1855 = vmatpush1.xpose.msra.mxu0 0.0
    %1856 = vmatprep.subr.mxu0 0.0
    %1857 = vmatpush1.xpose.msra.mxu0 %v1826
    %1858 = vmatprep.subr.mxu0 0.0
    %1859 = vmatpush1.xpose.msra.mxu0 %v1823
    %1860 = vmatprep.subr.mxu0 0.0
    %1861 = vmatpush2.xpose.msra.mxu0 0.0
    %1862 = vmatprep.subr.mxu0 0.0
    %1863 = vmatpush2.xpose.msra.mxu0 0.0
    %1864 = vmatprep.subr.mxu0 0.0
    %1865 = vmatpush2.xpose.msra.mxu0 0.0
    %1866 = vmatprep.subr.mxu0 0.0
    %1867 = vmatpush2.xpose.msra.mxu0 0.0
    %1868 = vmatprep.subr.mxu0 0.0
    %1869 = vmatpush2.xpose.msra.mxu0 0.0
    %1870 = vmatprep.subr.mxu0 0.0
    %1871 = vmatpush2.xpose.msra.mxu0 0.0
    %1872 = vmatprep.subr.mxu0 0.0
    %1873 = vmatpush2.xpose.msra.mxu0 0.0
    %1874 = vmatprep.subr.mxu0 0.0
    %1875 = vmatpush2.xpose.msra.mxu0 0.0
    %1876 = vmatprep.subr.mxu0 0.0
    %1877 = vmatpush2.xpose.msra.mxu0 0.0
    %1878 = vmatprep.subr.mxu0 0.0
    %1879 = vmatpush2.xpose.msra.mxu0 0.0
    %1880 = vmatprep.subr.mxu0 0.0
    %1881 = vmatpush2.xpose.msra.mxu0 0.0
    %1882 = vmatprep.subr.mxu0 0.0
    %1883 = vmatpush2.xpose.msra.mxu0 0.0
    %1884 = vmatprep.subr.mxu0 0.0
    %1885 = vmatpush2.xpose.msra.mxu0 0.0
    %1886 = vmatprep.subr.mxu0 0.0
    %1887 = vmatpush2.xpose.msra.mxu0 0.0
    %1888 = vmatprep.subr.mxu0 0.0
    %1889 = vmatpush2.xpose.msra.mxu0 0.0
    %1890 = vmatprep.subr.mxu0 0.0
    %1891 = vmatpush2.xpose.msra.mxu0 0.0
    %1892 = vmatprep.mubr.f32.mxu0 0.0
    %1893 = vmatmul.mubr.f32.gmra.mxu0 %v1817
    %v1894 = vpop.f32.mrf.mxu0
    %v1895 = vadd.f32 0.0, %v1894
    %v1896 = vpop.f32.mrf.mxu0
    %1897 = vmatprep.mubr.f32.mxu0 0.0
    %1898 = vmatmul.mubr.f32.gmra.mxu0 %v1820
    %v1899 = vpop.f32.mrf.mxu0
    %v1900 = vadd.f32 0.0, %v1899
    %v1901 = vpop.f32.mrf.mxu0
    %1902 = vdwg.mxu0
    %v1904 = vsel %vm1554, %v552, 0
    %v1907 = vsel %vm1554, %v620, 0
    %v1910 = vsel %vm1554, %v862, 0
    %v1913 = vsel %vm1554, %v930, 0
    %1915 = vmatprep.subr.mxu0 0.0
    %1916 = vmatpush1.xpose.msra.mxu0 0.0
    %1917 = vmatprep.subr.mxu0 0.0
    %1918 = vmatpush1.xpose.msra.mxu0 0.0
    %1919 = vmatprep.subr.mxu0 0.0
    %1920 = vmatpush1.xpose.msra.mxu0 0.0
    %1921 = vmatprep.subr.mxu0 0.0
    %1922 = vmatpush1.xpose.msra.mxu0 0.0
    %1923 = vmatprep.subr.mxu0 0.0
    %1924 = vmatpush1.xpose.msra.mxu0 0.0
    %1925 = vmatprep.subr.mxu0 0.0
    %1926 = vmatpush1.xpose.msra.mxu0 0.0
    %1927 = vmatprep.subr.mxu0 0.0
    %1928 = vmatpush1.xpose.msra.mxu0 0.0
    %1929 = vmatprep.subr.mxu0 0.0
    %1930 = vmatpush1.xpose.msra.mxu0 0.0
    %1931 = vmatprep.subr.mxu0 0.0
    %1932 = vmatpush1.xpose.msra.mxu0 0.0
    %1933 = vmatprep.subr.mxu0 0.0
    %1934 = vmatpush1.xpose.msra.mxu0 0.0
    %1935 = vmatprep.subr.mxu0 0.0
    %1936 = vmatpush1.xpose.msra.mxu0 0.0
    %1937 = vmatprep.subr.mxu0 0.0
    %1938 = vmatpush1.xpose.msra.mxu0 0.0
    %1939 = vmatprep.subr.mxu0 0.0
    %1940 = vmatpush1.xpose.msra.mxu0 0.0
    %1941 = vmatprep.subr.mxu0 0.0
    %1942 = vmatpush1.xpose.msra.mxu0 0.0
    %1943 = vmatprep.subr.mxu0 0.0
    %1944 = vmatpush1.xpose.msra.mxu0 %v1913
    %1945 = vmatprep.subr.mxu0 0.0
    %1946 = vmatpush1.xpose.msra.mxu0 %v1910
    %1947 = vmatprep.subr.mxu0 0.0
    %1948 = vmatpush2.xpose.msra.mxu0 0.0
    %1949 = vmatprep.subr.mxu0 0.0
    %1950 = vmatpush2.xpose.msra.mxu0 0.0
    %1951 = vmatprep.subr.mxu0 0.0
    %1952 = vmatpush2.xpose.msra.mxu0 0.0
    %1953 = vmatprep.subr.mxu0 0.0
    %1954 = vmatpush2.xpose.msra.mxu0 0.0
    %1955 = vmatprep.subr.mxu0 0.0
    %1956 = vmatpush2.xpose.msra.mxu0 0.0
    %1957 = vmatprep.subr.mxu0 0.0
    %1958 = vmatpush2.xpose.msra.mxu0 0.0
    %1959 = vmatprep.subr.mxu0 0.0
    %1960 = vmatpush2.xpose.msra.mxu0 0.0
    %1961 = vmatprep.subr.mxu0 0.0
    %1962 = vmatpush2.xpose.msra.mxu0 0.0
    %1963 = vmatprep.subr.mxu0 0.0
    %1964 = vmatpush2.xpose.msra.mxu0 0.0
    %1965 = vmatprep.subr.mxu0 0.0
    %1966 = vmatpush2.xpose.msra.mxu0 0.0
    %1967 = vmatprep.subr.mxu0 0.0
    %1968 = vmatpush2.xpose.msra.mxu0 0.0
    %1969 = vmatprep.subr.mxu0 0.0
    %1970 = vmatpush2.xpose.msra.mxu0 0.0
    %1971 = vmatprep.subr.mxu0 0.0
    %1972 = vmatpush2.xpose.msra.mxu0 0.0
    %1973 = vmatprep.subr.mxu0 0.0
    %1974 = vmatpush2.xpose.msra.mxu0 0.0
    %1975 = vmatprep.subr.mxu0 0.0
    %1976 = vmatpush2.xpose.msra.mxu0 0.0
    %1977 = vmatprep.subr.mxu0 0.0
    %1978 = vmatpush2.xpose.msra.mxu0 0.0
    %1979 = vmatprep.mubr.f32.mxu0 0.0
    %1980 = vmatmul.mubr.f32.gmra.mxu0 %v1904
    %v1981 = vpop.f32.mrf.mxu0
    %v1982 = vadd.f32 %v1634, %v1981
    %v1983 = vpop.f32.mrf.mxu0
    %1984 = vmatprep.mubr.f32.mxu0 0.0
    %1985 = vmatmul.mubr.f32.gmra.mxu0 %v1907
    %v1986 = vpop.f32.mrf.mxu0
    %v1987 = vadd.f32 %v1639, %v1986
    %v1988 = vpop.f32.mrf.mxu0
    %1989 = vdwg.mxu0
    %v1991 = vsel %vm1554, %v553, 0
    %v1994 = vsel %vm1554, %v621, 0
    %v1997 = vsel %vm1554, %v863, 0
    %v2000 = vsel %vm1554, %v931, 0
    %2002 = vmatprep.subr.mxu0 0.0
    %2003 = vmatpush1.xpose.msra.mxu0 0.0
    %2004 = vmatprep.subr.mxu0 0.0
    %2005 = vmatpush1.xpose.msra.mxu0 0.0
    %2006 = vmatprep.subr.mxu0 0.0
    %2007 = vmatpush1.xpose.msra.mxu0 0.0
    %2008 = vmatprep.subr.mxu0 0.0
    %2009 = vmatpush1.xpose.msra.mxu0 0.0
    %2010 = vmatprep.subr.mxu0 0.0
    %2011 = vmatpush1.xpose.msra.mxu0 0.0
    %2012 = vmatprep.subr.mxu0 0.0
    %2013 = vmatpush1.xpose.msra.mxu0 0.0
    %2014 = vmatprep.subr.mxu0 0.0
    %2015 = vmatpush1.xpose.msra.mxu0 0.0
    %2016 = vmatprep.subr.mxu0 0.0
    %2017 = vmatpush1.xpose.msra.mxu0 0.0
    %2018 = vmatprep.subr.mxu0 0.0
    %2019 = vmatpush1.xpose.msra.mxu0 0.0
    %2020 = vmatprep.subr.mxu0 0.0
    %2021 = vmatpush1.xpose.msra.mxu0 0.0
    %2022 = vmatprep.subr.mxu0 0.0
    %2023 = vmatpush1.xpose.msra.mxu0 0.0
    %2024 = vmatprep.subr.mxu0 0.0
    %2025 = vmatpush1.xpose.msra.mxu0 0.0
    %2026 = vmatprep.subr.mxu0 0.0
    %2027 = vmatpush1.xpose.msra.mxu0 0.0
    %2028 = vmatprep.subr.mxu0 0.0
    %2029 = vmatpush1.xpose.msra.mxu0 0.0
    %2030 = vmatprep.subr.mxu0 0.0
    %2031 = vmatpush1.xpose.msra.mxu0 %v2000
    %2032 = vmatprep.subr.mxu0 0.0
    %2033 = vmatpush1.xpose.msra.mxu0 %v1997
    %2034 = vmatprep.subr.mxu0 0.0
    %2035 = vmatpush2.xpose.msra.mxu0 0.0
    %2036 = vmatprep.subr.mxu0 0.0
    %2037 = vmatpush2.xpose.msra.mxu0 0.0
    %2038 = vmatprep.subr.mxu0 0.0
    %2039 = vmatpush2.xpose.msra.mxu0 0.0
    %2040 = vmatprep.subr.mxu0 0.0
    %2041 = vmatpush2.xpose.msra.mxu0 0.0
    %2042 = vmatprep.subr.mxu0 0.0
    %2043 = vmatpush2.xpose.msra.mxu0 0.0
    %2044 = vmatprep.subr.mxu0 0.0
    %2045 = vmatpush2.xpose.msra.mxu0 0.0
    %2046 = vmatprep.subr.mxu0 0.0
    %2047 = vmatpush2.xpose.msra.mxu0 0.0
    %2048 = vmatprep.subr.mxu0 0.0
    %2049 = vmatpush2.xpose.msra.mxu0 0.0
    %2050 = vmatprep.subr.mxu0 0.0
    %2051 = vmatpush2.xpose.msra.mxu0 0.0
    %2052 = vmatprep.subr.mxu0 0.0
    %2053 = vmatpush2.xpose.msra.mxu0 0.0
    %2054 = vmatprep.subr.mxu0 0.0
    %2055 = vmatpush2.xpose.msra.mxu0 0.0
    %2056 = vmatprep.subr.mxu0 0.0
    %2057 = vmatpush2.xpose.msra.mxu0 0.0
    %2058 = vmatprep.subr.mxu0 0.0
    %2059 = vmatpush2.xpose.msra.mxu0 0.0
    %2060 = vmatprep.subr.mxu0 0.0
    %2061 = vmatpush2.xpose.msra.mxu0 0.0
    %2062 = vmatprep.subr.mxu0 0.0
    %2063 = vmatpush2.xpose.msra.mxu0 0.0
    %2064 = vmatprep.subr.mxu0 0.0
    %2065 = vmatpush2.xpose.msra.mxu0 0.0
    %2066 = vmatprep.mubr.f32.mxu0 0.0
    %2067 = vmatmul.mubr.f32.gmra.mxu0 %v1991
    %v2068 = vpop.f32.mrf.mxu0
    %v2069 = vadd.f32 %v1721, %v2068
    %v2070 = vpop.f32.mrf.mxu0
    %2071 = vmatprep.mubr.f32.mxu0 0.0
    %2072 = vmatmul.mubr.f32.gmra.mxu0 %v1994
    %v2073 = vpop.f32.mrf.mxu0
    %v2074 = vadd.f32 %v1726, %v2073
    %v2075 = vpop.f32.mrf.mxu0
    %2076 = vdwg.mxu0
    %v2078 = vsel %vm1554, %v554, 0
    %v2081 = vsel %vm1554, %v622, 0
    %v2084 = vsel %vm1554, %v864, 0
    %v2087 = vsel %vm1554, %v932, 0
    %2089 = vmatprep.subr.mxu0 0.0
    %2090 = vmatpush1.xpose.msra.mxu0 0.0
    %2091 = vmatprep.subr.mxu0 0.0
    %2092 = vmatpush1.xpose.msra.mxu0 0.0
    %2093 = vmatprep.subr.mxu0 0.0
    %2094 = vmatpush1.xpose.msra.mxu0 0.0
    %2095 = vmatprep.subr.mxu0 0.0
    %2096 = vmatpush1.xpose.msra.mxu0 0.0
    %2097 = vmatprep.subr.mxu0 0.0
    %2098 = vmatpush1.xpose.msra.mxu0 0.0
    %2099 = vmatprep.subr.mxu0 0.0
    %2100 = vmatpush1.xpose.msra.mxu0 0.0
    %2101 = vmatprep.subr.mxu0 0.0
    %2102 = vmatpush1.xpose.msra.mxu0 0.0
    %2103 = vmatprep.subr.mxu0 0.0
    %2104 = vmatpush1.xpose.msra.mxu0 0.0
    %2105 = vmatprep.subr.mxu0 0.0
    %2106 = vmatpush1.xpose.msra.mxu0 0.0
    %2107 = vmatprep.subr.mxu0 0.0
    %2108 = vmatpush1.xpose.msra.mxu0 0.0
    %2109 = vmatprep.subr.mxu0 0.0
    %2110 = vmatpush1.xpose.msra.mxu0 0.0
    %2111 = vmatprep.subr.mxu0 0.0
    %2112 = vmatpush1.xpose.msra.mxu0 0.0
    %2113 = vmatprep.subr.mxu0 0.0
    %2114 = vmatpush1.xpose.msra.mxu0 0.0
    %2115 = vmatprep.subr.mxu0 0.0
    %2116 = vmatpush1.xpose.msra.mxu0 0.0
    %2117 = vmatprep.subr.mxu0 0.0
    %2118 = vmatpush1.xpose.msra.mxu0 %v2087
    %2119 = vmatprep.subr.mxu0 0.0
    %2120 = vmatpush1.xpose.msra.mxu0 %v2084
    %2121 = vmatprep.subr.mxu0 0.0
    %2122 = vmatpush2.xpose.msra.mxu0 0.0
    %2123 = vmatprep.subr.mxu0 0.0
    %2124 = vmatpush2.xpose.msra.mxu0 0.0
    %2125 = vmatprep.subr.mxu0 0.0
    %2126 = vmatpush2.xpose.msra.mxu0 0.0
    %2127 = vmatprep.subr.mxu0 0.0
    %2128 = vmatpush2.xpose.msra.mxu0 0.0
    %2129 = vmatprep.subr.mxu0 0.0
    %2130 = vmatpush2.xpose.msra.mxu0 0.0
    %2131 = vmatprep.subr.mxu0 0.0
    %2132 = vmatpush2.xpose.msra.mxu0 0.0
    %2133 = vmatprep.subr.mxu0 0.0
    %2134 = vmatpush2.xpose.msra.mxu0 0.0
    %2135 = vmatprep.subr.mxu0 0.0
    %2136 = vmatpush2.xpose.msra.mxu0 0.0
    %2137 = vmatprep.subr.mxu0 0.0
    %2138 = vmatpush2.xpose.msra.mxu0 0.0
    %2139 = vmatprep.subr.mxu0 0.0
    %2140 = vmatpush2.xpose.msra.mxu0 0.0
    %2141 = vmatprep.subr.mxu0 0.0
    %2142 = vmatpush2.xpose.msra.mxu0 0.0
    %2143 = vmatprep.subr.mxu0 0.0
    %2144 = vmatpush2.xpose.msra.mxu0 0.0
    %2145 = vmatprep.subr.mxu0 0.0
    %2146 = vmatpush2.xpose.msra.mxu0 0.0
    %2147 = vmatprep.subr.mxu0 0.0
    %2148 = vmatpush2.xpose.msra.mxu0 0.0
    %2149 = vmatprep.subr.mxu0 0.0
    %2150 = vmatpush2.xpose.msra.mxu0 0.0
    %2151 = vmatprep.subr.mxu0 0.0
    %2152 = vmatpush2.xpose.msra.mxu0 0.0
    %2153 = vmatprep.mubr.f32.mxu0 0.0
    %2154 = vmatmul.mubr.f32.gmra.mxu0 %v2078
    %v2155 = vpop.f32.mrf.mxu0
    %v2156 = vadd.f32 %v1808, %v2155
    %v2157 = vpop.f32.mrf.mxu0
    %2158 = vmatprep.mubr.f32.mxu0 0.0
    %2159 = vmatmul.mubr.f32.gmra.mxu0 %v2081
    %v2160 = vpop.f32.mrf.mxu0
    %v2161 = vadd.f32 %v1813, %v2160
    %v2162 = vpop.f32.mrf.mxu0
    %2163 = vdwg.mxu0
    %v2165 = vsel %vm1554, %v555, 0
    %v2168 = vsel %vm1554, %v623, 0
    %v2171 = vsel %vm1554, %v865, 0
    %v2174 = vsel %vm1554, %v933, 0
    %2176 = vmatprep.subr.mxu0 0.0
    %2177 = vmatpush1.xpose.msra.mxu0 0.0
    %2178 = vmatprep.subr.mxu0 0.0
    %2179 = vmatpush1.xpose.msra.mxu0 0.0
    %2180 = vmatprep.subr.mxu0 0.0
    %2181 = vmatpush1.xpose.msra.mxu0 0.0
    %2182 = vmatprep.subr.mxu0 0.0
    %2183 = vmatpush1.xpose.msra.mxu0 0.0
    %2184 = vmatprep.subr.mxu0 0.0
    %2185 = vmatpush1.xpose.msra.mxu0 0.0
    %2186 = vmatprep.subr.mxu0 0.0
    %2187 = vmatpush1.xpose.msra.mxu0 0.0
    %2188 = vmatprep.subr.mxu0 0.0
    %2189 = vmatpush1.xpose.msra.mxu0 0.0
    %2190 = vmatprep.subr.mxu0 0.0
    %2191 = vmatpush1.xpose.msra.mxu0 0.0
    %2192 = vmatprep.subr.mxu0 0.0
    %2193 = vmatpush1.xpose.msra.mxu0 0.0
    %2194 = vmatprep.subr.mxu0 0.0
    %2195 = vmatpush1.xpose.msra.mxu0 0.0
    %2196 = vmatprep.subr.mxu0 0.0
    %2197 = vmatpush1.xpose.msra.mxu0 0.0
    %2198 = vmatprep.subr.mxu0 0.0
    %2199 = vmatpush1.xpose.msra.mxu0 0.0
    %2200 = vmatprep.subr.mxu0 0.0
    %2201 = vmatpush1.xpose.msra.mxu0 0.0
    %2202 = vmatprep.subr.mxu0 0.0
    %2203 = vmatpush1.xpose.msra.mxu0 0.0
    %2204 = vmatprep.subr.mxu0 0.0
    %2205 = vmatpush1.xpose.msra.mxu0 %v2174
    %2206 = vmatprep.subr.mxu0 0.0
    %2207 = vmatpush1.xpose.msra.mxu0 %v2171
    %2208 = vmatprep.subr.mxu0 0.0
    %2209 = vmatpush2.xpose.msra.mxu0 0.0
    %2210 = vmatprep.subr.mxu0 0.0
    %2211 = vmatpush2.xpose.msra.mxu0 0.0
    %2212 = vmatprep.subr.mxu0 0.0
    %2213 = vmatpush2.xpose.msra.mxu0 0.0
    %2214 = vmatprep.subr.mxu0 0.0
    %2215 = vmatpush2.xpose.msra.mxu0 0.0
    %2216 = vmatprep.subr.mxu0 0.0
    %2217 = vmatpush2.xpose.msra.mxu0 0.0
    %2218 = vmatprep.subr.mxu0 0.0
    %2219 = vmatpush2.xpose.msra.mxu0 0.0
    %2220 = vmatprep.subr.mxu0 0.0
    %2221 = vmatpush2.xpose.msra.mxu0 0.0
    %2222 = vmatprep.subr.mxu0 0.0
    %2223 = vmatpush2.xpose.msra.mxu0 0.0
    %2224 = vmatprep.subr.mxu0 0.0
    %2225 = vmatpush2.xpose.msra.mxu0 0.0
    %2226 = vmatprep.subr.mxu0 0.0
    %2227 = vmatpush2.xpose.msra.mxu0 0.0
    %2228 = vmatprep.subr.mxu0 0.0
    %2229 = vmatpush2.xpose.msra.mxu0 0.0
    %2230 = vmatprep.subr.mxu0 0.0
    %2231 = vmatpush2.xpose.msra.mxu0 0.0
    %2232 = vmatprep.subr.mxu0 0.0
    %2233 = vmatpush2.xpose.msra.mxu0 0.0
    %2234 = vmatprep.subr.mxu0 0.0
    %2235 = vmatpush2.xpose.msra.mxu0 0.0
    %2236 = vmatprep.subr.mxu0 0.0
    %2237 = vmatpush2.xpose.msra.mxu0 0.0
    %2238 = vmatprep.subr.mxu0 0.0
    %2239 = vmatpush2.xpose.msra.mxu0 0.0
    %2240 = vmatprep.mubr.f32.mxu0 0.0
    %2241 = vmatmul.mubr.f32.gmra.mxu0 %v2165
    %v2242 = vpop.f32.mrf.mxu0
    %v2243 = vadd.f32 %v1895, %v2242
    %v2244 = vpop.f32.mrf.mxu0
    %2245 = vmatprep.mubr.f32.mxu0 0.0
    %2246 = vmatmul.mubr.f32.gmra.mxu0 %v2168
    %v2247 = vpop.f32.mrf.mxu0
    %v2248 = vadd.f32 %v1900, %v2247
    %v2249 = vpop.f32.mrf.mxu0
    %2250 = vdwg.mxu0
    %v2251 = vld [vmem:[#allocation10] sm:$0xff]
    %v2252 = vld [vmem:[#allocation10 + $0x8] sm:$0xff]
    %v2253 = vadd.f32 %v1982, %v2251
    %v2254 = vadd.f32 %v1987, %v2252
    %v2255 = vadd.f32 %v2069, %v2251
    %v2256 = vadd.f32 %v2074, %v2252
    %v2257 = vadd.f32 %v2156, %v2251
    %v2258 = vadd.f32 %v2161, %v2252
    %v2259 = vadd.f32 %v2243, %v2251
    %v2260 = vadd.f32 %v2248, %v2252
    %vm2261 = vcmask 130048
    %v2262 = vsel %vm2261, %v2253, -inf
    %2263 = vmax.xlane.f32.xlu0 %v2262
    %v2264 = vpop.xlane.xlu0 %2263
    %v2265 = vsel %vm2261, %v2254, -inf
    %2266 = vmax.xlane.f32.xlu0 %v2265
    %v2267 = vpop.xlane.xlu0 %2266
    %v2268 = vsel %vm2261, %v2255, -inf
    %2269 = vmax.xlane.f32.xlu0 %v2268
    %v2270 = vpop.xlane.xlu0 %2269
    %v2271 = vsel %vm2261, %v2256, -inf
    %2272 = vmax.xlane.f32.xlu0 %v2271
    %v2273 = vpop.xlane.xlu0 %2272
    %v2274 = vsel %vm2261, %v2257, -inf
    %2275 = vmax.xlane.f32.xlu0 %v2274
    %v2276 = vpop.xlane.xlu0 %2275
    %v2277 = vsel %vm2261, %v2258, -inf
    %2278 = vmax.xlane.f32.xlu0 %v2277
    %v2279 = vpop.xlane.xlu0 %2278
    %v2280 = vsel %vm2261, %v2259, -inf
    %2281 = vmax.xlane.f32.xlu0 %v2280
    %v2282 = vpop.xlane.xlu0 %2281
    %v2283 = vsel %vm2261, %v2260, -inf
    %2284 = vmax.xlane.f32.xlu0 %v2283
    %v2285 = vpop.xlane.xlu0 %2284
    %v2286 = vsub.f32 %v2253, %v2264
    %v2287 = vsub.f32 %v2254, %v2267
    %v2288 = vsub.f32 %v2255, %v2270
    %v2289 = vsub.f32 %v2256, %v2273
    %v2290 = vsub.f32 %v2257, %v2276
    %v2291 = vsub.f32 %v2258, %v2279
    %v2292 = vsub.f32 %v2259, %v2282
    %v2293 = vsub.f32 %v2260, %v2285
    %v2294 = vmul.f32 %v2286, 1.442695
    %v2295 = vpow.pop %v2294
    %v2296 = vmul.f32 %v2287, 1.442695
    %v2297 = vpow.pop %v2296
    %v2298 = vmul.f32 %v2288, 1.442695
    %v2299 = vpow.pop %v2298
    %v2300 = vmul.f32 %v2289, 1.442695
    %v2301 = vpow.pop %v2300
    %v2302 = vmul.f32 %v2290, 1.442695
    %v2303 = vpow.pop %v2302
    %v2304 = vmul.f32 %v2291, 1.442695
    %v2305 = vpow.pop %v2304
    %v2306 = vmul.f32 %v2292, 1.442695
    %v2307 = vpow.pop %v2306
    %v2308 = vmul.f32 %v2293, 1.442695
    %v2309 = vpow.pop %v2308
    %v2310 = vsel %vm2261, %v2295, 0.0
    %2311 = vadd.xlane.f32.xlu0 %v2310
    %v2312 = vpop.xlane.xlu0 %2311
    %v2313 = vsel %vm2261, %v2297, 0.0
    %2314 = vadd.xlane.f32.xlu0 %v2313
    %v2315 = vpop.xlane.xlu0 %2314
    %v2316 = vsel %vm2261, %v2299, 0.0
    %2317 = vadd.xlane.f32.xlu0 %v2316
    %v2318 = vpop.xlane.xlu0 %2317
    %v2319 = vsel %vm2261, %v2301, 0.0
    %2320 = vadd.xlane.f32.xlu0 %v2319
    %v2321 = vpop.xlane.xlu0 %2320
    %v2322 = vsel %vm2261, %v2303, 0.0
    %2323 = vadd.xlane.f32.xlu0 %v2322
    %v2324 = vpop.xlane.xlu0 %2323
    %v2325 = vsel %vm2261, %v2305, 0.0
    %2326 = vadd.xlane.f32.xlu0 %v2325
    %v2327 = vpop.xlane.xlu0 %2326
    %v2328 = vsel %vm2261, %v2307, 0.0
    %2329 = vadd.xlane.f32.xlu0 %v2328
    %v2330 = vpop.xlane.xlu0 %2329
    %v2331 = vsel %vm2261, %v2309, 0.0
    %2332 = vadd.xlane.f32.xlu0 %v2331
    %v2333 = vpop.xlane.xlu0 %2332
    %v2334 = vrcp.pop %v2312
    %v2335 = vrcp.pop %v2315
    %v2336 = vrcp.pop %v2318
    %v2337 = vrcp.pop %v2321
    %v2338 = vrcp.pop %v2324
    %v2339 = vrcp.pop %v2327
    %v2340 = vrcp.pop %v2330
    %v2341 = vrcp.pop %v2333
    %v2342 = vmul.f32 %v2295, %v2334
    %v2343 = vmul.f32 %v2297, %v2335
    %v2344 = vmul.f32 %v2299, %v2336
    %v2345 = vmul.f32 %v2301, %v2337
    %v2346 = vmul.f32 %v2303, %v2338
    %v2347 = vmul.f32 %v2305, %v2339
    %v2348 = vmul.f32 %v2307, %v2340
    %v2349 = vmul.f32 %v2309, %v2341
    %2352 = vrot.lane.b32.xlu0 %v224, 112
    %v2353 = vpop.permute.xlu0 %2352
    %2354 = vrot.lane.b32.xlu0 %v230, 112
    %v2355 = vpop.permute.xlu0 %2354
    %2358 = vrot.lane.b32.xlu0 %v224, 96
    %v2359 = vpop.permute.xlu0 %2358
    %2360 = vrot.lane.b32.xlu0 %v230, 96
    %v2361 = vpop.permute.xlu0 %2360
    %2364 = vrot.lane.b32.xlu0 %v224, 80
    %v2365 = vpop.permute.xlu0 %2364
    %2366 = vrot.lane.b32.xlu0 %v230, 80
    %v2367 = vpop.permute.xlu0 %2366
    %v2370 = vcombine.low %v224, %v2359
    %v2371 = vcombine.high %v224, %v2359
    %v2373 = vunpack.c.l.s4 1983009808
    %v2374 = vunpack.c.0.s8 %v2373
    %v2375 = vlaneseq
    %v2376 = vshrl.u32 %v2375, 7
    %v2377 = vsub.s32 %v2374, %v2376
    %v2378 = vrot.slane %v2370, %v2377
    %v2380 = vunpack.c.l.s4 1983009808
    %v2381 = vunpack.c.0.s8 %v2380
    %v2382 = vlaneseq
    %v2383 = vshrl.u32 %v2382, 7
    %v2384 = vsub.s32 %v2381, %v2383
    %v2385 = vrot.slane %v2371, %v2384
    %v2386 = vcombine.low %v2353, %v2365
    %v2387 = vcombine.high %v2353, %v2365
    %v2389 = vunpack.c.l.s4 1983009808
    %v2390 = vunpack.c.0.s8 %v2389
    %v2391 = vlaneseq
    %v2392 = vshrl.u32 %v2391, 7
    %v2393 = vsub.s32 %v2390, %v2392
    %v2394 = vrot.slane %v2386, %v2393
    %v2396 = vunpack.c.l.s4 1983009808
    %v2397 = vunpack.c.0.s8 %v2396
    %v2398 = vlaneseq
    %v2399 = vshrl.u32 %v2398, 7
    %v2400 = vsub.s32 %v2397, %v2399
    %v2401 = vrot.slane %v2387, %v2400
    %v2402 = vcombine.low %v2378, %v2394
    %v2403 = vcombine.high %v2378, %v2394
    %v2405 = vunpack.c.l.s4 1934713408
    %v2406 = vunpack.c.0.s8 %v2405
    %v2407 = vlaneseq
    %v2408 = vshrl.u32 %v2407, 7
    %v2409 = vsub.s32 %v2406, %v2408
    %v2410 = vrot.slane %v2402, %v2409
    %v2412 = vunpack.c.l.s4 1934713408
    %v2413 = vunpack.c.0.s8 %v2412
    %v2414 = vlaneseq
    %v2415 = vshrl.u32 %v2414, 7
    %v2416 = vsub.s32 %v2413, %v2415
    %v2417 = vrot.slane %v2403, %v2416
    %v2418 = vcombine.low %v2385, %v2401
    %v2419 = vcombine.high %v2385, %v2401
    %v2421 = vunpack.c.l.s4 1934713408
    %v2422 = vunpack.c.0.s8 %v2421
    %v2423 = vlaneseq
    %v2424 = vshrl.u32 %v2423, 7
    %v2425 = vsub.s32 %v2422, %v2424
    %v2426 = vrot.slane %v2418, %v2425
    %v2428 = vunpack.c.l.s4 1934713408
    %v2429 = vunpack.c.0.s8 %v2428
    %v2430 = vlaneseq
    %v2431 = vshrl.u32 %v2430, 7
    %v2432 = vsub.s32 %v2429, %v2431
    %v2433 = vrot.slane %v2419, %v2432
    %v2434 = vcombine.high %v2410, 0.0
    %v2435 = vcombine.high %v2417, 0.0
    %v2436 = vcombine.high %v2426, 0.0
    %v2437 = vcombine.high %v2433, 0.0
    %v2438 = vcombine.low %v230, %v2361
    %v2439 = vcombine.high %v230, %v2361
    %v2441 = vunpack.c.l.s4 1983009808
    %v2442 = vunpack.c.0.s8 %v2441
    %v2443 = vlaneseq
    %v2444 = vshrl.u32 %v2443, 7
    %v2445 = vsub.s32 %v2442, %v2444
    %v2446 = vrot.slane %v2438, %v2445
    %v2448 = vunpack.c.l.s4 1983009808
    %v2449 = vunpack.c.0.s8 %v2448
    %v2450 = vlaneseq
    %v2451 = vshrl.u32 %v2450, 7
    %v2452 = vsub.s32 %v2449, %v2451
    %v2453 = vrot.slane %v2439, %v2452
    %v2454 = vcombine.low %v2355, %v2367
    %v2455 = vcombine.high %v2355, %v2367
    %v2457 = vunpack.c.l.s4 1983009808
    %v2458 = vunpack.c.0.s8 %v2457
    %v2459 = vlaneseq
    %v2460 = vshrl.u32 %v2459, 7
    %v2461 = vsub.s32 %v2458, %v2460
    %v2462 = vrot.slane %v2454, %v2461
    %v2464 = vunpack.c.l.s4 1983009808
    %v2465 = vunpack.c.0.s8 %v2464
    %v2466 = vlaneseq
    %v2467 = vshrl.u32 %v2466, 7
    %v2468 = vsub.s32 %v2465, %v2467
    %v2469 = vrot.slane %v2455, %v2468
    %v2470 = vcombine.low %v2446, %v2462
    %v2471 = vcombine.high %v2446, %v2462
    %v2473 = vunpack.c.l.s4 1934713408
    %v2474 = vunpack.c.0.s8 %v2473
    %v2475 = vlaneseq
    %v2476 = vshrl.u32 %v2475, 7
    %v2477 = vsub.s32 %v2474, %v2476
    %v2478 = vrot.slane %v2470, %v2477
    %v2480 = vunpack.c.l.s4 1934713408
    %v2481 = vunpack.c.0.s8 %v2480
    %v2482 = vlaneseq
    %v2483 = vshrl.u32 %v2482, 7
    %v2484 = vsub.s32 %v2481, %v2483
    %v2485 = vrot.slane %v2471, %v2484
    %v2486 = vcombine.low %v2453, %v2469
    %v2487 = vcombine.high %v2453, %v2469
    %v2489 = vunpack.c.l.s4 1934713408
    %v2490 = vunpack.c.0.s8 %v2489
    %v2491 = vlaneseq
    %v2492 = vshrl.u32 %v2491, 7
    %v2493 = vsub.s32 %v2490, %v2492
    %v2494 = vrot.slane %v2486, %v2493
    %v2496 = vunpack.c.l.s4 1934713408
    %v2497 = vunpack.c.0.s8 %v2496
    %v2498 = vlaneseq
    %v2499 = vshrl.u32 %v2498, 7
    %v2500 = vsub.s32 %v2497, %v2499
    %v2501 = vrot.slane %v2487, %v2500
    %v2502 = vcombine.high %v2478, 0.0
    %v2503 = vcombine.high %v2485, 0.0
    %v2504 = vcombine.high %v2494, 0.0
    %v2505 = vcombine.high %v2501, 0.0
    %v2506 = vcombine.low %v2410, %v2417
    %v2508 = vunpack.c.l.s4 1983009808
    %v2509 = vunpack.c.0.s8 %v2508
    %v2510 = vlaneseq
    %v2511 = vshrl.u32 %v2510, 7
    %v2512 = vsub.s32 %v2509, %v2511
    %v2513 = vrot.slane %v2506, %v2512
    %v2514 = vcombine.low %v2434, %v2435
    %v2516 = vunpack.c.l.s4 1983009808
    %v2517 = vunpack.c.0.s8 %v2516
    %v2518 = vlaneseq
    %v2519 = vshrl.u32 %v2518, 7
    %v2520 = vsub.s32 %v2517, %v2519
    %v2521 = vrot.slane %v2514, %v2520
    %v2522 = vcombine.low %v2426, %v2433
    %v2524 = vunpack.c.l.s4 1983009808
    %v2525 = vunpack.c.0.s8 %v2524
    %v2526 = vlaneseq
    %v2527 = vshrl.u32 %v2526, 7
    %v2528 = vsub.s32 %v2525, %v2527
    %v2529 = vrot.slane %v2522, %v2528
    %v2530 = vcombine.low %v2436, %v2437
    %v2532 = vunpack.c.l.s4 1983009808
    %v2533 = vunpack.c.0.s8 %v2532
    %v2534 = vlaneseq
    %v2535 = vshrl.u32 %v2534, 7
    %v2536 = vsub.s32 %v2533, %v2535
    %v2537 = vrot.slane %v2530, %v2536
    %v2538 = vcombine.low %v2513, %v2521
    %v2539 = vcombine.high %v2513, %v2521
    %v2541 = vunpack.c.l.s4 1934713408
    %v2542 = vunpack.c.0.s8 %v2541
    %v2543 = vlaneseq
    %v2544 = vshrl.u32 %v2543, 7
    %v2545 = vsub.s32 %v2542, %v2544
    %v2546 = vrot.slane %v2538, %v2545
    %v2548 = vunpack.c.l.s4 1934713408
    %v2549 = vunpack.c.0.s8 %v2548
    %v2550 = vlaneseq
    %v2551 = vshrl.u32 %v2550, 7
    %v2552 = vsub.s32 %v2549, %v2551
    %v2553 = vrot.slane %v2539, %v2552
    %v2554 = vcombine.low %v2529, %v2537
    %v2555 = vcombine.high %v2529, %v2537
    %v2557 = vunpack.c.l.s4 1934713408
    %v2558 = vunpack.c.0.s8 %v2557
    %v2559 = vlaneseq
    %v2560 = vshrl.u32 %v2559, 7
    %v2561 = vsub.s32 %v2558, %v2560
    %v2562 = vrot.slane %v2554, %v2561
    %v2564 = vunpack.c.l.s4 1934713408
    %v2565 = vunpack.c.0.s8 %v2564
    %v2566 = vlaneseq
    %v2567 = vshrl.u32 %v2566, 7
    %v2568 = vsub.s32 %v2565, %v2567
    %v2569 = vrot.slane %v2555, %v2568
    %v2570 = vcombine.low %v2546, %v2562
    %v2571 = vcombine.high %v2546, %v2562
    %v2572 = vcombine.low %v2553, %v2569
    %v2573 = vcombine.high %v2553, %v2569
    %v2574 = vcombine.low %v2478, %v2485
    %v2576 = vunpack.c.l.s4 1983009808
    %v2577 = vunpack.c.0.s8 %v2576
    %v2578 = vlaneseq
    %v2579 = vshrl.u32 %v2578, 7
    %v2580 = vsub.s32 %v2577, %v2579
    %v2581 = vrot.slane %v2574, %v2580
    %v2582 = vcombine.low %v2502, %v2503
    %v2584 = vunpack.c.l.s4 1983009808
    %v2585 = vunpack.c.0.s8 %v2584
    %v2586 = vlaneseq
    %v2587 = vshrl.u32 %v2586, 7
    %v2588 = vsub.s32 %v2585, %v2587
    %v2589 = vrot.slane %v2582, %v2588
    %v2590 = vcombine.low %v2494, %v2501
    %v2592 = vunpack.c.l.s4 1983009808
    %v2593 = vunpack.c.0.s8 %v2592
    %v2594 = vlaneseq
    %v2595 = vshrl.u32 %v2594, 7
    %v2596 = vsub.s32 %v2593, %v2595
    %v2597 = vrot.slane %v2590, %v2596
    %v2598 = vcombine.low %v2504, %v2505
    %v2600 = vunpack.c.l.s4 1983009808
    %v2601 = vunpack.c.0.s8 %v2600
    %v2602 = vlaneseq
    %v2603 = vshrl.u32 %v2602, 7
    %v2604 = vsub.s32 %v2601, %v2603
    %v2605 = vrot.slane %v2598, %v2604
    %v2606 = vcombine.low %v2581, %v2589
    %v2607 = vcombine.high %v2581, %v2589
    %v2609 = vunpack.c.l.s4 1934713408
    %v2610 = vunpack.c.0.s8 %v2609
    %v2611 = vlaneseq
    %v2612 = vshrl.u32 %v2611, 7
    %v2613 = vsub.s32 %v2610, %v2612
    %v2614 = vrot.slane %v2606, %v2613
    %v2616 = vunpack.c.l.s4 1934713408
    %v2617 = vunpack.c.0.s8 %v2616
    %v2618 = vlaneseq
    %v2619 = vshrl.u32 %v2618, 7
    %v2620 = vsub.s32 %v2617, %v2619
    %v2621 = vrot.slane %v2607, %v2620
    %v2622 = vcombine.low %v2597, %v2605
    %v2623 = vcombine.high %v2597, %v2605
    %v2625 = vunpack.c.l.s4 1934713408
    %v2626 = vunpack.c.0.s8 %v2625
    %v2627 = vlaneseq
    %v2628 = vshrl.u32 %v2627, 7
    %v2629 = vsub.s32 %v2626, %v2628
    %v2630 = vrot.slane %v2622, %v2629
    %v2632 = vunpack.c.l.s4 1934713408
    %v2633 = vunpack.c.0.s8 %v2632
    %v2634 = vlaneseq
    %v2635 = vshrl.u32 %v2634, 7
    %v2636 = vsub.s32 %v2633, %v2635
    %v2637 = vrot.slane %v2623, %v2636
    %v2638 = vcombine.low %v2614, %v2630
    %v2639 = vcombine.high %v2614, %v2630
    %v2640 = vcombine.low %v2621, %v2637
    %v2641 = vcombine.high %v2621, %v2637
    %v2643 = vsel %vm2261, %v2342, 0
    %v2646 = vsel %vm2261, %v2343, 0
    %2648 = vmatprep.subr.mxu0 0.0
    %2649 = vmatpush1.msra.mxu0 0.0
    %2650 = vmatprep.subr.mxu0 0.0
    %2651 = vmatpush1.msra.mxu0 0.0
    %2652 = vmatprep.subr.mxu0 0.0
    %2653 = vmatpush1.msra.mxu0 0.0
    %2654 = vmatprep.subr.mxu0 0.0
    %2655 = vmatpush1.msra.mxu0 0.0
    %2656 = vmatprep.subr.mxu0 0.0
    %2657 = vmatpush1.msra.mxu0 0.0
    %2658 = vmatprep.subr.mxu0 0.0
    %2659 = vmatpush1.msra.mxu0 0.0
    %2660 = vmatprep.subr.mxu0 0.0
    %2661 = vmatpush1.msra.mxu0 0.0
    %2662 = vmatprep.subr.mxu0 0.0
    %2663 = vmatpush1.msra.mxu0 0.0
    %2664 = vmatprep.subr.mxu0 0.0
    %2665 = vmatpush1.msra.mxu0 0.0
    %2666 = vmatprep.subr.mxu0 0.0
    %2667 = vmatpush1.msra.mxu0 0.0
    %2668 = vmatprep.subr.mxu0 0.0
    %2669 = vmatpush1.msra.mxu0 0.0
    %2670 = vmatprep.subr.mxu0 0.0
    %2671 = vmatpush1.msra.mxu0 0.0
    %2672 = vmatprep.subr.mxu0 0.0
    %2673 = vmatpush1.msra.mxu0 0.0
    %2674 = vmatprep.subr.mxu0 0.0
    %2675 = vmatpush1.msra.mxu0 0.0
    %2676 = vmatprep.subr.mxu0 0.0
    %2677 = vmatpush1.msra.mxu0 %v2638
    %2678 = vmatprep.subr.mxu0 0.0
    %2679 = vmatpush1.msra.mxu0 %v2570
    %2680 = vmatprep.subr.mxu0 0.0
    %2681 = vmatpush2.msra.mxu0 0.0
    %2682 = vmatprep.subr.mxu0 0.0
    %2683 = vmatpush2.msra.mxu0 0.0
    %2684 = vmatprep.subr.mxu0 0.0
    %2685 = vmatpush2.msra.mxu0 0.0
    %2686 = vmatprep.subr.mxu0 0.0
    %2687 = vmatpush2.msra.mxu0 0.0
    %2688 = vmatprep.subr.mxu0 0.0
    %2689 = vmatpush2.msra.mxu0 0.0
    %2690 = vmatprep.subr.mxu0 0.0
    %2691 = vmatpush2.msra.mxu0 0.0
    %2692 = vmatprep.subr.mxu0 0.0
    %2693 = vmatpush2.msra.mxu0 0.0
    %2694 = vmatprep.subr.mxu0 0.0
    %2695 = vmatpush2.msra.mxu0 0.0
    %2696 = vmatprep.subr.mxu0 0.0
    %2697 = vmatpush2.msra.mxu0 0.0
    %2698 = vmatprep.subr.mxu0 0.0
    %2699 = vmatpush2.msra.mxu0 0.0
    %2700 = vmatprep.subr.mxu0 0.0
    %2701 = vmatpush2.msra.mxu0 0.0
    %2702 = vmatprep.subr.mxu0 0.0
    %2703 = vmatpush2.msra.mxu0 0.0
    %2704 = vmatprep.subr.mxu0 0.0
    %2705 = vmatpush2.msra.mxu0 0.0
    %2706 = vmatprep.subr.mxu0 0.0
    %2707 = vmatpush2.msra.mxu0 0.0
    %2708 = vmatprep.subr.mxu0 0.0
    %2709 = vmatpush2.msra.mxu0 0.0
    %2710 = vmatprep.subr.mxu0 0.0
    %2711 = vmatpush2.msra.mxu0 0.0
    %2712 = vmatprep.mubr.f32.mxu0 0.0
    %2713 = vmatmul.mubr.f32.gmra.mxu0 %v2643
    %v2714 = vpop.f32.mrf.mxu0
    %v2715 = vadd.f32 0.0, %v2714
    %v2716 = vpop.f32.mrf.mxu0
    %2717 = vmatprep.mubr.f32.mxu0 0.0
    %2718 = vmatmul.mubr.f32.gmra.mxu0 %v2646
    %v2719 = vpop.f32.mrf.mxu0
    %v2720 = vadd.f32 0.0, %v2719
    %v2721 = vpop.f32.mrf.mxu0
    %2722 = vdwg.mxu0
    %v2724 = vsel %vm2261, %v2344, 0
    %v2727 = vsel %vm2261, %v2345, 0
    %2729 = vmatprep.subr.mxu0 0.0
    %2730 = vmatpush1.msra.mxu0 0.0
    %2731 = vmatprep.subr.mxu0 0.0
    %2732 = vmatpush1.msra.mxu0 0.0
    %2733 = vmatprep.subr.mxu0 0.0
    %2734 = vmatpush1.msra.mxu0 0.0
    %2735 = vmatprep.subr.mxu0 0.0
    %2736 = vmatpush1.msra.mxu0 0.0
    %2737 = vmatprep.subr.mxu0 0.0
    %2738 = vmatpush1.msra.mxu0 0.0
    %2739 = vmatprep.subr.mxu0 0.0
    %2740 = vmatpush1.msra.mxu0 0.0
    %2741 = vmatprep.subr.mxu0 0.0
    %2742 = vmatpush1.msra.mxu0 0.0
    %2743 = vmatprep.subr.mxu0 0.0
    %2744 = vmatpush1.msra.mxu0 0.0
    %2745 = vmatprep.subr.mxu0 0.0
    %2746 = vmatpush1.msra.mxu0 0.0
    %2747 = vmatprep.subr.mxu0 0.0
    %2748 = vmatpush1.msra.mxu0 0.0
    %2749 = vmatprep.subr.mxu0 0.0
    %2750 = vmatpush1.msra.mxu0 0.0
    %2751 = vmatprep.subr.mxu0 0.0
    %2752 = vmatpush1.msra.mxu0 0.0
    %2753 = vmatprep.subr.mxu0 0.0
    %2754 = vmatpush1.msra.mxu0 0.0
    %2755 = vmatprep.subr.mxu0 0.0
    %2756 = vmatpush1.msra.mxu0 0.0
    %2757 = vmatprep.subr.mxu0 0.0
    %2758 = vmatpush1.msra.mxu0 %v2639
    %2759 = vmatprep.subr.mxu0 0.0
    %2760 = vmatpush1.msra.mxu0 %v2571
    %2761 = vmatprep.subr.mxu0 0.0
    %2762 = vmatpush2.msra.mxu0 0.0
    %2763 = vmatprep.subr.mxu0 0.0
    %2764 = vmatpush2.msra.mxu0 0.0
    %2765 = vmatprep.subr.mxu0 0.0
    %2766 = vmatpush2.msra.mxu0 0.0
    %2767 = vmatprep.subr.mxu0 0.0
    %2768 = vmatpush2.msra.mxu0 0.0
    %2769 = vmatprep.subr.mxu0 0.0
    %2770 = vmatpush2.msra.mxu0 0.0
    %2771 = vmatprep.subr.mxu0 0.0
    %2772 = vmatpush2.msra.mxu0 0.0
    %2773 = vmatprep.subr.mxu0 0.0
    %2774 = vmatpush2.msra.mxu0 0.0
    %2775 = vmatprep.subr.mxu0 0.0
    %2776 = vmatpush2.msra.mxu0 0.0
    %2777 = vmatprep.subr.mxu0 0.0
    %2778 = vmatpush2.msra.mxu0 0.0
    %2779 = vmatprep.subr.mxu0 0.0
    %2780 = vmatpush2.msra.mxu0 0.0
    %2781 = vmatprep.subr.mxu0 0.0
    %2782 = vmatpush2.msra.mxu0 0.0
    %2783 = vmatprep.subr.mxu0 0.0
    %2784 = vmatpush2.msra.mxu0 0.0
    %2785 = vmatprep.subr.mxu0 0.0
    %2786 = vmatpush2.msra.mxu0 0.0
    %2787 = vmatprep.subr.mxu0 0.0
    %2788 = vmatpush2.msra.mxu0 0.0
    %2789 = vmatprep.subr.mxu0 0.0
    %2790 = vmatpush2.msra.mxu0 0.0
    %2791 = vmatprep.subr.mxu0 0.0
    %2792 = vmatpush2.msra.mxu0 0.0
    %2793 = vmatprep.mubr.f32.mxu0 0.0
    %2794 = vmatmul.mubr.f32.gmra.mxu0 %v2724
    %v2795 = vpop.f32.mrf.mxu0
    %v2796 = vadd.f32 0.0, %v2795
    %v2797 = vpop.f32.mrf.mxu0
    %2798 = vmatprep.mubr.f32.mxu0 0.0
    %2799 = vmatmul.mubr.f32.gmra.mxu0 %v2727
    %v2800 = vpop.f32.mrf.mxu0
    %v2801 = vadd.f32 0.0, %v2800
    %v2802 = vpop.f32.mrf.mxu0
    %2803 = vdwg.mxu0
    %v2805 = vsel %vm2261, %v2346, 0
    %v2808 = vsel %vm2261, %v2347, 0
    %2810 = vmatprep.subr.mxu0 0.0
    %2811 = vmatpush1.msra.mxu0 0.0
    %2812 = vmatprep.subr.mxu0 0.0
    %2813 = vmatpush1.msra.mxu0 0.0
    %2814 = vmatprep.subr.mxu0 0.0
    %2815 = vmatpush1.msra.mxu0 0.0
    %2816 = vmatprep.subr.mxu0 0.0
    %2817 = vmatpush1.msra.mxu0 0.0
    %2818 = vmatprep.subr.mxu0 0.0
    %2819 = vmatpush1.msra.mxu0 0.0
    %2820 = vmatprep.subr.mxu0 0.0
    %2821 = vmatpush1.msra.mxu0 0.0
    %2822 = vmatprep.subr.mxu0 0.0
    %2823 = vmatpush1.msra.mxu0 0.0
    %2824 = vmatprep.subr.mxu0 0.0
    %2825 = vmatpush1.msra.mxu0 0.0
    %2826 = vmatprep.subr.mxu0 0.0
    %2827 = vmatpush1.msra.mxu0 0.0
    %2828 = vmatprep.subr.mxu0 0.0
    %2829 = vmatpush1.msra.mxu0 0.0
    %2830 = vmatprep.subr.mxu0 0.0
    %2831 = vmatpush1.msra.mxu0 0.0
    %2832 = vmatprep.subr.mxu0 0.0
    %2833 = vmatpush1.msra.mxu0 0.0
    %2834 = vmatprep.subr.mxu0 0.0
    %2835 = vmatpush1.msra.mxu0 0.0
    %2836 = vmatprep.subr.mxu0 0.0
    %2837 = vmatpush1.msra.mxu0 0.0
    %2838 = vmatprep.subr.mxu0 0.0
    %2839 = vmatpush1.msra.mxu0 %v2640
    %2840 = vmatprep.subr.mxu0 0.0
    %2841 = vmatpush1.msra.mxu0 %v2572
    %2842 = vmatprep.subr.mxu0 0.0
    %2843 = vmatpush2.msra.mxu0 0.0
    %2844 = vmatprep.subr.mxu0 0.0
    %2845 = vmatpush2.msra.mxu0 0.0
    %2846 = vmatprep.subr.mxu0 0.0
    %2847 = vmatpush2.msra.mxu0 0.0
    %2848 = vmatprep.subr.mxu0 0.0
    %2849 = vmatpush2.msra.mxu0 0.0
    %2850 = vmatprep.subr.mxu0 0.0
    %2851 = vmatpush2.msra.mxu0 0.0
    %2852 = vmatprep.subr.mxu0 0.0
    %2853 = vmatpush2.msra.mxu0 0.0
    %2854 = vmatprep.subr.mxu0 0.0
    %2855 = vmatpush2.msra.mxu0 0.0
    %2856 = vmatprep.subr.mxu0 0.0
    %2857 = vmatpush2.msra.mxu0 0.0
    %2858 = vmatprep.subr.mxu0 0.0
    %2859 = vmatpush2.msra.mxu0 0.0
    %2860 = vmatprep.subr.mxu0 0.0
    %2861 = vmatpush2.msra.mxu0 0.0
    %2862 = vmatprep.subr.mxu0 0.0
    %2863 = vmatpush2.msra.mxu0 0.0
    %2864 = vmatprep.subr.mxu0 0.0
    %2865 = vmatpush2.msra.mxu0 0.0
    %2866 = vmatprep.subr.mxu0 0.0
    %2867 = vmatpush2.msra.mxu0 0.0
    %2868 = vmatprep.subr.mxu0 0.0
    %2869 = vmatpush2.msra.mxu0 0.0
    %2870 = vmatprep.subr.mxu0 0.0
    %2871 = vmatpush2.msra.mxu0 0.0
    %2872 = vmatprep.subr.mxu0 0.0
    %2873 = vmatpush2.msra.mxu0 0.0
    %2874 = vmatprep.mubr.f32.mxu0 0.0
    %2875 = vmatmul.mubr.f32.gmra.mxu0 %v2805
    %v2876 = vpop.f32.mrf.mxu0
    %v2877 = vadd.f32 0.0, %v2876
    %v2878 = vpop.f32.mrf.mxu0
    %2879 = vmatprep.mubr.f32.mxu0 0.0
    %2880 = vmatmul.mubr.f32.gmra.mxu0 %v2808
    %v2881 = vpop.f32.mrf.mxu0
    %v2882 = vadd.f32 0.0, %v2881
    %v2883 = vpop.f32.mrf.mxu0
    %2884 = vdwg.mxu0
    %v2886 = vsel %vm2261, %v2348, 0
    %v2889 = vsel %vm2261, %v2349, 0
    %2891 = vmatprep.subr.mxu0 0.0
    %2892 = vmatpush1.msra.mxu0 0.0
    %2893 = vmatprep.subr.mxu0 0.0
    %2894 = vmatpush1.msra.mxu0 0.0
    %2895 = vmatprep.subr.mxu0 0.0
    %2896 = vmatpush1.msra.mxu0 0.0
    %2897 = vmatprep.subr.mxu0 0.0
    %2898 = vmatpush1.msra.mxu0 0.0
    %2899 = vmatprep.subr.mxu0 0.0
    %2900 = vmatpush1.msra.mxu0 0.0
    %2901 = vmatprep.subr.mxu0 0.0
    %2902 = vmatpush1.msra.mxu0 0.0
    %2903 = vmatprep.subr.mxu0 0.0
    %2904 = vmatpush1.msra.mxu0 0.0
    %2905 = vmatprep.subr.mxu0 0.0
    %2906 = vmatpush1.msra.mxu0 0.0
    %2907 = vmatprep.subr.mxu0 0.0
    %2908 = vmatpush1.msra.mxu0 0.0
    %2909 = vmatprep.subr.mxu0 0.0
    %2910 = vmatpush1.msra.mxu0 0.0
    %2911 = vmatprep.subr.mxu0 0.0
    %2912 = vmatpush1.msra.mxu0 0.0
    %2913 = vmatprep.subr.mxu0 0.0
    %2914 = vmatpush1.msra.mxu0 0.0
    %2915 = vmatprep.subr.mxu0 0.0
    %2916 = vmatpush1.msra.mxu0 0.0
    %2917 = vmatprep.subr.mxu0 0.0
    %2918 = vmatpush1.msra.mxu0 0.0
    %2919 = vmatprep.subr.mxu0 0.0
    %2920 = vmatpush1.msra.mxu0 %v2641
    %2921 = vmatprep.subr.mxu0 0.0
    %2922 = vmatpush1.msra.mxu0 %v2573
    %2923 = vmatprep.subr.mxu0 0.0
    %2924 = vmatpush2.msra.mxu0 0.0
    %2925 = vmatprep.subr.mxu0 0.0
    %2926 = vmatpush2.msra.mxu0 0.0
    %2927 = vmatprep.subr.mxu0 0.0
    %2928 = vmatpush2.msra.mxu0 0.0
    %2929 = vmatprep.subr.mxu0 0.0
    %2930 = vmatpush2.msra.mxu0 0.0
    %2931 = vmatprep.subr.mxu0 0.0
    %2932 = vmatpush2.msra.mxu0 0.0
    %2933 = vmatprep.subr.mxu0 0.0
    %2934 = vmatpush2.msra.mxu0 0.0
    %2935 = vmatprep.subr.mxu0 0.0
    %2936 = vmatpush2.msra.mxu0 0.0
    %2937 = vmatprep.subr.mxu0 0.0
    %2938 = vmatpush2.msra.mxu0 0.0
    %2939 = vmatprep.subr.mxu0 0.0
    %2940 = vmatpush2.msra.mxu0 0.0
    %2941 = vmatprep.subr.mxu0 0.0
    %2942 = vmatpush2.msra.mxu0 0.0
    %2943 = vmatprep.subr.mxu0 0.0
    %2944 = vmatpush2.msra.mxu0 0.0
    %2945 = vmatprep.subr.mxu0 0.0
    %2946 = vmatpush2.msra.mxu0 0.0
    %2947 = vmatprep.subr.mxu0 0.0
    %2948 = vmatpush2.msra.mxu0 0.0
    %2949 = vmatprep.subr.mxu0 0.0
    %2950 = vmatpush2.msra.mxu0 0.0
    %2951 = vmatprep.subr.mxu0 0.0
    %2952 = vmatpush2.msra.mxu0 0.0
    %2953 = vmatprep.subr.mxu0 0.0
    %2954 = vmatpush2.msra.mxu0 0.0
    %2955 = vmatprep.mubr.f32.mxu0 0.0
    %2956 = vmatmul.mubr.f32.gmra.mxu0 %v2886
    %v2957 = vpop.f32.mrf.mxu0
    %v2958 = vadd.f32 0.0, %v2957
    %v2959 = vpop.f32.mrf.mxu0
    %2960 = vmatprep.mubr.f32.mxu0 0.0
    %2961 = vmatmul.mubr.f32.gmra.mxu0 %v2889
    %v2962 = vpop.f32.mrf.mxu0
    %v2963 = vadd.f32 0.0, %v2962
    %v2964 = vpop.f32.mrf.mxu0
    %2965 = vdwg.mxu0
    %v2966 = vcombine.low %v2715, %v2877
    %v2967 = vcombine.high %v2715, %v2877
    %v2969 = vunpack.c.l.s4 1983009808
    %v2970 = vunpack.c.0.s8 %v2969
    %v2971 = vlaneseq
    %v2972 = vshrl.u32 %v2971, 7
    %v2973 = vsub.s32 %v2970, %v2972
    %v2974 = vrot.slane %v2966, %v2973
    %v2976 = vunpack.c.l.s4 1983009808
    %v2977 = vunpack.c.0.s8 %v2976
    %v2978 = vlaneseq
    %v2979 = vshrl.u32 %v2978, 7
    %v2980 = vsub.s32 %v2977, %v2979
    %v2981 = vrot.slane %v2967, %v2980
    %v2982 = vcombine.low %v2796, %v2958
    %v2983 = vcombine.high %v2796, %v2958
    %v2985 = vunpack.c.l.s4 1983009808
    %v2986 = vunpack.c.0.s8 %v2985
    %v2987 = vlaneseq
    %v2988 = vshrl.u32 %v2987, 7
    %v2989 = vsub.s32 %v2986, %v2988
    %v2990 = vrot.slane %v2982, %v2989
    %v2992 = vunpack.c.l.s4 1983009808
    %v2993 = vunpack.c.0.s8 %v2992
    %v2994 = vlaneseq
    %v2995 = vshrl.u32 %v2994, 7
    %v2996 = vsub.s32 %v2993, %v2995
    %v2997 = vrot.slane %v2983, %v2996
    %v2998 = vcombine.low %v2974, %v2990
    %v2999 = vcombine.high %v2974, %v2990
    %v3001 = vunpack.c.l.s4 1934713408
    %v3002 = vunpack.c.0.s8 %v3001
    %v3003 = vlaneseq
    %v3004 = vshrl.u32 %v3003, 7
    %v3005 = vsub.s32 %v3002, %v3004
    %v3006 = vrot.slane %v2998, %v3005
    %v3008 = vunpack.c.l.s4 1934713408
    %v3009 = vunpack.c.0.s8 %v3008
    %v3010 = vlaneseq
    %v3011 = vshrl.u32 %v3010, 7
    %v3012 = vsub.s32 %v3009, %v3011
    %v3013 = vrot.slane %v2999, %v3012
    %v3014 = vcombine.low %v2981, %v2997
    %v3015 = vcombine.high %v2981, %v2997
    %v3017 = vunpack.c.l.s4 1934713408
    %v3018 = vunpack.c.0.s8 %v3017
    %v3019 = vlaneseq
    %v3020 = vshrl.u32 %v3019, 7
    %v3021 = vsub.s32 %v3018, %v3020
    %v3022 = vrot.slane %v3014, %v3021
    %v3024 = vunpack.c.l.s4 1934713408
    %v3025 = vunpack.c.0.s8 %v3024
    %v3026 = vlaneseq
    %v3027 = vshrl.u32 %v3026, 7
    %v3028 = vsub.s32 %v3025, %v3027
    %v3029 = vrot.slane %v3015, %v3028
    %v3030 = vcombine.high %v3006, 0.0
    %v3031 = vcombine.high %v3013, 0.0
    %v3032 = vcombine.high %v3022, 0.0
    %v3033 = vcombine.high %v3029, 0.0
    %v3034 = vcombine.low %v2720, %v2882
    %v3035 = vcombine.high %v2720, %v2882
    %v3037 = vunpack.c.l.s4 1983009808
    %v3038 = vunpack.c.0.s8 %v3037
    %v3039 = vlaneseq
    %v3040 = vshrl.u32 %v3039, 7
    %v3041 = vsub.s32 %v3038, %v3040
    %v3042 = vrot.slane %v3034, %v3041
    %v3044 = vunpack.c.l.s4 1983009808
    %v3045 = vunpack.c.0.s8 %v3044
    %v3046 = vlaneseq
    %v3047 = vshrl.u32 %v3046, 7
    %v3048 = vsub.s32 %v3045, %v3047
    %v3049 = vrot.slane %v3035, %v3048
    %v3050 = vcombine.low %v2801, %v2963
    %v3051 = vcombine.high %v2801, %v2963
    %v3053 = vunpack.c.l.s4 1983009808
    %v3054 = vunpack.c.0.s8 %v3053
    %v3055 = vlaneseq
    %v3056 = vshrl.u32 %v3055, 7
    %v3057 = vsub.s32 %v3054, %v3056
    %v3058 = vrot.slane %v3050, %v3057
    %v3060 = vunpack.c.l.s4 1983009808
    %v3061 = vunpack.c.0.s8 %v3060
    %v3062 = vlaneseq
    %v3063 = vshrl.u32 %v3062, 7
    %v3064 = vsub.s32 %v3061, %v3063
    %v3065 = vrot.slane %v3051, %v3064
    %v3066 = vcombine.low %v3042, %v3058
    %v3067 = vcombine.high %v3042, %v3058
    %v3069 = vunpack.c.l.s4 1934713408
    %v3070 = vunpack.c.0.s8 %v3069
    %v3071 = vlaneseq
    %v3072 = vshrl.u32 %v3071, 7
    %v3073 = vsub.s32 %v3070, %v3072
    %v3074 = vrot.slane %v3066, %v3073
    %v3076 = vunpack.c.l.s4 1934713408
    %v3077 = vunpack.c.0.s8 %v3076
    %v3078 = vlaneseq
    %v3079 = vshrl.u32 %v3078, 7
    %v3080 = vsub.s32 %v3077, %v3079
    %v3081 = vrot.slane %v3067, %v3080
    %v3082 = vcombine.low %v3049, %v3065
    %v3083 = vcombine.high %v3049, %v3065
    %v3085 = vunpack.c.l.s4 1934713408
    %v3086 = vunpack.c.0.s8 %v3085
    %v3087 = vlaneseq
    %v3088 = vshrl.u32 %v3087, 7
    %v3089 = vsub.s32 %v3086, %v3088
    %v3090 = vrot.slane %v3082, %v3089
    %v3092 = vunpack.c.l.s4 1934713408
    %v3093 = vunpack.c.0.s8 %v3092
    %v3094 = vlaneseq
    %v3095 = vshrl.u32 %v3094, 7
    %v3096 = vsub.s32 %v3093, %v3095
    %v3097 = vrot.slane %v3083, %v3096
    %v3098 = vcombine.high %v3074, 0.0
    %v3099 = vcombine.high %v3081, 0.0
    %v3100 = vcombine.high %v3090, 0.0
    %v3101 = vcombine.high %v3097, 0.0
    %v3102 = vcombine.low %v3006, %v3013
    %v3104 = vunpack.c.l.s4 1983009808
    %v3105 = vunpack.c.0.s8 %v3104
    %v3106 = vlaneseq
    %v3107 = vshrl.u32 %v3106, 7
    %v3108 = vsub.s32 %v3105, %v3107
    %v3109 = vrot.slane %v3102, %v3108
    %v3110 = vcombine.low %v3030, %v3031
    %v3112 = vunpack.c.l.s4 1983009808
    %v3113 = vunpack.c.0.s8 %v3112
    %v3114 = vlaneseq
    %v3115 = vshrl.u32 %v3114, 7
    %v3116 = vsub.s32 %v3113, %v3115
    %v3117 = vrot.slane %v3110, %v3116
    %v3118 = vcombine.low %v3022, %v3029
    %v3120 = vunpack.c.l.s4 1983009808
    %v3121 = vunpack.c.0.s8 %v3120
    %v3122 = vlaneseq
    %v3123 = vshrl.u32 %v3122, 7
    %v3124 = vsub.s32 %v3121, %v3123
    %v3125 = vrot.slane %v3118, %v3124
    %v3126 = vcombine.low %v3032, %v3033
    %v3128 = vunpack.c.l.s4 1983009808
    %v3129 = vunpack.c.0.s8 %v3128
    %v3130 = vlaneseq
    %v3131 = vshrl.u32 %v3130, 7
    %v3132 = vsub.s32 %v3129, %v3131
    %v3133 = vrot.slane %v3126, %v3132
    %v3134 = vcombine.low %v3109, %v3117
    %v3135 = vcombine.high %v3109, %v3117
    %v3137 = vunpack.c.l.s4 1934713408
    %v3138 = vunpack.c.0.s8 %v3137
    %v3139 = vlaneseq
    %v3140 = vshrl.u32 %v3139, 7
    %v3141 = vsub.s32 %v3138, %v3140
    %v3142 = vrot.slane %v3134, %v3141
    %v3144 = vunpack.c.l.s4 1934713408
    %v3145 = vunpack.c.0.s8 %v3144
    %v3146 = vlaneseq
    %v3147 = vshrl.u32 %v3146, 7
    %v3148 = vsub.s32 %v3145, %v3147
    %v3149 = vrot.slane %v3135, %v3148
    %v3150 = vcombine.low %v3125, %v3133
    %v3151 = vcombine.high %v3125, %v3133
    %v3153 = vunpack.c.l.s4 1934713408
    %v3154 = vunpack.c.0.s8 %v3153
    %v3155 = vlaneseq
    %v3156 = vshrl.u32 %v3155, 7
    %v3157 = vsub.s32 %v3154, %v3156
    %v3158 = vrot.slane %v3150, %v3157
    %v3160 = vunpack.c.l.s4 1934713408
    %v3161 = vunpack.c.0.s8 %v3160
    %v3162 = vlaneseq
    %v3163 = vshrl.u32 %v3162, 7
    %v3164 = vsub.s32 %v3161, %v3163
    %v3165 = vrot.slane %v3151, %v3164
    %v3166 = vcombine.low %v3142, %v3158
    %v3167 = vcombine.high %v3142, %v3158
    %v3168 = vcombine.low %v3149, %v3165
    %v3169 = vcombine.high %v3149, %v3165
    %v3170 = vcombine.low %v3074, %v3081
    %v3172 = vunpack.c.l.s4 1983009808
    %v3173 = vunpack.c.0.s8 %v3172
    %v3174 = vlaneseq
    %v3175 = vshrl.u32 %v3174, 7
    %v3176 = vsub.s32 %v3173, %v3175
    %v3177 = vrot.slane %v3170, %v3176
    %v3178 = vcombine.low %v3098, %v3099
    %v3180 = vunpack.c.l.s4 1983009808
    %v3181 = vunpack.c.0.s8 %v3180
    %v3182 = vlaneseq
    %v3183 = vshrl.u32 %v3182, 7
    %v3184 = vsub.s32 %v3181, %v3183
    %v3185 = vrot.slane %v3178, %v3184
    %v3186 = vcombine.low %v3090, %v3097
    %v3188 = vunpack.c.l.s4 1983009808
    %v3189 = vunpack.c.0.s8 %v3188
    %v3190 = vlaneseq
    %v3191 = vshrl.u32 %v3190, 7
    %v3192 = vsub.s32 %v3189, %v3191
    %v3193 = vrot.slane %v3186, %v3192
    %v3194 = vcombine.low %v3100, %v3101
    %v3196 = vunpack.c.l.s4 1983009808
    %v3197 = vunpack.c.0.s8 %v3196
    %v3198 = vlaneseq
    %v3199 = vshrl.u32 %v3198, 7
    %v3200 = vsub.s32 %v3197, %v3199
    %v3201 = vrot.slane %v3194, %v3200
    %v3202 = vcombine.low %v3177, %v3185
    %v3203 = vcombine.high %v3177, %v3185
    %v3205 = vunpack.c.l.s4 1934713408
    %v3206 = vunpack.c.0.s8 %v3205
    %v3207 = vlaneseq
    %v3208 = vshrl.u32 %v3207, 7
    %v3209 = vsub.s32 %v3206, %v3208
    %v3210 = vrot.slane %v3202, %v3209
    %v3212 = vunpack.c.l.s4 1934713408
    %v3213 = vunpack.c.0.s8 %v3212
    %v3214 = vlaneseq
    %v3215 = vshrl.u32 %v3214, 7
    %v3216 = vsub.s32 %v3213, %v3215
    %v3217 = vrot.slane %v3203, %v3216
    %v3218 = vcombine.low %v3193, %v3201
    %v3219 = vcombine.high %v3193, %v3201
    %v3221 = vunpack.c.l.s4 1934713408
    %v3222 = vunpack.c.0.s8 %v3221
    %v3223 = vlaneseq
    %v3224 = vshrl.u32 %v3223, 7
    %v3225 = vsub.s32 %v3222, %v3224
    %v3226 = vrot.slane %v3218, %v3225
    %v3228 = vunpack.c.l.s4 1934713408
    %v3229 = vunpack.c.0.s8 %v3228
    %v3230 = vlaneseq
    %v3231 = vshrl.u32 %v3230, 7
    %v3232 = vsub.s32 %v3229, %v3231
    %v3233 = vrot.slane %v3219, %v3232
    %v3234 = vcombine.low %v3210, %v3226
    %v3235 = vcombine.high %v3210, %v3226
    %v3236 = vcombine.low %v3217, %v3233
    %v3237 = vcombine.high %v3217, %v3233
    %3240 = vrot.lane.b32.xlu0 %v3167, 16
    %v3241 = vpop.permute.xlu0 %3240
    %3242 = vrot.lane.b32.xlu0 %v3235, 16
    %v3243 = vpop.permute.xlu0 %3242
    %3248 = vrot.lane.b32.xlu0 %v3168, 32
    %v3249 = vpop.permute.xlu0 %3248
    %3250 = vrot.lane.b32.xlu0 %v3236, 32
    %v3251 = vpop.permute.xlu0 %3250
    %3256 = vrot.lane.b32.xlu0 %v3169, 48
    %v3257 = vpop.permute.xlu0 %3256
    %3258 = vrot.lane.b32.xlu0 %v3237, 48
    %v3259 = vpop.permute.xlu0 %3258
    %v3262 = vsel %vm2261, %v3166, %v3241
    %v3263 = vsel %vm2261, %v3234, %v3243
    %vm3264 = vcmask 261120
    %v3265 = vsel %vm3264, %v3262, %v3249
    %v3266 = vsel %vm3264, %v3263, %v3251
    %vm3267 = vcmask 392192
    %v3268 = vsel %vm3267, %v3265, %v3257
    %v3269 = vsel %vm3267, %v3266, %v3259
    %v3270 = vld [vmem:[#allocation5] sm:$0xff]
    %v3271 = vld [vmem:[#allocation5 + $0x8] sm:$0xff]
    %v3272 = vld [vmem:[#allocation5 + $0x10] sm:$0xff]
    %v3273 = vld [vmem:[#allocation5 + $0x18] sm:$0xff]
    %v3274 = vld [vmem:[#allocation5 + $0x20] sm:$0xff]
    %v3275 = vld [vmem:[#allocation5 + $0x28] sm:$0xff]
    %v3276 = vld [vmem:[#allocation5 + $0x30] sm:$0xff]
    %v3277 = vld [vmem:[#allocation5 + $0x38] sm:$0xff]
    %v3279 = vsel %vm109, %v3268, 0
    %v3282 = vsel %vm109, %v3269, 0
    %3284 = vmatprep.subr.mxu0 0.0
    %3285 = vmatpush1.msra.mxu0 0.0
    %3286 = vmatprep.subr.mxu0 0.0
    %3287 = vmatpush1.msra.mxu0 0.0
    %3288 = vmatprep.subr.mxu0 0.0
    %3289 = vmatpush1.msra.mxu0 0.0
    %3290 = vmatprep.subr.mxu0 0.0
    %3291 = vmatpush1.msra.mxu0 0.0
    %3292 = vmatprep.subr.mxu0 0.0
    %3293 = vmatpush1.msra.mxu0 0.0
    %3294 = vmatprep.subr.mxu0 0.0
    %3295 = vmatpush1.msra.mxu0 0.0
    %3296 = vmatprep.subr.mxu0 0.0
    %3297 = vmatpush1.msra.mxu0 0.0
    %3298 = vmatprep.subr.mxu0 0.0
    %3299 = vmatpush1.msra.mxu0 0.0
    %3300 = vmatprep.subr.mxu0 0.0
    %3301 = vmatpush1.msra.mxu0 %v3277
    %3302 = vmatprep.subr.mxu0 0.0
    %3303 = vmatpush1.msra.mxu0 %v3276
    %3304 = vmatprep.subr.mxu0 0.0
    %3305 = vmatpush1.msra.mxu0 %v3275
    %3306 = vmatprep.subr.mxu0 0.0
    %3307 = vmatpush1.msra.mxu0 %v3274
    %3308 = vmatprep.subr.mxu0 0.0
    %3309 = vmatpush1.msra.mxu0 %v3273
    %3310 = vmatprep.subr.mxu0 0.0
    %3311 = vmatpush1.msra.mxu0 %v3272
    %3312 = vmatprep.subr.mxu0 0.0
    %3313 = vmatpush1.msra.mxu0 %v3271
    %3314 = vmatprep.subr.mxu0 0.0
    %3315 = vmatpush1.msra.mxu0 %v3270
    %3316 = vmatprep.subr.mxu0 0.0
    %3317 = vmatpush2.msra.mxu0 0.0
    %3318 = vmatprep.subr.mxu0 0.0
    %3319 = vmatpush2.msra.mxu0 0.0
    %3320 = vmatprep.subr.mxu0 0.0
    %3321 = vmatpush2.msra.mxu0 0.0
    %3322 = vmatprep.subr.mxu0 0.0
    %3323 = vmatpush2.msra.mxu0 0.0
    %3324 = vmatprep.subr.mxu0 0.0
    %3325 = vmatpush2.msra.mxu0 0.0
    %3326 = vmatprep.subr.mxu0 0.0
    %3327 = vmatpush2.msra.mxu0 0.0
    %3328 = vmatprep.subr.mxu0 0.0
    %3329 = vmatpush2.msra.mxu0 0.0
    %3330 = vmatprep.subr.mxu0 0.0
    %3331 = vmatpush2.msra.mxu0 0.0
    %3332 = vmatprep.subr.mxu0 0.0
    %3333 = vmatpush2.msra.mxu0 0.0
    %3334 = vmatprep.subr.mxu0 0.0
    %3335 = vmatpush2.msra.mxu0 0.0
    %3336 = vmatprep.subr.mxu0 0.0
    %3337 = vmatpush2.msra.mxu0 0.0
    %3338 = vmatprep.subr.mxu0 0.0
    %3339 = vmatpush2.msra.mxu0 0.0
    %3340 = vmatprep.subr.mxu0 0.0
    %3341 = vmatpush2.msra.mxu0 0.0
    %3342 = vmatprep.subr.mxu0 0.0
    %3343 = vmatpush2.msra.mxu0 0.0
    %3344 = vmatprep.subr.mxu0 0.0
    %3345 = vmatpush2.msra.mxu0 0.0
    %3346 = vmatprep.subr.mxu0 0.0
    %3347 = vmatpush2.msra.mxu0 0.0
    %3348 = vmatprep.mubr.f32.mxu0 0.0
    %3349 = vmatmul.mubr.f32.gmra.mxu0 %v3279
    %v3350 = vpop.f32.mrf.mxu0
    %v3351 = vadd.f32 0.0, %v3350
    %v3352 = vpop.f32.mrf.mxu0
    %3353 = vmatprep.mubr.f32.mxu0 0.0
    %3354 = vmatmul.mubr.f32.gmra.mxu0 %v3282
    %v3355 = vpop.f32.mrf.mxu0
    %v3356 = vadd.f32 0.0, %v3355
    %v3357 = vpop.f32.mrf.mxu0
    %3358 = vdwg.mxu0
    %v3359 = vadd.f32 %v104, %v3351
    %v3360 = vadd.f32 %v105, %v3356
    %v3361 = vld [vmem:[%s2] sm:$0x1]
    %v3362 = vmul.f32 %v3359, %v3359
    %v3363 = vmul.f32 %v3360, %v3360
    %v3364 = vsel %vm109, %v3362, 0.0
    %3365 = vadd.xlane.f32.xlu0 %v3364
    %v3366 = vpop.xlane.xlu0 %3365
    %v3367 = vsel %vm109, %v3363, 0.0
    %3368 = vadd.xlane.f32.xlu0 %v3367
    %v3369 = vpop.xlane.xlu0 %3368
    %v3370 = vmul.f32 %v3366, %v116
    %v3371 = vmul.f32 %v3369, %v116
    %v3372 = vadd.f32 %v3370, 1e-05
    %v3373 = vadd.f32 %v3371, 1e-05
    %v3374 = vrsqrt.pop %v3372
    %v3375 = vrsqrt.pop %v3373
    %v3376 = vmul.f32 %v3359, %v3374
    %v3377 = vmul.f32 %v3360, %v3375
    %v3379 = vlaneseq
    %v3380 = vshrl.u32 %v3379, 7
    %v3381 = vsub.s32 0, %v3380
    %v3382 = vrot.slane %v3361, %v3381
    %v3384 = vmul.f32 %v3376, %v3382
    %v3385 = vmul.f32 %v3377, %v3382
    %v3386 = vld [vmem:[%s5] sm:$0xff]
    %v3387 = vld [vmem:[%s5 + $0x8] sm:$0xff]
    %v3388 = vld [vmem:[%s5 + $0x10] sm:$0xff]
    %v3389 = vld [vmem:[%s5 + $0x18] sm:$0xff]
    %v3390 = vld [vmem:[%s5 + $0x20] sm:$0xff]
    %v3391 = vld [vmem:[%s5 + $0x28] sm:$0xff]
    %v3392 = vld [vmem:[%s5 + $0x30] sm:$0xff]
    %v3393 = vld [vmem:[%s5 + $0x38] sm:$0xff]
    %v3394 = vld [vmem:[%s5 + $0x40] sm:$0xff]
    %v3395 = vld [vmem:[%s5 + $0x48] sm:$0xff]
    %v3396 = vld [vmem:[%s5 + $0x50] sm:$0xff]
    %v3397 = vld [vmem:[%s5 + $0x58] sm:$0xff]
    %v3398 = vld [vmem:[%s5 + $0x60] sm:$0xff]
    %v3399 = vld [vmem:[%s5 + $0x68] sm:$0xff]
    %v3400 = vld [vmem:[%s5 + $0x70] sm:$0xff]
    %v3401 = vld [vmem:[%s5 + $0x78] sm:$0xff]
    %v3402 = vld [vmem:[%s5 + $0x80] sm:$0xff]
    %v3403 = vld [vmem:[%s5 + $0x88] sm:$0xff]
    %v3404 = vld [vmem:[%s5 + $0x90] sm:$0xff]
    %v3405 = vld [vmem:[%s5 + $0x98] sm:$0xff]
    %v3406 = vld [vmem:[%s5 + $0xa0] sm:$0xff]
    %v3407 = vld [vmem:[%s5 + $0xa8] sm:$0xff]
    %v3408 = vld [vmem:[%s5 + $0xb0] sm:$0xff]
    %v3409 = vld [vmem:[%s5 + $0xb8] sm:$0xff]
    %v3411 = vsel %vm109, %v3384, 0
    %v3414 = vsel %vm109, %v3385, 0
    %3416 = vmatprep.subr.mxu0 0.0
    %3417 = vmatpush1.msra.mxu0 0.0
    %3418 = vmatprep.subr.mxu0 0.0
    %3419 = vmatpush1.msra.mxu0 0.0
    %3420 = vmatprep.subr.mxu0 0.0
    %3421 = vmatpush1.msra.mxu0 0.0
    %3422 = vmatprep.subr.mxu0 0.0
    %3423 = vmatpush1.msra.mxu0 0.0
    %3424 = vmatprep.subr.mxu0 0.0
    %3425 = vmatpush1.msra.mxu0 0.0
    %3426 = vmatprep.subr.mxu0 0.0
    %3427 = vmatpush1.msra.mxu0 0.0
    %3428 = vmatprep.subr.mxu0 0.0
    %3429 = vmatpush1.msra.mxu0 0.0
    %3430 = vmatprep.subr.mxu0 0.0
    %3431 = vmatpush1.msra.mxu0 0.0
    %3432 = vmatprep.subr.mxu0 %v3408
    %3433 = vmatpush1.msra.mxu0 %v3407
    %3434 = vmatprep.subr.mxu0 %v3405
    %3435 = vmatpush1.msra.mxu0 %v3404
    %3436 = vmatprep.subr.mxu0 %v3402
    %3437 = vmatpush1.msra.mxu0 %v3401
    %3438 = vmatprep.subr.mxu0 %v3399
    %3439 = vmatpush1.msra.mxu0 %v3398
    %3440 = vmatprep.subr.mxu0 %v3396
    %3441 = vmatpush1.msra.mxu0 %v3395
    %3442 = vmatprep.subr.mxu0 %v3393
    %3443 = vmatpush1.msra.mxu0 %v3392
    %3444 = vmatprep.subr.mxu0 %v3390
    %3445 = vmatpush1.msra.mxu0 %v3389
    %3446 = vmatprep.subr.mxu0 %v3387
    %3447 = vmatpush1.msra.mxu0 %v3386
    %3448 = vmatprep.subr.mxu0 0.0
    %3449 = vmatpush2.msra.mxu0 0.0
    %3450 = vmatprep.subr.mxu0 0.0
    %3451 = vmatpush2.msra.mxu0 0.0
    %3452 = vmatprep.subr.mxu0 0.0
    %3453 = vmatpush2.msra.mxu0 0.0
    %3454 = vmatprep.subr.mxu0 0.0
    %3455 = vmatpush2.msra.mxu0 0.0
    %3456 = vmatprep.subr.mxu0 0.0
    %3457 = vmatpush2.msra.mxu0 0.0
    %3458 = vmatprep.subr.mxu0 0.0
    %3459 = vmatpush2.msra.mxu0 0.0
    %3460 = vmatprep.subr.mxu0 0.0
    %3461 = vmatpush2.msra.mxu0 0.0
    %3462 = vmatprep.subr.mxu0 0.0
    %3463 = vmatpush2.msra.mxu0 0.0
    %3464 = vmatprep.subr.mxu0 0.0
    %3465 = vmatpush2.msra.mxu0 0.0
    %3466 = vmatprep.subr.mxu0 0.0
    %3467 = vmatpush2.msra.mxu0 0.0
    %3468 = vmatprep.subr.mxu0 0.0
    %3469 = vmatpush2.msra.mxu0 0.0
    %3470 = vmatprep.subr.mxu0 0.0
    %3471 = vmatpush2.msra.mxu0 0.0
    %3472 = vmatprep.subr.mxu0 0.0
    %3473 = vmatpush2.msra.mxu0 0.0
    %3474 = vmatprep.subr.mxu0 0.0
    %3475 = vmatpush2.msra.mxu0 0.0
    %3476 = vmatprep.subr.mxu0 0.0
    %3477 = vmatpush2.msra.mxu0 0.0
    %3478 = vmatprep.subr.mxu0 0.0
    %3479 = vmatpush2.msra.mxu0 0.0
    %3480 = vmatprep.mubr.f32.mxu0 0.0
    %3481 = vmatmul.mubr.f32.gmra.mxu0 %v3411
    %v3482 = vpop.f32.mrf.mxu0
    %v3483 = vadd.f32 0.0, %v3482
    %v3484 = vpop.f32.mrf.mxu0
    %v3485 = vadd.f32 0.0, %v3484
    %3486 = vmatprep.mubr.f32.mxu0 0.0
    %3487 = vmatmul.mubr.f32.gmra.mxu0 %v3414
    %v3488 = vpop.f32.mrf.mxu0
    %v3489 = vadd.f32 0.0, %v3488
    %v3490 = vpop.f32.mrf.mxu0
    %v3491 = vadd.f32 0.0, %v3490
    %3492 = vdwg.mxu0
    %3493 = vmatprep.subr.mxu0 0.0
    %3494 = vmatpush1.msra.mxu0 0.0
    %3495 = vmatprep.subr.mxu0 0.0
    %3496 = vmatpush1.msra.mxu0 0.0
    %3497 = vmatprep.subr.mxu0 0.0
    %3498 = vmatpush1.msra.mxu0 0.0
    %3499 = vmatprep.subr.mxu0 0.0
    %3500 = vmatpush1.msra.mxu0 0.0
    %3501 = vmatprep.subr.mxu0 0.0
    %3502 = vmatpush1.msra.mxu0 0.0
    %3503 = vmatprep.subr.mxu0 0.0
    %3504 = vmatpush1.msra.mxu0 0.0
    %3505 = vmatprep.subr.mxu0 0.0
    %3506 = vmatpush1.msra.mxu0 0.0
    %3507 = vmatprep.subr.mxu0 0.0
    %3508 = vmatpush1.msra.mxu0 0.0
    %3509 = vmatprep.subr.mxu0 0.0
    %3510 = vmatpush1.msra.mxu0 %v3409
    %3511 = vmatprep.subr.mxu0 0.0
    %3512 = vmatpush1.msra.mxu0 %v3406
    %3513 = vmatprep.subr.mxu0 0.0
    %3514 = vmatpush1.msra.mxu0 %v3403
    %3515 = vmatprep.subr.mxu0 0.0
    %3516 = vmatpush1.msra.mxu0 %v3400
    %3517 = vmatprep.subr.mxu0 0.0
    %3518 = vmatpush1.msra.mxu0 %v3397
    %3519 = vmatprep.subr.mxu0 0.0
    %3520 = vmatpush1.msra.mxu0 %v3394
    %3521 = vmatprep.subr.mxu0 0.0
    %3522 = vmatpush1.msra.mxu0 %v3391
    %3523 = vmatprep.subr.mxu0 0.0
    %3524 = vmatpush1.msra.mxu0 %v3388
    %3525 = vmatprep.subr.mxu0 0.0
    %3526 = vmatpush2.msra.mxu0 0.0
    %3527 = vmatprep.subr.mxu0 0.0
    %3528 = vmatpush2.msra.mxu0 0.0
    %3529 = vmatprep.subr.mxu0 0.0
    %3530 = vmatpush2.msra.mxu0 0.0
    %3531 = vmatprep.subr.mxu0 0.0
    %3532 = vmatpush2.msra.mxu0 0.0
    %3533 = vmatprep.subr.mxu0 0.0
    %3534 = vmatpush2.msra.mxu0 0.0
    %3535 = vmatprep.subr.mxu0 0.0
    %3536 = vmatpush2.msra.mxu0 0.0
    %3537 = vmatprep.subr.mxu0 0.0
    %3538 = vmatpush2.msra.mxu0 0.0
    %3539 = vmatprep.subr.mxu0 0.0
    %3540 = vmatpush2.msra.mxu0 0.0
    %3541 = vmatprep.subr.mxu0 0.0
    %3542 = vmatpush2.msra.mxu0 0.0
    %3543 = vmatprep.subr.mxu0 0.0
    %3544 = vmatpush2.msra.mxu0 0.0
    %3545 = vmatprep.subr.mxu0 0.0
    %3546 = vmatpush2.msra.mxu0 0.0
    %3547 = vmatprep.subr.mxu0 0.0
    %3548 = vmatpush2.msra.mxu0 0.0
    %3549 = vmatprep.subr.mxu0 0.0
    %3550 = vmatpush2.msra.mxu0 0.0
    %3551 = vmatprep.subr.mxu0 0.0
    %3552 = vmatpush2.msra.mxu0 0.0
    %3553 = vmatprep.subr.mxu0 0.0
    %3554 = vmatpush2.msra.mxu0 0.0
    %3555 = vmatprep.subr.mxu0 0.0
    %3556 = vmatpush2.msra.mxu0 0.0
    %3557 = vmatprep.mubr.f32.mxu0 0.0
    %3558 = vmatmul.mubr.f32.gmra.mxu0 %v3411
    %v3559 = vpop.f32.mrf.mxu0
    %v3560 = vadd.f32 0.0, %v3559
    %v3561 = vpop.f32.mrf.mxu0
    %3562 = vmatprep.mubr.f32.mxu0 0.0
    %3563 = vmatmul.mubr.f32.gmra.mxu0 %v3414
    %v3564 = vpop.f32.mrf.mxu0
    %v3565 = vadd.f32 0.0, %v3564
    %v3566 = vpop.f32.mrf.mxu0
    %3567 = vdwg.mxu0
    %v3568 = vxor.u32 %v3483, 2147483648
    %v3569 = vxor.u32 %v3485, 2147483648
    %v3570 = vxor.u32 %v3489, 2147483648
    %v3571 = vxor.u32 %v3491, 2147483648
    %v3572 = vmul.f32 %v3568, 1.442695
    %v3573 = vpow.pop %v3572
    %v3574 = vmul.f32 %v3569, 1.442695
    %v3575 = vpow.pop %v3574
    %v3576 = vmul.f32 %v3570, 1.442695
    %v3577 = vpow.pop %v3576
    %v3578 = vmul.f32 %v3571, 1.442695
    %v3579 = vpow.pop %v3578
    %v3580 = vadd.f32 %v3573, 1.0
    %v3581 = vadd.f32 %v3575, 1.0
    %v3582 = vadd.f32 %v3577, 1.0
    %v3583 = vadd.f32 %v3579, 1.0
    %v3584 = vrcp.pop %v3580
    %v3585 = vmul.f32 1.0, %v3584
    %v3586 = vrcp.pop %v3581
    %v3587 = vmul.f32 1.0, %v3586
    %v3588 = vrcp.pop %v3582
    %v3589 = vmul.f32 1.0, %v3588
    %v3590 = vrcp.pop %v3583
    %v3591 = vmul.f32 1.0, %v3590
    %v3592 = vmul.f32 %v3483, %v3585
    %v3593 = vmul.f32 %v3485, %v3587
    %v3594 = vmul.f32 %v3489, %v3589
    %v3595 = vmul.f32 %v3491, %v3591
    %3600 = vrot.lane.b32.xlu0 %v3485, 64
    %v3601 = vpop.permute.xlu0 %3600
    %3602 = vrot.lane.b32.xlu0 %v3560, 64
    %v3603 = vpop.permute.xlu0 %3602
    %3604 = vrot.lane.b32.xlu0 %v3491, 64
    %v3605 = vpop.permute.xlu0 %3604
    %3606 = vrot.lane.b32.xlu0 %v3565, 64
    %v3607 = vpop.permute.xlu0 %3606
    %v3608 = vsel %vm109, %v3601, %v3603
    %v3609 = vsel %vm109, %v3605, %v3607
    %v3614 = vmul.f32 %v3592, %v3608
    %v3615 = vmul.f32 %v3593, %v3603
    %v3616 = vmul.f32 %v3594, %v3609
    %v3617 = vmul.f32 %v3595, %v3607
    %v3618 = vld [vmem:[%s6] sm:$0xff]
    %v3619 = vld [vmem:[%s6 + $0x8] sm:$0xff]
    %v3620 = vld [vmem:[%s6 + $0x10] sm:$0xff]
    %v3621 = vld [vmem:[%s6 + $0x18] sm:$0xff]
    %v3622 = vld [vmem:[%s6 + $0x20] sm:$0xff]
    %v3623 = vld [vmem:[%s6 + $0x28] sm:$0xff]
    %v3624 = vld [vmem:[%s6 + $0x30] sm:$0xff]
    %v3625 = vld [vmem:[%s6 + $0x38] sm:$0xff]
    %v3626 = vld [vmem:[%s6 + $0x40] sm:$0xff]
    %v3627 = vld [vmem:[%s6 + $0x48] sm:$0xff]
    %v3628 = vld [vmem:[%s6 + $0x50] sm:$0xff]
    %v3629 = vld [vmem:[%s6 + $0x58] sm:$0xff]
    %v3630 = vld [vmem:[%s6 + $0x60] sm:$0xff]
    %v3631 = vld [vmem:[%s6 + $0x68] sm:$0xff]
    %v3632 = vld [vmem:[%s6 + $0x70] sm:$0xff]
    %v3633 = vld [vmem:[%s6 + $0x78] sm:$0xff]
    %v3634 = vld [vmem:[%s6 + $0x80] sm:$0xff]
    %v3635 = vld [vmem:[%s6 + $0x88] sm:$0xff]
    %v3636 = vld [vmem:[%s6 + $0x90] sm:$0xff]
    %v3637 = vld [vmem:[%s6 + $0x98] sm:$0xff]
    %v3638 = vld [vmem:[%s6 + $0xa0] sm:$0xff]
    %v3639 = vld [vmem:[%s6 + $0xa8] sm:$0xff]
    %v3640 = vld [vmem:[%s6 + $0xb0] sm:$0xff]
    %v3641 = vld [vmem:[%s6 + $0xb8] sm:$0xff]
    %v3643 = vsel %vm109, %v3615, 0
    %v3646 = vsel %vm109, %v3617, 0
    %3648 = vmatprep.subr.mxu0 0.0
    %3649 = vmatpush1.msra.mxu0 %v3633
    %3650 = vmatprep.subr.mxu0 0.0
    %3651 = vmatpush1.msra.mxu0 %v3632
    %3652 = vmatprep.subr.mxu0 0.0
    %3653 = vmatpush1.msra.mxu0 %v3631
    %3654 = vmatprep.subr.mxu0 0.0
    %3655 = vmatpush1.msra.mxu0 %v3630
    %3656 = vmatprep.subr.mxu0 0.0
    %3657 = vmatpush1.msra.mxu0 %v3629
    %3658 = vmatprep.subr.mxu0 0.0
    %3659 = vmatpush1.msra.mxu0 %v3628
    %3660 = vmatprep.subr.mxu0 0.0
    %3661 = vmatpush1.msra.mxu0 %v3627
    %3662 = vmatprep.subr.mxu0 0.0
    %3663 = vmatpush1.msra.mxu0 %v3626
    %3664 = vmatprep.subr.mxu0 0.0
    %3665 = vmatpush1.msra.mxu0 %v3625
    %3666 = vmatprep.subr.mxu0 0.0
    %3667 = vmatpush1.msra.mxu0 %v3624
    %3668 = vmatprep.subr.mxu0 0.0
    %3669 = vmatpush1.msra.mxu0 %v3623
    %3670 = vmatprep.subr.mxu0 0.0
    %3671 = vmatpush1.msra.mxu0 %v3622
    %3672 = vmatprep.subr.mxu0 0.0
    %3673 = vmatpush1.msra.mxu0 %v3621
    %3674 = vmatprep.subr.mxu0 0.0
    %3675 = vmatpush1.msra.mxu0 %v3620
    %3676 = vmatprep.subr.mxu0 0.0
    %3677 = vmatpush1.msra.mxu0 %v3619
    %3678 = vmatprep.subr.mxu0 0.0
    %3679 = vmatpush1.msra.mxu0 %v3618
    %3680 = vmatprep.subr.mxu0 0.0
    %3681 = vmatpush2.msra.mxu0 0.0
    %3682 = vmatprep.subr.mxu0 0.0
    %3683 = vmatpush2.msra.mxu0 0.0
    %3684 = vmatprep.subr.mxu0 0.0
    %3685 = vmatpush2.msra.mxu0 0.0
    %3686 = vmatprep.subr.mxu0 0.0
    %3687 = vmatpush2.msra.mxu0 0.0
    %3688 = vmatprep.subr.mxu0 0.0
    %3689 = vmatpush2.msra.mxu0 0.0
    %3690 = vmatprep.subr.mxu0 0.0
    %3691 = vmatpush2.msra.mxu0 0.0
    %3692 = vmatprep.subr.mxu0 0.0
    %3693 = vmatpush2.msra.mxu0 0.0
    %3694 = vmatprep.subr.mxu0 0.0
    %3695 = vmatpush2.msra.mxu0 0.0
    %3696 = vmatprep.subr.mxu0 0.0
    %3697 = vmatpush2.msra.mxu0 %v3641
    %3698 = vmatprep.subr.mxu0 0.0
    %3699 = vmatpush2.msra.mxu0 %v3640
    %3700 = vmatprep.subr.mxu0 0.0
    %3701 = vmatpush2.msra.mxu0 %v3639
    %3702 = vmatprep.subr.mxu0 0.0
    %3703 = vmatpush2.msra.mxu0 %v3638
    %3704 = vmatprep.subr.mxu0 0.0
    %3705 = vmatpush2.msra.mxu0 %v3637
    %3706 = vmatprep.subr.mxu0 0.0
    %3707 = vmatpush2.msra.mxu0 %v3636
    %3708 = vmatprep.subr.mxu0 0.0
    %3709 = vmatpush2.msra.mxu0 %v3635
    %3710 = vmatprep.subr.mxu0 0.0
    %3711 = vmatpush2.msra.mxu0 %v3634
    %3712 = vmatprep.mubr.f32.mxu0 %v3643
    %3713 = vmatmul.mubr.f32.gmra.mxu0 %v3614
    %v3714 = vpop.f32.mrf.mxu0
    %v3715 = vadd.f32 0.0, %v3714
    %v3716 = vpop.f32.mrf.mxu0
    %3717 = vmatprep.mubr.f32.mxu0 %v3646
    %3718 = vmatmul.mubr.f32.gmra.mxu0 %v3616
    %v3719 = vpop.f32.mrf.mxu0
    %v3720 = vadd.f32 0.0, %v3719
    %v3721 = vpop.f32.mrf.mxu0
    %3722 = vdwg.mxu0
    %v3723 = vadd.f32 %v3359, %v3715
    %v3724 = vadd.f32 %v3360, %v3720
    %3725 = vst.msk [vmem:[#allocation11] sm:$0xff] %vm109, %v3723
    %3726 = vst.msk [vmem:[#allocation11 + $0x8] sm:$0xff] %vm109, %v3724
    // Predicated region
    $region62: #{tpu_custom_call.1} parent=1 // pred_check
      _
    $region63: #{tpu_custom_call.1} parent=1 // pred_check_branch
      %3728 = sbr.rel (0) target = $region65
    $region64: #{tpu_custom_call.1} parent=1 // pred_region
      %s3730 = ssub.s32 256, 256
      %3731 = vsyncadd [#allocation4], %s3730
      %s3732 = sshll.u32 [#allocation11], 4
      %s3733 = int_to_ptr.vmem [resolvable:$true] %s3732
      %3738 = dma.vmem_to_hbm [thread:$0]  %s3733, 256, %s10, [#allocation4], 128, 128, 8
    $region65: #{tpu_custom_call.1} parent=1 // pred_fallthru
      _
    // Predicated region
    $region66: #{tpu_custom_call.1} parent=1 // pred_check
      _
    $region67: #{tpu_custom_call.1} parent=1 // pred_check_branch
      %3740 = sbr.rel (0) target = $region69
    $region68: #{tpu_custom_call.1} parent=1 // pred_region
      %3741 = dma.done [#allocation4], 256
    $region69: #{tpu_custom_call.1} parent=1 // pred_fallthru
      _
    %3742 = vsyncpa [#allocation3], 1
    %3743 = vsyncpa [#allocation6], 1
    %3744 = vsyncpa [#allocation9], 1
    %3745 = vsyncpa [#allocation4], 1

</llo_original>
